<compile_context>
chip_gen: v7x
topology: tpu7x:2x2x1
jax: 0.10.0
libtpu: 0.0.40
codegen_flags: <defaults>
</compile_context>

<pallas_src>
import jax
import jax.numpy as jnp
from jax.experimental import pallas as pl
from jax.experimental.pallas import tpu as pltpu

NUM_CLASSES = 10  # `num_classes` is a free symbol in the PyTorch snippet; fixed here.
IN_FEATURES = 8192
HIDDEN1 = 64
HIDDEN2 = 8

_NEG_BIG = -1e30  # bias for padded class lanes; exp underflows to exactly 0.


def _round_up(n, m):
    return ((n + m - 1) // m) * m


def _batch_tile_target():
    """Per-generation batch-tile cap: 256 rows on v7x (64 MiB VMEM/TC), 512 elsewhere."""
    try:
        kind = jax.devices()[0].device_kind.lower()
    except Exception:
        return 256
    if "7" in kind:      # v7x: 64 MiB VMEM per TensorCore
        return 256
    return 512           # v5e/v6e/v5p: 128 MiB VMEM


def mlp_kernel(x_ref, w1_ref, b1_ref, w2_ref, b2_ref, w3_ref, b3_ref, o_ref):
    # dense1: (bm, 8192) @ (8192, 64) on the MXU, f32 accumulation.
    h1 = jnp.dot(x_ref[...], w1_ref[...], preferred_element_type=jnp.float32)
    h1 = jnp.maximum(h1 + b1_ref[...], 0.0)

    # dense2 + ReLU (tiny)
    h2 = jnp.dot(h1, w2_ref[...], preferred_element_type=jnp.float32)
    h2 = jnp.maximum(h2 + b2_ref[...], 0.0)

    # dense3 into the 128-lane-padded class dim (padded lanes get bias -1e30).
    logits = jnp.dot(h2, w3_ref[...], preferred_element_type=jnp.float32) + b3_ref[...]

    # softmax over dim=1 (classes); padded lanes contribute exp(~-1e30) == 0.
    m = jnp.max(logits, axis=1, keepdims=True)
    e = jnp.exp(logits - m)
    denom = jnp.sum(e, axis=1, keepdims=True)
    o_ref[...] = (e / denom).astype(o_ref.dtype)  # exact divide: rows sum to 1


def torch_model_forward(x, params, *, block_b=None):
    """x: (B, 8192) [f32, or bf16 matching a bf16 w1] -> (B, num_classes) f32 softmax."""
    w1, b1, w2, b2, w3, b3 = params
    B, K = x.shape
    assert K == IN_FEATURES
    assert x.dtype == w1.dtype, "x and w1 must share a dtype (use cast_params_bf16 for bf16)"
    num_classes = w3.shape[1]

    # Lane-dense output: pad the class dim to a multiple of 128 (zero weights,
    # -1e30 bias -> softmax over the real classes is unchanged).  <5 KiB of work.
    c_pad = max(128, _round_up(num_classes, 128))
    if num_classes != c_pad:
        w3p = jnp.pad(w3, ((0, 0), (0, c_pad - num_classes)))
        b3p = jnp.pad(b3, ((0, 0), (0, c_pad - num_classes)), constant_values=_NEG_BIG)
    else:
        w3p, b3p = w3, b3

    sub = 16 if x.dtype == jnp.bfloat16 else 8  # sublane tile (bf16 packs 16 rows/vreg)
    if block_b is None:
        target = _batch_tile_target()
        if B <= sub:
            # Tiny batch: one block equal to the full array extent (always legal).
            block_b = B
        else:
            # Split into >=2 grid steps when possible so the 'parallel' batch axis
            # can shard across both v7x TensorCores; cap at the per-gen VMEM target.
            block_b = min(target, _round_up((B + 1) // 2, sub))
    grid_b = pl.cdiv(B, block_b)  # ragged last tile handled by Pallas boundary masking

    # VMEM budget: double-buffered x tile + resident (double-buffered) w1 + output
    # tile + headroom for the small operands / compiler scratch.
    vmem_need = (2 * block_b * IN_FEATURES * x.dtype.itemsize
                 + 2 * IN_FEATURES * HIDDEN1 * w1.dtype.itemsize
                 + 2 * block_b * c_pad * 4
                 + (8 << 20))
    vmem_limit = int(min(max(vmem_need, 24 << 20), 96 << 20))

    # Advisory cost: memory-bound; dominant bytes are x + w1.
    param_bytes = sum(int(p.size) * p.dtype.itemsize for p in (w1, b1, w2, b2, w3p, b3p))
    cost = pl.CostEstimate(
        flops=2 * B * (IN_FEATURES * HIDDEN1 + HIDDEN1 * HIDDEN2 + HIDDEN2 * c_pad),
        transcendentals=B * c_pad,
        bytes_accessed=int(x.size) * x.dtype.itemsize + param_bytes + B * c_pad * 4,
    )

    grid_spec = pltpu.PrefetchScalarGridSpec(
        num_scalar_prefetch=0,
        grid=(grid_b,),
        in_specs=[
            pl.BlockSpec((block_b, IN_FEATURES), lambda i: (i, 0)),   # x batch tile
            pl.BlockSpec((IN_FEATURES, HIDDEN1), lambda i: (0, 0)),   # w1 (resident)
            pl.BlockSpec((1, HIDDEN1), lambda i: (0, 0)),             # b1
            pl.BlockSpec((HIDDEN1, HIDDEN2), lambda i: (0, 0)),       # w2
            pl.BlockSpec((1, HIDDEN2), lambda i: (0, 0)),             # b2
            pl.BlockSpec((HIDDEN2, c_pad), lambda i: (0, 0)),         # w3 (lane-padded)
            pl.BlockSpec((1, c_pad), lambda i: (0, 0)),               # b3 (lane-padded)
        ],
        out_specs=pl.BlockSpec((block_b, c_pad), lambda i: (i, 0)),
    )

    out = pl.pallas_call(
        mlp_kernel,
        out_shape=jax.ShapeDtypeStruct((B, c_pad), jnp.float32),
        grid_spec=grid_spec,
        compiler_params=pltpu.CompilerParams(
            dimension_semantics=("parallel",),
            vmem_limit_bytes=vmem_limit,
        ),
        cost_estimate=cost,
    )(x, w1, b1, w2, b2, w3p, b3p)

    return out[:, :num_classes]


def init_params(key, num_classes=NUM_CLASSES):
    """Deterministic init; weights are (in, out) = PyTorch weight transposed."""
    ks = jax.random.split(key, 6)

    def uniform(k, shape, fan_in):
        bound = 1.0 / jnp.sqrt(fan_in)
        return jax.random.uniform(k, shape, jnp.float32, -bound, bound)

    w1 = uniform(ks[0], (IN_FEATURES, HIDDEN1), IN_FEATURES)
    b1 = uniform(ks[1], (1, HIDDEN1), IN_FEATURES)
    w2 = uniform(ks[2], (HIDDEN1, HIDDEN2), HIDDEN1)
    b2 = uniform(ks[3], (1, HIDDEN2), HIDDEN1)
    w3 = uniform(ks[4], (HIDDEN2, num_classes), HIDDEN2)
    b3 = uniform(ks[5], (1, num_classes), HIDDEN2)
    return (w1, b1, w2, b2, w3, b3)


def cast_params_bf16(params):
    """Pre-cast the dominant weight (w1) to bf16 ONCE, outside the per-call hot path."""
    w1, b1, w2, b2, w3, b3 = params
    return (w1.astype(jnp.bfloat16), b1, w2, b2, w3, b3)


def reference_forward(x, params):
    w1, b1, w2, b2, w3, b3 = params
    h1 = jnp.maximum(x.astype(jnp.float32) @ w1.astype(jnp.float32) + b1, 0.0)
    h2 = jnp.maximum(h1 @ w2 + b2, 0.0)
    logits = h2 @ w3 + b3
    return jax.nn.softmax(logits, axis=1)


if __name__ == "__main__":
    key = jax.random.PRNGKey(0)
    k_x, k_p = jax.random.split(key)
    params = init_params(k_p)

    # 1) f32, batch equal to one aligned tile (grid = 1).
    x8 = jax.random.normal(k_x, (8, IN_FEATURES), jnp.float32)
    out8 = jax.block_until_ready(torch_model_forward(x8, params))
    ref8 = reference_forward(x8, params)
    assert out8.shape == (8, NUM_CLASSES)
    assert jnp.allclose(out8, ref8, atol=2e-3, rtol=2e-3)
    assert jnp.allclose(jnp.sum(out8, axis=1), 1.0, atol=1e-3)

    # 2) f32, ragged batch (grid = 2, masked last tile): exercises the cdiv grid
    #    path that replaces the old gcd tiling / wrapper-side jnp.pad.
    x20 = jax.random.normal(k_x, (20, IN_FEATURES), jnp.float32)
    out20 = jax.block_until_ready(torch_model_forward(x20, params))
    ref20 = reference_forward(x20, params)
    assert out20.shape == (20, NUM_CLASSES)
    assert jnp.allclose(out20, ref20, atol=2e-3, rtol=2e-3)

    # 3) bf16 activations + w1 pre-cast once (amortized): halves dominant HBM traffic.
    #    (A real producer would emit bf16 activations directly; the cast here is
    #    only to build the demo input.)
    params_bf16 = cast_params_bf16(params)
    x16 = jax.random.normal(k_x, (16, IN_FEATURES), jnp.float32)
    out16 = jax.block_until_ready(
        torch_model_forward(x16.astype(jnp.bfloat16), params_bf16))
    ref16 = reference_forward(x16, params)
    assert out16.shape == (16, NUM_CLASSES)
    assert jnp.allclose(out16, ref16, atol=2e-2, rtol=2e-2)

    print("KERNEL_OK")
</pallas_src>

<mosaic_0001>
module attributes {stable_mosaic.version = 11 : i64} {
  func.func @mlp_kernel(%arg0: i32, %arg1: memref<8x8192xf32, #tpu.memory_space<vmem>>, %arg2: memref<8192x64xf32, #tpu.memory_space<vmem>>, %arg3: memref<1x64xf32, #tpu.memory_space<vmem>>, %arg4: memref<64x8xf32, #tpu.memory_space<vmem>>, %arg5: memref<1x8xf32, #tpu.memory_space<vmem>>, %arg6: memref<8x128xf32, #tpu.memory_space<vmem>>, %arg7: memref<1x128xf32, #tpu.memory_space<vmem>>, %arg8: memref<8x128xf32, #tpu.memory_space<vmem>>) attributes {dimension_semantics = [#tpu.dimension_semantics<parallel>], iteration_bounds = array<i64: 1>, scalar_prefetch = 0 : i64, scratch_operands = 0 : i64, tpu.core_type = #tpu.core_type<tc>, window_params = [{transform_indices = @transform_0, window_bounds = array<i64: 8, 8192>}, {pipeline_mode = #tpu.pipeline_mode<synchronous>, transform_indices = @transform_1, window_bounds = array<i64: 8192, 64>}, {pipeline_mode = #tpu.pipeline_mode<synchronous>, transform_indices = @transform_2, window_bounds = array<i64: 1, 64>}, {pipeline_mode = #tpu.pipeline_mode<synchronous>, transform_indices = @transform_3, window_bounds = array<i64: 64, 8>}, {pipeline_mode = #tpu.pipeline_mode<synchronous>, transform_indices = @transform_4, window_bounds = array<i64: 1, 8>}, {pipeline_mode = #tpu.pipeline_mode<synchronous>, transform_indices = @transform_5, window_bounds = array<i64: 8, 128>}, {pipeline_mode = #tpu.pipeline_mode<synchronous>, transform_indices = @transform_6, window_bounds = array<i64: 1, 128>}, {transform_indices = @transform_7, window_bounds = array<i64: 8, 128>}]} {
    %c0 = arith.constant 0 : index
    %c0_0 = arith.constant 0 : index
    %0 = vector.load %arg1[%c0, %c0_0] : memref<8x8192xf32, #tpu.memory_space<vmem>>, vector<8x8192xf32>
    %c0_1 = arith.constant 0 : index
    %c0_2 = arith.constant 0 : index
    %1 = vector.load %arg2[%c0_1, %c0_2] : memref<8192x64xf32, #tpu.memory_space<vmem>>, vector<8192x64xf32>
    %cst = arith.constant dense<0.000000e+00> : vector<8x64xf32>
    %2 = tpu.matmul %0, %1, %cst {dimension_numbers = #tpu.dot_dimension_numbers<[1], [0], [0], [1], [0, 0, 1, 1], [], []>} : vector<8x8192xf32>, vector<8192x64xf32>, vector<8x64xf32> -> vector<8x64xf32>
    %c0_3 = arith.constant 0 : index
    %c0_4 = arith.constant 0 : index
    %3 = vector.load %arg3[%c0_3, %c0_4] : memref<1x64xf32, #tpu.memory_space<vmem>>, vector<1x64xf32>
    %4 = vector.broadcast %3 : vector<1x64xf32> to vector<8x64xf32>
    %5 = arith.addf %2, %4 : vector<8x64xf32>
    %cst_5 = arith.constant 0.000000e+00 : f32
    %6 = vector.broadcast %cst_5 : f32 to vector<8x64xf32>
    %7 = arith.maximumf %5, %6 : vector<8x64xf32>
    %c0_6 = arith.constant 0 : index
    %c0_7 = arith.constant 0 : index
    %8 = vector.load %arg4[%c0_6, %c0_7] : memref<64x8xf32, #tpu.memory_space<vmem>>, vector<64x8xf32>
    %cst_8 = arith.constant dense<0.000000e+00> : vector<8x8xf32>
    %9 = tpu.matmul %7, %8, %cst_8 {dimension_numbers = #tpu.dot_dimension_numbers<[1], [0], [0], [1], [0, 0, 1, 1], [], []>} : vector<8x64xf32>, vector<64x8xf32>, vector<8x8xf32> -> vector<8x8xf32>
    %c0_9 = arith.constant 0 : index
    %c0_10 = arith.constant 0 : index
    %10 = vector.load %arg5[%c0_9, %c0_10] : memref<1x8xf32, #tpu.memory_space<vmem>>, vector<1x8xf32>
    %11 = vector.broadcast %10 : vector<1x8xf32> to vector<8x8xf32>
    %12 = arith.addf %9, %11 : vector<8x8xf32>
    %cst_11 = arith.constant 0.000000e+00 : f32
    %13 = vector.broadcast %cst_11 : f32 to vector<8x8xf32>
    %14 = arith.maximumf %12, %13 : vector<8x8xf32>
    %c0_12 = arith.constant 0 : index
    %c0_13 = arith.constant 0 : index
    %15 = vector.load %arg6[%c0_12, %c0_13] : memref<8x128xf32, #tpu.memory_space<vmem>>, vector<8x128xf32>
    %cst_14 = arith.constant dense<0.000000e+00> : vector<8x128xf32>
    %16 = tpu.matmul %14, %15, %cst_14 {dimension_numbers = #tpu.dot_dimension_numbers<[1], [0], [0], [1], [0, 0, 1, 1], [], []>} : vector<8x8xf32>, vector<8x128xf32>, vector<8x128xf32> -> vector<8x128xf32>
    %c0_15 = arith.constant 0 : index
    %c0_16 = arith.constant 0 : index
    %17 = vector.load %arg7[%c0_15, %c0_16] : memref<1x128xf32, #tpu.memory_space<vmem>>, vector<1x128xf32>
    %18 = vector.broadcast %17 : vector<1x128xf32> to vector<8x128xf32>
    %19 = arith.addf %16, %18 : vector<8x128xf32>
    %cst_17 = arith.constant dense<0xFF800000> : vector<8xf32>
    %20 = vector.multi_reduction <maximumf>, %19, %cst_17 [1] : vector<8x128xf32> to vector<8xf32>
    %21 = vector.shape_cast %20 : vector<8xf32> to vector<8x1xf32>
    %22 = vector.broadcast %21 : vector<8x1xf32> to vector<8x128xf32>
    %23 = arith.subf %19, %22 : vector<8x128xf32>
    %24 = math.exp %23 : vector<8x128xf32>
    %cst_18 = arith.constant dense<0.000000e+00> : vector<8xf32>
    %25 = vector.multi_reduction <add>, %24, %cst_18 [1] : vector<8x128xf32> to vector<8xf32>
    %26 = vector.shape_cast %25 : vector<8xf32> to vector<8x1xf32>
    %27 = vector.broadcast %26 : vector<8x1xf32> to vector<8x128xf32>
    %28 = arith.divf %24, %27 : vector<8x128xf32>
    %c0_19 = arith.constant 0 : index
    %c0_20 = arith.constant 0 : index
    %29 = vector.load %arg8[%c0_19, %c0_20] : memref<8x128xf32, #tpu.memory_space<vmem>>, vector<8x128xf32>
    tpu.vector_store %arg8[%c0_19, %c0_20], %28 {strides = array<i32>} : memref<8x128xf32, #tpu.memory_space<vmem>>, vector<8x128xf32>,
    return
  }
  func.func @transform_0(%arg0: i32) -> (i32, i32) {
    %c0_i32 = arith.constant 0 : i32
    %c0_i32_0 = arith.constant 0 : i32
    return %arg0, %c0_i32 : i32, i32
  }
  func.func @transform_1(%arg0: i32) -> (i32, i32) {
    %c0_i32 = arith.constant 0 : i32
    %c0_i32_0 = arith.constant 0 : i32
    %c0_i32_1 = arith.constant 0 : i32
    return %c0_i32, %c0_i32_0 : i32, i32
  }
  func.func @transform_2(%arg0: i32) -> (i32, i32) {
    %c0_i32 = arith.constant 0 : i32
    %c0_i32_0 = arith.constant 0 : i32
    %c0_i32_1 = arith.constant 0 : i32
    return %c0_i32, %c0_i32_0 : i32, i32
  }
  func.func @transform_3(%arg0: i32) -> (i32, i32) {
    %c0_i32 = arith.constant 0 : i32
    %c0_i32_0 = arith.constant 0 : i32
    %c0_i32_1 = arith.constant 0 : i32
    return %c0_i32, %c0_i32_0 : i32, i32
  }
  func.func @transform_4(%arg0: i32) -> (i32, i32) {
    %c0_i32 = arith.constant 0 : i32
    %c0_i32_0 = arith.constant 0 : i32
    %c0_i32_1 = arith.constant 0 : i32
    return %c0_i32, %c0_i32_0 : i32, i32
  }
  func.func @transform_5(%arg0: i32) -> (i32, i32) {
    %c0_i32 = arith.constant 0 : i32
    %c0_i32_0 = arith.constant 0 : i32
    %c0_i32_1 = arith.constant 0 : i32
    return %c0_i32, %c0_i32_0 : i32, i32
  }
  func.func @transform_6(%arg0: i32) -> (i32, i32) {
    %c0_i32 = arith.constant 0 : i32
    %c0_i32_0 = arith.constant 0 : i32
    %c0_i32_1 = arith.constant 0 : i32
    return %c0_i32, %c0_i32_0 : i32, i32
  }
  func.func @transform_7(%arg0: i32) -> (i32, i32) {
    %c0_i32 = arith.constant 0 : i32
    %c0_i32_0 = arith.constant 0 : i32
    return %arg0, %c0_i32 : i32, i32
  }
}

</mosaic_0001>

<llo_original>
// kernel: tpu_custom_call.1
$region0: #{tpu_custom_call.1}
  #allocation0 [shape = 'u32[]', space=smem, size = 0x4, offset = 0x4, fixed_abs, tag = 'smem constant byte address 0x4 - core index']
  #allocation1 [shape = 'u32[144,128]{1,0:T(1,128)}', space=vmem, size = 0x12000, scoped, tag = 'internal scratch']
  %s0 = inlined_call_operand.vmem [shape: f32[8,8192], index: 0, kind: input, shape index: {}]
  %s1 = inlined_call_operand.vmem [shape: f32[8192,64], index: 1, kind: input, shape index: {}]
  %s2 = inlined_call_operand.vmem [shape: f32[1,64], index: 2, kind: input, shape index: {}]
  %s3 = inlined_call_operand.vmem [shape: f32[64,8], index: 3, kind: input, shape index: {}]
  %s4 = inlined_call_operand.vmem [shape: f32[1,8], index: 4, kind: input, shape index: {}]
  %s5 = inlined_call_operand.vmem [shape: f32[8,128], index: 5, kind: input, shape index: {}]
  %s6 = inlined_call_operand.vmem [shape: f32[1,128], index: 6, kind: input, shape index: {}]
  %s7 = inlined_call_operand.hbm [shape: f32[8,128], index: 7, kind: output, shape index: {}]
  %s8 = sld [smem:[#allocation0]]
  $region38: #{tpu_custom_call.1} parent=0
    _
  %s10 = ssub.s32 1, %s8
  %s11 = scalar_select 0, %s10, %s8
  $region1: #{tpu_custom_call.1} parent=0
    #allocation2 [shape = 'u8[4096]{0}', space=vmem, size = 0x1000, scoped, tag = 'output window, operand 0, single buffered']
    #allocation3 [shape = 's32[1]{0}', space=sflag, size = 0x4, scoped, tag = 'scoped memory for tpu_custom_call.1']
    %12 = vsyncpa [#allocation3], 0
    // Predicated region
    $region2: #{tpu_custom_call.1} parent=1 // pred_check
      _
    $region3: #{tpu_custom_call.1} parent=1 // pred_check_branch
      %14 = sbr.rel (0) target = $region5
    $region4: #{tpu_custom_call.1} parent=1 // pred_region
      _
    $region5: #{tpu_custom_call.1} parent=1 // pred_fallthru
      _
    // Predicated region
    $region6: #{tpu_custom_call.1} parent=1 // pred_check
      _
    $region7: #{tpu_custom_call.1} parent=1 // pred_check_branch
      %16 = sbr.rel (0) target = $region9
    $region8: #{tpu_custom_call.1} parent=1 // pred_region
      _
    $region9: #{tpu_custom_call.1} parent=1 // pred_fallthru
      _
    // Predicated region
    $region10: #{tpu_custom_call.1} parent=1 // pred_check
      _
    $region11: #{tpu_custom_call.1} parent=1 // pred_check_branch
      %18 = sbr.rel (0) target = $region13
    $region12: #{tpu_custom_call.1} parent=1 // pred_region
      _
    $region13: #{tpu_custom_call.1} parent=1 // pred_fallthru
      _
    // Predicated region
    $region14: #{tpu_custom_call.1} parent=1 // pred_check
      _
    $region15: #{tpu_custom_call.1} parent=1 // pred_check_branch
      %20 = sbr.rel (0) target = $region17
    $region16: #{tpu_custom_call.1} parent=1 // pred_region
      _
    $region17: #{tpu_custom_call.1} parent=1 // pred_fallthru
      _
    // Predicated region
    $region18: #{tpu_custom_call.1} parent=1 // pred_check
      _
    $region19: #{tpu_custom_call.1} parent=1 // pred_check_branch
      %22 = sbr.rel (0) target = $region21
    $region20: #{tpu_custom_call.1} parent=1 // pred_region
      _
    $region21: #{tpu_custom_call.1} parent=1 // pred_fallthru
      _
    // Predicated region
    $region22: #{tpu_custom_call.1} parent=1 // pred_check
      _
    $region23: #{tpu_custom_call.1} parent=1 // pred_check_branch
      %24 = sbr.rel (0) target = $region25
    $region24: #{tpu_custom_call.1} parent=1 // pred_region
      _
    $region25: #{tpu_custom_call.1} parent=1 // pred_fallthru
      _
    // Predicated region
    $region26: #{tpu_custom_call.1} parent=1 // pred_check
      _
    $region27: #{tpu_custom_call.1} parent=1 // pred_check_branch
      %26 = sbr.rel (0) target = $region29
    $region28: #{tpu_custom_call.1} parent=1 // pred_region
      _
    $region29: #{tpu_custom_call.1} parent=1 // pred_fallthru
      _
    %v27 = vld [vmem:[%s0] sm:$0xff]
    %v28 = vld [vmem:[%s0 + $0x8] sm:$0xff]
    %v29 = vld [vmem:[%s0 + $0x10] sm:$0xff]
    %v30 = vld [vmem:[%s0 + $0x18] sm:$0xff]
    %v31 = vld [vmem:[%s0 + $0x20] sm:$0xff]
    %v32 = vld [vmem:[%s0 + $0x28] sm:$0xff]
    %v33 = vld [vmem:[%s0 + $0x30] sm:$0xff]
    %v34 = vld [vmem:[%s0 + $0x38] sm:$0xff]
    %v35 = vld [vmem:[%s0 + $0x40] sm:$0xff]
    %v36 = vld [vmem:[%s0 + $0x48] sm:$0xff]
    %v37 = vld [vmem:[%s0 + $0x50] sm:$0xff]
    %v38 = vld [vmem:[%s0 + $0x58] sm:$0xff]
    %v39 = vld [vmem:[%s0 + $0x60] sm:$0xff]
    %v40 = vld [vmem:[%s0 + $0x68] sm:$0xff]
    %v41 = vld [vmem:[%s0 + $0x70] sm:$0xff]
    %v42 = vld [vmem:[%s0 + $0x78] sm:$0xff]
    %v43 = vld [vmem:[%s0 + $0x80] sm:$0xff]
    %v44 = vld [vmem:[%s0 + $0x88] sm:$0xff]
    %v45 = vld [vmem:[%s0 + $0x90] sm:$0xff]
    %v46 = vld [vmem:[%s0 + $0x98] sm:$0xff]
    %v47 = vld [vmem:[%s0 + $0xa0] sm:$0xff]
    %v48 = vld [vmem:[%s0 + $0xa8] sm:$0xff]
    %v49 = vld [vmem:[%s0 + $0xb0] sm:$0xff]
    %v50 = vld [vmem:[%s0 + $0xb8] sm:$0xff]
    %v51 = vld [vmem:[%s0 + $0xc0] sm:$0xff]
    %v52 = vld [vmem:[%s0 + $0xc8] sm:$0xff]
    %v53 = vld [vmem:[%s0 + $0xd0] sm:$0xff]
    %v54 = vld [vmem:[%s0 + $0xd8] sm:$0xff]
    %v55 = vld [vmem:[%s0 + $0xe0] sm:$0xff]
    %v56 = vld [vmem:[%s0 + $0xe8] sm:$0xff]
    %v57 = vld [vmem:[%s0 + $0xf0] sm:$0xff]
    %v58 = vld [vmem:[%s0 + $0xf8] sm:$0xff]
    %v59 = vld [vmem:[%s0 + $0x100] sm:$0xff]
    %v60 = vld [vmem:[%s0 + $0x108] sm:$0xff]
    %v61 = vld [vmem:[%s0 + $0x110] sm:$0xff]
    %v62 = vld [vmem:[%s0 + $0x118] sm:$0xff]
    %v63 = vld [vmem:[%s0 + $0x120] sm:$0xff]
    %v64 = vld [vmem:[%s0 + $0x128] sm:$0xff]
    %v65 = vld [vmem:[%s0 + $0x130] sm:$0xff]
    %v66 = vld [vmem:[%s0 + $0x138] sm:$0xff]
    %v67 = vld [vmem:[%s0 + $0x140] sm:$0xff]
    %v68 = vld [vmem:[%s0 + $0x148] sm:$0xff]
    %v69 = vld [vmem:[%s0 + $0x150] sm:$0xff]
    %v70 = vld [vmem:[%s0 + $0x158] sm:$0xff]
    %v71 = vld [vmem:[%s0 + $0x160] sm:$0xff]
    %v72 = vld [vmem:[%s0 + $0x168] sm:$0xff]
    %v73 = vld [vmem:[%s0 + $0x170] sm:$0xff]
    %v74 = vld [vmem:[%s0 + $0x178] sm:$0xff]
    %v75 = vld [vmem:[%s0 + $0x180] sm:$0xff]
    %v76 = vld [vmem:[%s0 + $0x188] sm:$0xff]
    %v77 = vld [vmem:[%s0 + $0x190] sm:$0xff]
    %v78 = vld [vmem:[%s0 + $0x198] sm:$0xff]
    %v79 = vld [vmem:[%s0 + $0x1a0] sm:$0xff]
    %v80 = vld [vmem:[%s0 + $0x1a8] sm:$0xff]
    %v81 = vld [vmem:[%s0 + $0x1b0] sm:$0xff]
    %v82 = vld [vmem:[%s0 + $0x1b8] sm:$0xff]
    %v83 = vld [vmem:[%s0 + $0x1c0] sm:$0xff]
    %v84 = vld [vmem:[%s0 + $0x1c8] sm:$0xff]
    %v85 = vld [vmem:[%s0 + $0x1d0] sm:$0xff]
    %v86 = vld [vmem:[%s0 + $0x1d8] sm:$0xff]
    %v87 = vld [vmem:[%s0 + $0x1e0] sm:$0xff]
    %v88 = vld [vmem:[%s0 + $0x1e8] sm:$0xff]
    %v89 = vld [vmem:[%s0 + $0x1f0] sm:$0xff]
    %v90 = vld [vmem:[%s0 + $0x1f8] sm:$0xff]
    %v91 = vld [vmem:[%s1] sm:$0xff]
    %v92 = vld [vmem:[%s1 + $0x8] sm:$0xff]
    %v93 = vld [vmem:[%s1 + $0x10] sm:$0xff]
    %v94 = vld [vmem:[%s1 + $0x18] sm:$0xff]
    %v95 = vld [vmem:[%s1 + $0x20] sm:$0xff]
    %v96 = vld [vmem:[%s1 + $0x28] sm:$0xff]
    %v97 = vld [vmem:[%s1 + $0x30] sm:$0xff]
    %v98 = vld [vmem:[%s1 + $0x38] sm:$0xff]
    %v99 = vld [vmem:[%s1 + $0x40] sm:$0xff]
    %v100 = vld [vmem:[%s1 + $0x48] sm:$0xff]
    %v101 = vld [vmem:[%s1 + $0x50] sm:$0xff]
    %v102 = vld [vmem:[%s1 + $0x58] sm:$0xff]
    %v103 = vld [vmem:[%s1 + $0x60] sm:$0xff]
    %v104 = vld [vmem:[%s1 + $0x68] sm:$0xff]
    %v105 = vld [vmem:[%s1 + $0x70] sm:$0xff]
    %v106 = vld [vmem:[%s1 + $0x78] sm:$0xff]
    %v107 = vld [vmem:[%s1 + $0x80] sm:$0xff]
    %v108 = vld [vmem:[%s1 + $0x88] sm:$0xff]
    %v109 = vld [vmem:[%s1 + $0x90] sm:$0xff]
    %v110 = vld [vmem:[%s1 + $0x98] sm:$0xff]
    %v111 = vld [vmem:[%s1 + $0xa0] sm:$0xff]
    %v112 = vld [vmem:[%s1 + $0xa8] sm:$0xff]
    %v113 = vld [vmem:[%s1 + $0xb0] sm:$0xff]
    %v114 = vld [vmem:[%s1 + $0xb8] sm:$0xff]
    %v115 = vld [vmem:[%s1 + $0xc0] sm:$0xff]
    %v116 = vld [vmem:[%s1 + $0xc8] sm:$0xff]
    %v117 = vld [vmem:[%s1 + $0xd0] sm:$0xff]
    %v118 = vld [vmem:[%s1 + $0xd8] sm:$0xff]
    %v119 = vld [vmem:[%s1 + $0xe0] sm:$0xff]
    %v120 = vld [vmem:[%s1 + $0xe8] sm:$0xff]
    %v121 = vld [vmem:[%s1 + $0xf0] sm:$0xff]
    %v122 = vld [vmem:[%s1 + $0xf8] sm:$0xff]
    %v123 = vld [vmem:[%s1 + $0x100] sm:$0xff]
    %v124 = vld [vmem:[%s1 + $0x108] sm:$0xff]
    %v125 = vld [vmem:[%s1 + $0x110] sm:$0xff]
    %v126 = vld [vmem:[%s1 + $0x118] sm:$0xff]
    %v127 = vld [vmem:[%s1 + $0x120] sm:$0xff]
    %v128 = vld [vmem:[%s1 + $0x128] sm:$0xff]
    %v129 = vld [vmem:[%s1 + $0x130] sm:$0xff]
    %v130 = vld [vmem:[%s1 + $0x138] sm:$0xff]
    %v131 = vld [vmem:[%s1 + $0x140] sm:$0xff]
    %v132 = vld [vmem:[%s1 + $0x148] sm:$0xff]
    %v133 = vld [vmem:[%s1 + $0x150] sm:$0xff]
    %v134 = vld [vmem:[%s1 + $0x158] sm:$0xff]
    %v135 = vld [vmem:[%s1 + $0x160] sm:$0xff]
    %v136 = vld [vmem:[%s1 + $0x168] sm:$0xff]
    %v137 = vld [vmem:[%s1 + $0x170] sm:$0xff]
    %v138 = vld [vmem:[%s1 + $0x178] sm:$0xff]
    %v139 = vld [vmem:[%s1 + $0x180] sm:$0xff]
    %v140 = vld [vmem:[%s1 + $0x188] sm:$0xff]
    %v141 = vld [vmem:[%s1 + $0x190] sm:$0xff]
    %v142 = vld [vmem:[%s1 + $0x198] sm:$0xff]
    %v143 = vld [vmem:[%s1 + $0x1a0] sm:$0xff]
    %v144 = vld [vmem:[%s1 + $0x1a8] sm:$0xff]
    %v145 = vld [vmem:[%s1 + $0x1b0] sm:$0xff]
    %v146 = vld [vmem:[%s1 + $0x1b8] sm:$0xff]
    %v147 = vld [vmem:[%s1 + $0x1c0] sm:$0xff]
    %v148 = vld [vmem:[%s1 + $0x1c8] sm:$0xff]
    %v149 = vld [vmem:[%s1 + $0x1d0] sm:$0xff]
    %v150 = vld [vmem:[%s1 + $0x1d8] sm:$0xff]
    %v151 = vld [vmem:[%s1 + $0x1e0] sm:$0xff]
    %v152 = vld [vmem:[%s1 + $0x1e8] sm:$0xff]
    %v153 = vld [vmem:[%s1 + $0x1f0] sm:$0xff]
    %v154 = vld [vmem:[%s1 + $0x1f8] sm:$0xff]
    %v155 = vld [vmem:[%s1 + $0x200] sm:$0xff]
    %v156 = vld [vmem:[%s1 + $0x208] sm:$0xff]
    %v157 = vld [vmem:[%s1 + $0x210] sm:$0xff]
    %v158 = vld [vmem:[%s1 + $0x218] sm:$0xff]
    %v159 = vld [vmem:[%s1 + $0x220] sm:$0xff]
    %v160 = vld [vmem:[%s1 + $0x228] sm:$0xff]
    %v161 = vld [vmem:[%s1 + $0x230] sm:$0xff]
    %v162 = vld [vmem:[%s1 + $0x238] sm:$0xff]
    %v163 = vld [vmem:[%s1 + $0x240] sm:$0xff]
    %v164 = vld [vmem:[%s1 + $0x248] sm:$0xff]
    %v165 = vld [vmem:[%s1 + $0x250] sm:$0xff]
    %v166 = vld [vmem:[%s1 + $0x258] sm:$0xff]
    %v167 = vld [vmem:[%s1 + $0x260] sm:$0xff]
    %v168 = vld [vmem:[%s1 + $0x268] sm:$0xff]
    %v169 = vld [vmem:[%s1 + $0x270] sm:$0xff]
    %v170 = vld [vmem:[%s1 + $0x278] sm:$0xff]
    %v171 = vld [vmem:[%s1 + $0x280] sm:$0xff]
    %v172 = vld [vmem:[%s1 + $0x288] sm:$0xff]
    %v173 = vld [vmem:[%s1 + $0x290] sm:$0xff]
    %v174 = vld [vmem:[%s1 + $0x298] sm:$0xff]
    %v175 = vld [vmem:[%s1 + $0x2a0] sm:$0xff]
    %v176 = vld [vmem:[%s1 + $0x2a8] sm:$0xff]
    %v177 = vld [vmem:[%s1 + $0x2b0] sm:$0xff]
    %v178 = vld [vmem:[%s1 + $0x2b8] sm:$0xff]
    %v179 = vld [vmem:[%s1 + $0x2c0] sm:$0xff]
    %v180 = vld [vmem:[%s1 + $0x2c8] sm:$0xff]
    %v181 = vld [vmem:[%s1 + $0x2d0] sm:$0xff]
    %v182 = vld [vmem:[%s1 + $0x2d8] sm:$0xff]
    %v183 = vld [vmem:[%s1 + $0x2e0] sm:$0xff]
    %v184 = vld [vmem:[%s1 + $0x2e8] sm:$0xff]
    %v185 = vld [vmem:[%s1 + $0x2f0] sm:$0xff]
    %v186 = vld [vmem:[%s1 + $0x2f8] sm:$0xff]
    %v187 = vld [vmem:[%s1 + $0x300] sm:$0xff]
    %v188 = vld [vmem:[%s1 + $0x308] sm:$0xff]
    %v189 = vld [vmem:[%s1 + $0x310] sm:$0xff]
    %v190 = vld [vmem:[%s1 + $0x318] sm:$0xff]
    %v191 = vld [vmem:[%s1 + $0x320] sm:$0xff]
    %v192 = vld [vmem:[%s1 + $0x328] sm:$0xff]
    %v193 = vld [vmem:[%s1 + $0x330] sm:$0xff]
    %v194 = vld [vmem:[%s1 + $0x338] sm:$0xff]
    %v195 = vld [vmem:[%s1 + $0x340] sm:$0xff]
    %v196 = vld [vmem:[%s1 + $0x348] sm:$0xff]
    %v197 = vld [vmem:[%s1 + $0x350] sm:$0xff]
    %v198 = vld [vmem:[%s1 + $0x358] sm:$0xff]
    %v199 = vld [vmem:[%s1 + $0x360] sm:$0xff]
    %v200 = vld [vmem:[%s1 + $0x368] sm:$0xff]
    %v201 = vld [vmem:[%s1 + $0x370] sm:$0xff]
    %v202 = vld [vmem:[%s1 + $0x378] sm:$0xff]
    %v203 = vld [vmem:[%s1 + $0x380] sm:$0xff]
    %v204 = vld [vmem:[%s1 + $0x388] sm:$0xff]
    %v205 = vld [vmem:[%s1 + $0x390] sm:$0xff]
    %v206 = vld [vmem:[%s1 + $0x398] sm:$0xff]
    %v207 = vld [vmem:[%s1 + $0x3a0] sm:$0xff]
    %v208 = vld [vmem:[%s1 + $0x3a8] sm:$0xff]
    %v209 = vld [vmem:[%s1 + $0x3b0] sm:$0xff]
    %v210 = vld [vmem:[%s1 + $0x3b8] sm:$0xff]
    %v211 = vld [vmem:[%s1 + $0x3c0] sm:$0xff]
    %v212 = vld [vmem:[%s1 + $0x3c8] sm:$0xff]
    %v213 = vld [vmem:[%s1 + $0x3d0] sm:$0xff]
    %v214 = vld [vmem:[%s1 + $0x3d8] sm:$0xff]
    %v215 = vld [vmem:[%s1 + $0x3e0] sm:$0xff]
    %v216 = vld [vmem:[%s1 + $0x3e8] sm:$0xff]
    %v217 = vld [vmem:[%s1 + $0x3f0] sm:$0xff]
    %v218 = vld [vmem:[%s1 + $0x3f8] sm:$0xff]
    %v219 = vld [vmem:[%s1 + $0x400] sm:$0xff]
    %v220 = vld [vmem:[%s1 + $0x408] sm:$0xff]
    %v221 = vld [vmem:[%s1 + $0x410] sm:$0xff]
    %v222 = vld [vmem:[%s1 + $0x418] sm:$0xff]
    %v223 = vld [vmem:[%s1 + $0x420] sm:$0xff]
    %v224 = vld [vmem:[%s1 + $0x428] sm:$0xff]
    %v225 = vld [vmem:[%s1 + $0x430] sm:$0xff]
    %v226 = vld [vmem:[%s1 + $0x438] sm:$0xff]
    %v227 = vld [vmem:[%s1 + $0x440] sm:$0xff]
    %v228 = vld [vmem:[%s1 + $0x448] sm:$0xff]
    %v229 = vld [vmem:[%s1 + $0x450] sm:$0xff]
    %v230 = vld [vmem:[%s1 + $0x458] sm:$0xff]
    %v231 = vld [vmem:[%s1 + $0x460] sm:$0xff]
    %v232 = vld [vmem:[%s1 + $0x468] sm:$0xff]
    %v233 = vld [vmem:[%s1 + $0x470] sm:$0xff]
    %v234 = vld [vmem:[%s1 + $0x478] sm:$0xff]
    %v235 = vld [vmem:[%s1 + $0x480] sm:$0xff]
    %v236 = vld [vmem:[%s1 + $0x488] sm:$0xff]
    %v237 = vld [vmem:[%s1 + $0x490] sm:$0xff]
    %v238 = vld [vmem:[%s1 + $0x498] sm:$0xff]
    %v239 = vld [vmem:[%s1 + $0x4a0] sm:$0xff]
    %v240 = vld [vmem:[%s1 + $0x4a8] sm:$0xff]
    %v241 = vld [vmem:[%s1 + $0x4b0] sm:$0xff]
    %v242 = vld [vmem:[%s1 + $0x4b8] sm:$0xff]
    %v243 = vld [vmem:[%s1 + $0x4c0] sm:$0xff]
    %v244 = vld [vmem:[%s1 + $0x4c8] sm:$0xff]
    %v245 = vld [vmem:[%s1 + $0x4d0] sm:$0xff]
    %v246 = vld [vmem:[%s1 + $0x4d8] sm:$0xff]
    %v247 = vld [vmem:[%s1 + $0x4e0] sm:$0xff]
    %v248 = vld [vmem:[%s1 + $0x4e8] sm:$0xff]
    %v249 = vld [vmem:[%s1 + $0x4f0] sm:$0xff]
    %v250 = vld [vmem:[%s1 + $0x4f8] sm:$0xff]
    %v251 = vld [vmem:[%s1 + $0x500] sm:$0xff]
    %v252 = vld [vmem:[%s1 + $0x508] sm:$0xff]
    %v253 = vld [vmem:[%s1 + $0x510] sm:$0xff]
    %v254 = vld [vmem:[%s1 + $0x518] sm:$0xff]
    %v255 = vld [vmem:[%s1 + $0x520] sm:$0xff]
    %v256 = vld [vmem:[%s1 + $0x528] sm:$0xff]
    %v257 = vld [vmem:[%s1 + $0x530] sm:$0xff]
    %v258 = vld [vmem:[%s1 + $0x538] sm:$0xff]
    %v259 = vld [vmem:[%s1 + $0x540] sm:$0xff]
    %v260 = vld [vmem:[%s1 + $0x548] sm:$0xff]
    %v261 = vld [vmem:[%s1 + $0x550] sm:$0xff]
    %v262 = vld [vmem:[%s1 + $0x558] sm:$0xff]
    %v263 = vld [vmem:[%s1 + $0x560] sm:$0xff]
    %v264 = vld [vmem:[%s1 + $0x568] sm:$0xff]
    %v265 = vld [vmem:[%s1 + $0x570] sm:$0xff]
    %v266 = vld [vmem:[%s1 + $0x578] sm:$0xff]
    %v267 = vld [vmem:[%s1 + $0x580] sm:$0xff]
    %v268 = vld [vmem:[%s1 + $0x588] sm:$0xff]
    %v269 = vld [vmem:[%s1 + $0x590] sm:$0xff]
    %v270 = vld [vmem:[%s1 + $0x598] sm:$0xff]
    %v271 = vld [vmem:[%s1 + $0x5a0] sm:$0xff]
    %v272 = vld [vmem:[%s1 + $0x5a8] sm:$0xff]
    %v273 = vld [vmem:[%s1 + $0x5b0] sm:$0xff]
    %v274 = vld [vmem:[%s1 + $0x5b8] sm:$0xff]
    %v275 = vld [vmem:[%s1 + $0x5c0] sm:$0xff]
    %v276 = vld [vmem:[%s1 + $0x5c8] sm:$0xff]
    %v277 = vld [vmem:[%s1 + $0x5d0] sm:$0xff]
    %v278 = vld [vmem:[%s1 + $0x5d8] sm:$0xff]
    %v279 = vld [vmem:[%s1 + $0x5e0] sm:$0xff]
    %v280 = vld [vmem:[%s1 + $0x5e8] sm:$0xff]
    %v281 = vld [vmem:[%s1 + $0x5f0] sm:$0xff]
    %v282 = vld [vmem:[%s1 + $0x5f8] sm:$0xff]
    %v283 = vld [vmem:[%s1 + $0x600] sm:$0xff]
    %v284 = vld [vmem:[%s1 + $0x608] sm:$0xff]
    %v285 = vld [vmem:[%s1 + $0x610] sm:$0xff]
    %v286 = vld [vmem:[%s1 + $0x618] sm:$0xff]
    %v287 = vld [vmem:[%s1 + $0x620] sm:$0xff]
    %v288 = vld [vmem:[%s1 + $0x628] sm:$0xff]
    %v289 = vld [vmem:[%s1 + $0x630] sm:$0xff]
    %v290 = vld [vmem:[%s1 + $0x638] sm:$0xff]
    %v291 = vld [vmem:[%s1 + $0x640] sm:$0xff]
    %v292 = vld [vmem:[%s1 + $0x648] sm:$0xff]
    %v293 = vld [vmem:[%s1 + $0x650] sm:$0xff]
    %v294 = vld [vmem:[%s1 + $0x658] sm:$0xff]
    %v295 = vld [vmem:[%s1 + $0x660] sm:$0xff]
    %v296 = vld [vmem:[%s1 + $0x668] sm:$0xff]
    %v297 = vld [vmem:[%s1 + $0x670] sm:$0xff]
    %v298 = vld [vmem:[%s1 + $0x678] sm:$0xff]
    %v299 = vld [vmem:[%s1 + $0x680] sm:$0xff]
    %v300 = vld [vmem:[%s1 + $0x688] sm:$0xff]
    %v301 = vld [vmem:[%s1 + $0x690] sm:$0xff]
    %v302 = vld [vmem:[%s1 + $0x698] sm:$0xff]
    %v303 = vld [vmem:[%s1 + $0x6a0] sm:$0xff]
    %v304 = vld [vmem:[%s1 + $0x6a8] sm:$0xff]
    %v305 = vld [vmem:[%s1 + $0x6b0] sm:$0xff]
    %v306 = vld [vmem:[%s1 + $0x6b8] sm:$0xff]
    %v307 = vld [vmem:[%s1 + $0x6c0] sm:$0xff]
    %v308 = vld [vmem:[%s1 + $0x6c8] sm:$0xff]
    %v309 = vld [vmem:[%s1 + $0x6d0] sm:$0xff]
    %v310 = vld [vmem:[%s1 + $0x6d8] sm:$0xff]
    %v311 = vld [vmem:[%s1 + $0x6e0] sm:$0xff]
    %v312 = vld [vmem:[%s1 + $0x6e8] sm:$0xff]
    %v313 = vld [vmem:[%s1 + $0x6f0] sm:$0xff]
    %v314 = vld [vmem:[%s1 + $0x6f8] sm:$0xff]
    %v315 = vld [vmem:[%s1 + $0x700] sm:$0xff]
    %v316 = vld [vmem:[%s1 + $0x708] sm:$0xff]
    %v317 = vld [vmem:[%s1 + $0x710] sm:$0xff]
    %v318 = vld [vmem:[%s1 + $0x718] sm:$0xff]
    %v319 = vld [vmem:[%s1 + $0x720] sm:$0xff]
    %v320 = vld [vmem:[%s1 + $0x728] sm:$0xff]
    %v321 = vld [vmem:[%s1 + $0x730] sm:$0xff]
    %v322 = vld [vmem:[%s1 + $0x738] sm:$0xff]
    %v323 = vld [vmem:[%s1 + $0x740] sm:$0xff]
    %v324 = vld [vmem:[%s1 + $0x748] sm:$0xff]
    %v325 = vld [vmem:[%s1 + $0x750] sm:$0xff]
    %v326 = vld [vmem:[%s1 + $0x758] sm:$0xff]
    %v327 = vld [vmem:[%s1 + $0x760] sm:$0xff]
    %v328 = vld [vmem:[%s1 + $0x768] sm:$0xff]
    %v329 = vld [vmem:[%s1 + $0x770] sm:$0xff]
    %v330 = vld [vmem:[%s1 + $0x778] sm:$0xff]
    %v331 = vld [vmem:[%s1 + $0x780] sm:$0xff]
    %v332 = vld [vmem:[%s1 + $0x788] sm:$0xff]
    %v333 = vld [vmem:[%s1 + $0x790] sm:$0xff]
    %v334 = vld [vmem:[%s1 + $0x798] sm:$0xff]
    %v335 = vld [vmem:[%s1 + $0x7a0] sm:$0xff]
    %v336 = vld [vmem:[%s1 + $0x7a8] sm:$0xff]
    %v337 = vld [vmem:[%s1 + $0x7b0] sm:$0xff]
    %v338 = vld [vmem:[%s1 + $0x7b8] sm:$0xff]
    %v339 = vld [vmem:[%s1 + $0x7c0] sm:$0xff]
    %v340 = vld [vmem:[%s1 + $0x7c8] sm:$0xff]
    %v341 = vld [vmem:[%s1 + $0x7d0] sm:$0xff]
    %v342 = vld [vmem:[%s1 + $0x7d8] sm:$0xff]
    %v343 = vld [vmem:[%s1 + $0x7e0] sm:$0xff]
    %v344 = vld [vmem:[%s1 + $0x7e8] sm:$0xff]
    %v345 = vld [vmem:[%s1 + $0x7f0] sm:$0xff]
    %v346 = vld [vmem:[%s1 + $0x7f8] sm:$0xff]
    %v347 = vld [vmem:[%s1 + $0x800] sm:$0xff]
    %v348 = vld [vmem:[%s1 + $0x808] sm:$0xff]
    %v349 = vld [vmem:[%s1 + $0x810] sm:$0xff]
    %v350 = vld [vmem:[%s1 + $0x818] sm:$0xff]
    %v351 = vld [vmem:[%s1 + $0x820] sm:$0xff]
    %v352 = vld [vmem:[%s1 + $0x828] sm:$0xff]
    %v353 = vld [vmem:[%s1 + $0x830] sm:$0xff]
    %v354 = vld [vmem:[%s1 + $0x838] sm:$0xff]
    %v355 = vld [vmem:[%s1 + $0x840] sm:$0xff]
    %v356 = vld [vmem:[%s1 + $0x848] sm:$0xff]
    %v357 = vld [vmem:[%s1 + $0x850] sm:$0xff]
    %v358 = vld [vmem:[%s1 + $0x858] sm:$0xff]
    %v359 = vld [vmem:[%s1 + $0x860] sm:$0xff]
    %v360 = vld [vmem:[%s1 + $0x868] sm:$0xff]
    %v361 = vld [vmem:[%s1 + $0x870] sm:$0xff]
    %v362 = vld [vmem:[%s1 + $0x878] sm:$0xff]
    %v363 = vld [vmem:[%s1 + $0x880] sm:$0xff]
    %v364 = vld [vmem:[%s1 + $0x888] sm:$0xff]
    %v365 = vld [vmem:[%s1 + $0x890] sm:$0xff]
    %v366 = vld [vmem:[%s1 + $0x898] sm:$0xff]
    %v367 = vld [vmem:[%s1 + $0x8a0] sm:$0xff]
    %v368 = vld [vmem:[%s1 + $0x8a8] sm:$0xff]
    %v369 = vld [vmem:[%s1 + $0x8b0] sm:$0xff]
    %v370 = vld [vmem:[%s1 + $0x8b8] sm:$0xff]
    %v371 = vld [vmem:[%s1 + $0x8c0] sm:$0xff]
    %v372 = vld [vmem:[%s1 + $0x8c8] sm:$0xff]
    %v373 = vld [vmem:[%s1 + $0x8d0] sm:$0xff]
    %v374 = vld [vmem:[%s1 + $0x8d8] sm:$0xff]
    %v375 = vld [vmem:[%s1 + $0x8e0] sm:$0xff]
    %v376 = vld [vmem:[%s1 + $0x8e8] sm:$0xff]
    %v377 = vld [vmem:[%s1 + $0x8f0] sm:$0xff]
    %v378 = vld [vmem:[%s1 + $0x8f8] sm:$0xff]
    %v379 = vld [vmem:[%s1 + $0x900] sm:$0xff]
    %v380 = vld [vmem:[%s1 + $0x908] sm:$0xff]
    %v381 = vld [vmem:[%s1 + $0x910] sm:$0xff]
    %v382 = vld [vmem:[%s1 + $0x918] sm:$0xff]
    %v383 = vld [vmem:[%s1 + $0x920] sm:$0xff]
    %v384 = vld [vmem:[%s1 + $0x928] sm:$0xff]
    %v385 = vld [vmem:[%s1 + $0x930] sm:$0xff]
    %v386 = vld [vmem:[%s1 + $0x938] sm:$0xff]
    %v387 = vld [vmem:[%s1 + $0x940] sm:$0xff]
    %v388 = vld [vmem:[%s1 + $0x948] sm:$0xff]
    %v389 = vld [vmem:[%s1 + $0x950] sm:$0xff]
    %v390 = vld [vmem:[%s1 + $0x958] sm:$0xff]
    %v391 = vld [vmem:[%s1 + $0x960] sm:$0xff]
    %v392 = vld [vmem:[%s1 + $0x968] sm:$0xff]
    %v393 = vld [vmem:[%s1 + $0x970] sm:$0xff]
    %v394 = vld [vmem:[%s1 + $0x978] sm:$0xff]
    %v395 = vld [vmem:[%s1 + $0x980] sm:$0xff]
    %v396 = vld [vmem:[%s1 + $0x988] sm:$0xff]
    %v397 = vld [vmem:[%s1 + $0x990] sm:$0xff]
    %v398 = vld [vmem:[%s1 + $0x998] sm:$0xff]
    %v399 = vld [vmem:[%s1 + $0x9a0] sm:$0xff]
    %v400 = vld [vmem:[%s1 + $0x9a8] sm:$0xff]
    %v401 = vld [vmem:[%s1 + $0x9b0] sm:$0xff]
    %v402 = vld [vmem:[%s1 + $0x9b8] sm:$0xff]
    %v403 = vld [vmem:[%s1 + $0x9c0] sm:$0xff]
    %v404 = vld [vmem:[%s1 + $0x9c8] sm:$0xff]
    %v405 = vld [vmem:[%s1 + $0x9d0] sm:$0xff]
    %v406 = vld [vmem:[%s1 + $0x9d8] sm:$0xff]
    %v407 = vld [vmem:[%s1 + $0x9e0] sm:$0xff]
    %v408 = vld [vmem:[%s1 + $0x9e8] sm:$0xff]
    %v409 = vld [vmem:[%s1 + $0x9f0] sm:$0xff]
    %v410 = vld [vmem:[%s1 + $0x9f8] sm:$0xff]
    %v411 = vld [vmem:[%s1 + $0xa00] sm:$0xff]
    %v412 = vld [vmem:[%s1 + $0xa08] sm:$0xff]
    %v413 = vld [vmem:[%s1 + $0xa10] sm:$0xff]
    %v414 = vld [vmem:[%s1 + $0xa18] sm:$0xff]
    %v415 = vld [vmem:[%s1 + $0xa20] sm:$0xff]
    %v416 = vld [vmem:[%s1 + $0xa28] sm:$0xff]
    %v417 = vld [vmem:[%s1 + $0xa30] sm:$0xff]
    %v418 = vld [vmem:[%s1 + $0xa38] sm:$0xff]
    %v419 = vld [vmem:[%s1 + $0xa40] sm:$0xff]
    %v420 = vld [vmem:[%s1 + $0xa48] sm:$0xff]
    %v421 = vld [vmem:[%s1 + $0xa50] sm:$0xff]
    %v422 = vld [vmem:[%s1 + $0xa58] sm:$0xff]
    %v423 = vld [vmem:[%s1 + $0xa60] sm:$0xff]
    %v424 = vld [vmem:[%s1 + $0xa68] sm:$0xff]
    %v425 = vld [vmem:[%s1 + $0xa70] sm:$0xff]
    %v426 = vld [vmem:[%s1 + $0xa78] sm:$0xff]
    %v427 = vld [vmem:[%s1 + $0xa80] sm:$0xff]
    %v428 = vld [vmem:[%s1 + $0xa88] sm:$0xff]
    %v429 = vld [vmem:[%s1 + $0xa90] sm:$0xff]
    %v430 = vld [vmem:[%s1 + $0xa98] sm:$0xff]
    %v431 = vld [vmem:[%s1 + $0xaa0] sm:$0xff]
    %v432 = vld [vmem:[%s1 + $0xaa8] sm:$0xff]
    %v433 = vld [vmem:[%s1 + $0xab0] sm:$0xff]
    %v434 = vld [vmem:[%s1 + $0xab8] sm:$0xff]
    %v435 = vld [vmem:[%s1 + $0xac0] sm:$0xff]
    %v436 = vld [vmem:[%s1 + $0xac8] sm:$0xff]
    %v437 = vld [vmem:[%s1 + $0xad0] sm:$0xff]
    %v438 = vld [vmem:[%s1 + $0xad8] sm:$0xff]
    %v439 = vld [vmem:[%s1 + $0xae0] sm:$0xff]
    %v440 = vld [vmem:[%s1 + $0xae8] sm:$0xff]
    %v441 = vld [vmem:[%s1 + $0xaf0] sm:$0xff]
    %v442 = vld [vmem:[%s1 + $0xaf8] sm:$0xff]
    %v443 = vld [vmem:[%s1 + $0xb00] sm:$0xff]
    %v444 = vld [vmem:[%s1 + $0xb08] sm:$0xff]
    %v445 = vld [vmem:[%s1 + $0xb10] sm:$0xff]
    %v446 = vld [vmem:[%s1 + $0xb18] sm:$0xff]
    %v447 = vld [vmem:[%s1 + $0xb20] sm:$0xff]
    %v448 = vld [vmem:[%s1 + $0xb28] sm:$0xff]
    %v449 = vld [vmem:[%s1 + $0xb30] sm:$0xff]
    %v450 = vld [vmem:[%s1 + $0xb38] sm:$0xff]
    %v451 = vld [vmem:[%s1 + $0xb40] sm:$0xff]
    %v452 = vld [vmem:[%s1 + $0xb48] sm:$0xff]
    %v453 = vld [vmem:[%s1 + $0xb50] sm:$0xff]
    %v454 = vld [vmem:[%s1 + $0xb58] sm:$0xff]
    %v455 = vld [vmem:[%s1 + $0xb60] sm:$0xff]
    %v456 = vld [vmem:[%s1 + $0xb68] sm:$0xff]
    %v457 = vld [vmem:[%s1 + $0xb70] sm:$0xff]
    %v458 = vld [vmem:[%s1 + $0xb78] sm:$0xff]
    %v459 = vld [vmem:[%s1 + $0xb80] sm:$0xff]
    %v460 = vld [vmem:[%s1 + $0xb88] sm:$0xff]
    %v461 = vld [vmem:[%s1 + $0xb90] sm:$0xff]
    %v462 = vld [vmem:[%s1 + $0xb98] sm:$0xff]
    %v463 = vld [vmem:[%s1 + $0xba0] sm:$0xff]
    %v464 = vld [vmem:[%s1 + $0xba8] sm:$0xff]
    %v465 = vld [vmem:[%s1 + $0xbb0] sm:$0xff]
    %v466 = vld [vmem:[%s1 + $0xbb8] sm:$0xff]
    %v467 = vld [vmem:[%s1 + $0xbc0] sm:$0xff]
    %v468 = vld [vmem:[%s1 + $0xbc8] sm:$0xff]
    %v469 = vld [vmem:[%s1 + $0xbd0] sm:$0xff]
    %v470 = vld [vmem:[%s1 + $0xbd8] sm:$0xff]
    %v471 = vld [vmem:[%s1 + $0xbe0] sm:$0xff]
    %v472 = vld [vmem:[%s1 + $0xbe8] sm:$0xff]
    %v473 = vld [vmem:[%s1 + $0xbf0] sm:$0xff]
    %v474 = vld [vmem:[%s1 + $0xbf8] sm:$0xff]
    %v475 = vld [vmem:[%s1 + $0xc00] sm:$0xff]
    %v476 = vld [vmem:[%s1 + $0xc08] sm:$0xff]
    %v477 = vld [vmem:[%s1 + $0xc10] sm:$0xff]
    %v478 = vld [vmem:[%s1 + $0xc18] sm:$0xff]
    %v479 = vld [vmem:[%s1 + $0xc20] sm:$0xff]
    %v480 = vld [vmem:[%s1 + $0xc28] sm:$0xff]
    %v481 = vld [vmem:[%s1 + $0xc30] sm:$0xff]
    %v482 = vld [vmem:[%s1 + $0xc38] sm:$0xff]
    %v483 = vld [vmem:[%s1 + $0xc40] sm:$0xff]
    %v484 = vld [vmem:[%s1 + $0xc48] sm:$0xff]
    %v485 = vld [vmem:[%s1 + $0xc50] sm:$0xff]
    %v486 = vld [vmem:[%s1 + $0xc58] sm:$0xff]
    %v487 = vld [vmem:[%s1 + $0xc60] sm:$0xff]
    %v488 = vld [vmem:[%s1 + $0xc68] sm:$0xff]
    %v489 = vld [vmem:[%s1 + $0xc70] sm:$0xff]
    %v490 = vld [vmem:[%s1 + $0xc78] sm:$0xff]
    %v491 = vld [vmem:[%s1 + $0xc80] sm:$0xff]
    %v492 = vld [vmem:[%s1 + $0xc88] sm:$0xff]
    %v493 = vld [vmem:[%s1 + $0xc90] sm:$0xff]
    %v494 = vld [vmem:[%s1 + $0xc98] sm:$0xff]
    %v495 = vld [vmem:[%s1 + $0xca0] sm:$0xff]
    %v496 = vld [vmem:[%s1 + $0xca8] sm:$0xff]
    %v497 = vld [vmem:[%s1 + $0xcb0] sm:$0xff]
    %v498 = vld [vmem:[%s1 + $0xcb8] sm:$0xff]
    %v499 = vld [vmem:[%s1 + $0xcc0] sm:$0xff]
    %v500 = vld [vmem:[%s1 + $0xcc8] sm:$0xff]
    %v501 = vld [vmem:[%s1 + $0xcd0] sm:$0xff]
    %v502 = vld [vmem:[%s1 + $0xcd8] sm:$0xff]
    %v503 = vld [vmem:[%s1 + $0xce0] sm:$0xff]
    %v504 = vld [vmem:[%s1 + $0xce8] sm:$0xff]
    %v505 = vld [vmem:[%s1 + $0xcf0] sm:$0xff]
    %v506 = vld [vmem:[%s1 + $0xcf8] sm:$0xff]
    %v507 = vld [vmem:[%s1 + $0xd00] sm:$0xff]
    %v508 = vld [vmem:[%s1 + $0xd08] sm:$0xff]
    %v509 = vld [vmem:[%s1 + $0xd10] sm:$0xff]
    %v510 = vld [vmem:[%s1 + $0xd18] sm:$0xff]
    %v511 = vld [vmem:[%s1 + $0xd20] sm:$0xff]
    %v512 = vld [vmem:[%s1 + $0xd28] sm:$0xff]
    %v513 = vld [vmem:[%s1 + $0xd30] sm:$0xff]
    %v514 = vld [vmem:[%s1 + $0xd38] sm:$0xff]
    %v515 = vld [vmem:[%s1 + $0xd40] sm:$0xff]
    %v516 = vld [vmem:[%s1 + $0xd48] sm:$0xff]
    %v517 = vld [vmem:[%s1 + $0xd50] sm:$0xff]
    %v518 = vld [vmem:[%s1 + $0xd58] sm:$0xff]
    %v519 = vld [vmem:[%s1 + $0xd60] sm:$0xff]
    %v520 = vld [vmem:[%s1 + $0xd68] sm:$0xff]
    %v521 = vld [vmem:[%s1 + $0xd70] sm:$0xff]
    %v522 = vld [vmem:[%s1 + $0xd78] sm:$0xff]
    %v523 = vld [vmem:[%s1 + $0xd80] sm:$0xff]
    %v524 = vld [vmem:[%s1 + $0xd88] sm:$0xff]
    %v525 = vld [vmem:[%s1 + $0xd90] sm:$0xff]
    %v526 = vld [vmem:[%s1 + $0xd98] sm:$0xff]
    %v527 = vld [vmem:[%s1 + $0xda0] sm:$0xff]
    %v528 = vld [vmem:[%s1 + $0xda8] sm:$0xff]
    %v529 = vld [vmem:[%s1 + $0xdb0] sm:$0xff]
    %v530 = vld [vmem:[%s1 + $0xdb8] sm:$0xff]
    %v531 = vld [vmem:[%s1 + $0xdc0] sm:$0xff]
    %v532 = vld [vmem:[%s1 + $0xdc8] sm:$0xff]
    %v533 = vld [vmem:[%s1 + $0xdd0] sm:$0xff]
    %v534 = vld [vmem:[%s1 + $0xdd8] sm:$0xff]
    %v535 = vld [vmem:[%s1 + $0xde0] sm:$0xff]
    %v536 = vld [vmem:[%s1 + $0xde8] sm:$0xff]
    %v537 = vld [vmem:[%s1 + $0xdf0] sm:$0xff]
    %v538 = vld [vmem:[%s1 + $0xdf8] sm:$0xff]
    %v539 = vld [vmem:[%s1 + $0xe00] sm:$0xff]
    %v540 = vld [vmem:[%s1 + $0xe08] sm:$0xff]
    %v541 = vld [vmem:[%s1 + $0xe10] sm:$0xff]
    %v542 = vld [vmem:[%s1 + $0xe18] sm:$0xff]
    %v543 = vld [vmem:[%s1 + $0xe20] sm:$0xff]
    %v544 = vld [vmem:[%s1 + $0xe28] sm:$0xff]
    %v545 = vld [vmem:[%s1 + $0xe30] sm:$0xff]
    %v546 = vld [vmem:[%s1 + $0xe38] sm:$0xff]
    %v547 = vld [vmem:[%s1 + $0xe40] sm:$0xff]
    %v548 = vld [vmem:[%s1 + $0xe48] sm:$0xff]
    %v549 = vld [vmem:[%s1 + $0xe50] sm:$0xff]
    %v550 = vld [vmem:[%s1 + $0xe58] sm:$0xff]
    %v551 = vld [vmem:[%s1 + $0xe60] sm:$0xff]
    %v552 = vld [vmem:[%s1 + $0xe68] sm:$0xff]
    %v553 = vld [vmem:[%s1 + $0xe70] sm:$0xff]
    %v554 = vld [vmem:[%s1 + $0xe78] sm:$0xff]
    %v555 = vld [vmem:[%s1 + $0xe80] sm:$0xff]
    %v556 = vld [vmem:[%s1 + $0xe88] sm:$0xff]
    %v557 = vld [vmem:[%s1 + $0xe90] sm:$0xff]
    %v558 = vld [vmem:[%s1 + $0xe98] sm:$0xff]
    %v559 = vld [vmem:[%s1 + $0xea0] sm:$0xff]
    %v560 = vld [vmem:[%s1 + $0xea8] sm:$0xff]
    %v561 = vld [vmem:[%s1 + $0xeb0] sm:$0xff]
    %v562 = vld [vmem:[%s1 + $0xeb8] sm:$0xff]
    %v563 = vld [vmem:[%s1 + $0xec0] sm:$0xff]
    %v564 = vld [vmem:[%s1 + $0xec8] sm:$0xff]
    %v565 = vld [vmem:[%s1 + $0xed0] sm:$0xff]
    %v566 = vld [vmem:[%s1 + $0xed8] sm:$0xff]
    %v567 = vld [vmem:[%s1 + $0xee0] sm:$0xff]
    %v568 = vld [vmem:[%s1 + $0xee8] sm:$0xff]
    %v569 = vld [vmem:[%s1 + $0xef0] sm:$0xff]
    %v570 = vld [vmem:[%s1 + $0xef8] sm:$0xff]
    %v571 = vld [vmem:[%s1 + $0xf00] sm:$0xff]
    %v572 = vld [vmem:[%s1 + $0xf08] sm:$0xff]
    %v573 = vld [vmem:[%s1 + $0xf10] sm:$0xff]
    %v574 = vld [vmem:[%s1 + $0xf18] sm:$0xff]
    %v575 = vld [vmem:[%s1 + $0xf20] sm:$0xff]
    %v576 = vld [vmem:[%s1 + $0xf28] sm:$0xff]
    %v577 = vld [vmem:[%s1 + $0xf30] sm:$0xff]
    %v578 = vld [vmem:[%s1 + $0xf38] sm:$0xff]
    %v579 = vld [vmem:[%s1 + $0xf40] sm:$0xff]
    %v580 = vld [vmem:[%s1 + $0xf48] sm:$0xff]
    %v581 = vld [vmem:[%s1 + $0xf50] sm:$0xff]
    %v582 = vld [vmem:[%s1 + $0xf58] sm:$0xff]
    %v583 = vld [vmem:[%s1 + $0xf60] sm:$0xff]
    %v584 = vld [vmem:[%s1 + $0xf68] sm:$0xff]
    %v585 = vld [vmem:[%s1 + $0xf70] sm:$0xff]
    %v586 = vld [vmem:[%s1 + $0xf78] sm:$0xff]
    %v587 = vld [vmem:[%s1 + $0xf80] sm:$0xff]
    %v588 = vld [vmem:[%s1 + $0xf88] sm:$0xff]
    %v589 = vld [vmem:[%s1 + $0xf90] sm:$0xff]
    %v590 = vld [vmem:[%s1 + $0xf98] sm:$0xff]
    %v591 = vld [vmem:[%s1 + $0xfa0] sm:$0xff]
    %v592 = vld [vmem:[%s1 + $0xfa8] sm:$0xff]
    %v593 = vld [vmem:[%s1 + $0xfb0] sm:$0xff]
    %v594 = vld [vmem:[%s1 + $0xfb8] sm:$0xff]
    %v595 = vld [vmem:[%s1 + $0xfc0] sm:$0xff]
    %v596 = vld [vmem:[%s1 + $0xfc8] sm:$0xff]
    %v597 = vld [vmem:[%s1 + $0xfd0] sm:$0xff]
    %v598 = vld [vmem:[%s1 + $0xfd8] sm:$0xff]
    %v599 = vld [vmem:[%s1 + $0xfe0] sm:$0xff]
    %v600 = vld [vmem:[%s1 + $0xfe8] sm:$0xff]
    %v601 = vld [vmem:[%s1 + $0xff0] sm:$0xff]
    %v602 = vld [vmem:[%s1 + $0xff8] sm:$0xff]
    %v603 = vld [vmem:[%s1 + $0x1000] sm:$0xff]
    %v604 = vld [vmem:[%s1 + $0x1008] sm:$0xff]
    %v605 = vld [vmem:[%s1 + $0x1010] sm:$0xff]
    %v606 = vld [vmem:[%s1 + $0x1018] sm:$0xff]
    %v607 = vld [vmem:[%s1 + $0x1020] sm:$0xff]
    %v608 = vld [vmem:[%s1 + $0x1028] sm:$0xff]
    %v609 = vld [vmem:[%s1 + $0x1030] sm:$0xff]
    %v610 = vld [vmem:[%s1 + $0x1038] sm:$0xff]
    %v611 = vld [vmem:[%s1 + $0x1040] sm:$0xff]
    %v612 = vld [vmem:[%s1 + $0x1048] sm:$0xff]
    %v613 = vld [vmem:[%s1 + $0x1050] sm:$0xff]
    %v614 = vld [vmem:[%s1 + $0x1058] sm:$0xff]
    %v615 = vld [vmem:[%s1 + $0x1060] sm:$0xff]
    %v616 = vld [vmem:[%s1 + $0x1068] sm:$0xff]
    %v617 = vld [vmem:[%s1 + $0x1070] sm:$0xff]
    %v618 = vld [vmem:[%s1 + $0x1078] sm:$0xff]
    %v619 = vld [vmem:[%s1 + $0x1080] sm:$0xff]
    %v620 = vld [vmem:[%s1 + $0x1088] sm:$0xff]
    %v621 = vld [vmem:[%s1 + $0x1090] sm:$0xff]
    %v622 = vld [vmem:[%s1 + $0x1098] sm:$0xff]
    %v623 = vld [vmem:[%s1 + $0x10a0] sm:$0xff]
    %v624 = vld [vmem:[%s1 + $0x10a8] sm:$0xff]
    %v625 = vld [vmem:[%s1 + $0x10b0] sm:$0xff]
    %v626 = vld [vmem:[%s1 + $0x10b8] sm:$0xff]
    %v627 = vld [vmem:[%s1 + $0x10c0] sm:$0xff]
    %v628 = vld [vmem:[%s1 + $0x10c8] sm:$0xff]
    %v629 = vld [vmem:[%s1 + $0x10d0] sm:$0xff]
    %v630 = vld [vmem:[%s1 + $0x10d8] sm:$0xff]
    %v631 = vld [vmem:[%s1 + $0x10e0] sm:$0xff]
    %v632 = vld [vmem:[%s1 + $0x10e8] sm:$0xff]
    %v633 = vld [vmem:[%s1 + $0x10f0] sm:$0xff]
    %v634 = vld [vmem:[%s1 + $0x10f8] sm:$0xff]
    %v635 = vld [vmem:[%s1 + $0x1100] sm:$0xff]
    %v636 = vld [vmem:[%s1 + $0x1108] sm:$0xff]
    %v637 = vld [vmem:[%s1 + $0x1110] sm:$0xff]
    %v638 = vld [vmem:[%s1 + $0x1118] sm:$0xff]
    %v639 = vld [vmem:[%s1 + $0x1120] sm:$0xff]
    %v640 = vld [vmem:[%s1 + $0x1128] sm:$0xff]
    %v641 = vld [vmem:[%s1 + $0x1130] sm:$0xff]
    %v642 = vld [vmem:[%s1 + $0x1138] sm:$0xff]
    %v643 = vld [vmem:[%s1 + $0x1140] sm:$0xff]
    %v644 = vld [vmem:[%s1 + $0x1148] sm:$0xff]
    %v645 = vld [vmem:[%s1 + $0x1150] sm:$0xff]
    %v646 = vld [vmem:[%s1 + $0x1158] sm:$0xff]
    %v647 = vld [vmem:[%s1 + $0x1160] sm:$0xff]
    %v648 = vld [vmem:[%s1 + $0x1168] sm:$0xff]
    %v649 = vld [vmem:[%s1 + $0x1170] sm:$0xff]
    %v650 = vld [vmem:[%s1 + $0x1178] sm:$0xff]
    %v651 = vld [vmem:[%s1 + $0x1180] sm:$0xff]
    %v652 = vld [vmem:[%s1 + $0x1188] sm:$0xff]
    %v653 = vld [vmem:[%s1 + $0x1190] sm:$0xff]
    %v654 = vld [vmem:[%s1 + $0x1198] sm:$0xff]
    %v655 = vld [vmem:[%s1 + $0x11a0] sm:$0xff]
    %v656 = vld [vmem:[%s1 + $0x11a8] sm:$0xff]
    %v657 = vld [vmem:[%s1 + $0x11b0] sm:$0xff]
    %v658 = vld [vmem:[%s1 + $0x11b8] sm:$0xff]
    %v659 = vld [vmem:[%s1 + $0x11c0] sm:$0xff]
    %v660 = vld [vmem:[%s1 + $0x11c8] sm:$0xff]
    %v661 = vld [vmem:[%s1 + $0x11d0] sm:$0xff]
    %v662 = vld [vmem:[%s1 + $0x11d8] sm:$0xff]
    %v663 = vld [vmem:[%s1 + $0x11e0] sm:$0xff]
    %v664 = vld [vmem:[%s1 + $0x11e8] sm:$0xff]
    %v665 = vld [vmem:[%s1 + $0x11f0] sm:$0xff]
    %v666 = vld [vmem:[%s1 + $0x11f8] sm:$0xff]
    %v667 = vld [vmem:[%s1 + $0x1200] sm:$0xff]
    %v668 = vld [vmem:[%s1 + $0x1208] sm:$0xff]
    %v669 = vld [vmem:[%s1 + $0x1210] sm:$0xff]
    %v670 = vld [vmem:[%s1 + $0x1218] sm:$0xff]
    %v671 = vld [vmem:[%s1 + $0x1220] sm:$0xff]
    %v672 = vld [vmem:[%s1 + $0x1228] sm:$0xff]
    %v673 = vld [vmem:[%s1 + $0x1230] sm:$0xff]
    %v674 = vld [vmem:[%s1 + $0x1238] sm:$0xff]
    %v675 = vld [vmem:[%s1 + $0x1240] sm:$0xff]
    %v676 = vld [vmem:[%s1 + $0x1248] sm:$0xff]
    %v677 = vld [vmem:[%s1 + $0x1250] sm:$0xff]
    %v678 = vld [vmem:[%s1 + $0x1258] sm:$0xff]
    %v679 = vld [vmem:[%s1 + $0x1260] sm:$0xff]
    %v680 = vld [vmem:[%s1 + $0x1268] sm:$0xff]
    %v681 = vld [vmem:[%s1 + $0x1270] sm:$0xff]
    %v682 = vld [vmem:[%s1 + $0x1278] sm:$0xff]
    %v683 = vld [vmem:[%s1 + $0x1280] sm:$0xff]
    %v684 = vld [vmem:[%s1 + $0x1288] sm:$0xff]
    %v685 = vld [vmem:[%s1 + $0x1290] sm:$0xff]
    %v686 = vld [vmem:[%s1 + $0x1298] sm:$0xff]
    %v687 = vld [vmem:[%s1 + $0x12a0] sm:$0xff]
    %v688 = vld [vmem:[%s1 + $0x12a8] sm:$0xff]
    %v689 = vld [vmem:[%s1 + $0x12b0] sm:$0xff]
    %v690 = vld [vmem:[%s1 + $0x12b8] sm:$0xff]
    %v691 = vld [vmem:[%s1 + $0x12c0] sm:$0xff]
    %v692 = vld [vmem:[%s1 + $0x12c8] sm:$0xff]
    %v693 = vld [vmem:[%s1 + $0x12d0] sm:$0xff]
    %v694 = vld [vmem:[%s1 + $0x12d8] sm:$0xff]
    %v695 = vld [vmem:[%s1 + $0x12e0] sm:$0xff]
    %v696 = vld [vmem:[%s1 + $0x12e8] sm:$0xff]
    %v697 = vld [vmem:[%s1 + $0x12f0] sm:$0xff]
    %v698 = vld [vmem:[%s1 + $0x12f8] sm:$0xff]
    %v699 = vld [vmem:[%s1 + $0x1300] sm:$0xff]
    %v700 = vld [vmem:[%s1 + $0x1308] sm:$0xff]
    %v701 = vld [vmem:[%s1 + $0x1310] sm:$0xff]
    %v702 = vld [vmem:[%s1 + $0x1318] sm:$0xff]
    %v703 = vld [vmem:[%s1 + $0x1320] sm:$0xff]
    %v704 = vld [vmem:[%s1 + $0x1328] sm:$0xff]
    %v705 = vld [vmem:[%s1 + $0x1330] sm:$0xff]
    %v706 = vld [vmem:[%s1 + $0x1338] sm:$0xff]
    %v707 = vld [vmem:[%s1 + $0x1340] sm:$0xff]
    %v708 = vld [vmem:[%s1 + $0x1348] sm:$0xff]
    %v709 = vld [vmem:[%s1 + $0x1350] sm:$0xff]
    %v710 = vld [vmem:[%s1 + $0x1358] sm:$0xff]
    %v711 = vld [vmem:[%s1 + $0x1360] sm:$0xff]
    %v712 = vld [vmem:[%s1 + $0x1368] sm:$0xff]
    %v713 = vld [vmem:[%s1 + $0x1370] sm:$0xff]
    %v714 = vld [vmem:[%s1 + $0x1378] sm:$0xff]
    %v715 = vld [vmem:[%s1 + $0x1380] sm:$0xff]
    %v716 = vld [vmem:[%s1 + $0x1388] sm:$0xff]
    %v717 = vld [vmem:[%s1 + $0x1390] sm:$0xff]
    %v718 = vld [vmem:[%s1 + $0x1398] sm:$0xff]
    %v719 = vld [vmem:[%s1 + $0x13a0] sm:$0xff]
    %v720 = vld [vmem:[%s1 + $0x13a8] sm:$0xff]
    %v721 = vld [vmem:[%s1 + $0x13b0] sm:$0xff]
    %v722 = vld [vmem:[%s1 + $0x13b8] sm:$0xff]
    %v723 = vld [vmem:[%s1 + $0x13c0] sm:$0xff]
    %v724 = vld [vmem:[%s1 + $0x13c8] sm:$0xff]
    %v725 = vld [vmem:[%s1 + $0x13d0] sm:$0xff]
    %v726 = vld [vmem:[%s1 + $0x13d8] sm:$0xff]
    %v727 = vld [vmem:[%s1 + $0x13e0] sm:$0xff]
    %v728 = vld [vmem:[%s1 + $0x13e8] sm:$0xff]
    %v729 = vld [vmem:[%s1 + $0x13f0] sm:$0xff]
    %v730 = vld [vmem:[%s1 + $0x13f8] sm:$0xff]
    %v731 = vld [vmem:[%s1 + $0x1400] sm:$0xff]
    %v732 = vld [vmem:[%s1 + $0x1408] sm:$0xff]
    %v733 = vld [vmem:[%s1 + $0x1410] sm:$0xff]
    %v734 = vld [vmem:[%s1 + $0x1418] sm:$0xff]
    %v735 = vld [vmem:[%s1 + $0x1420] sm:$0xff]
    %v736 = vld [vmem:[%s1 + $0x1428] sm:$0xff]
    %v737 = vld [vmem:[%s1 + $0x1430] sm:$0xff]
    %v738 = vld [vmem:[%s1 + $0x1438] sm:$0xff]
    %v739 = vld [vmem:[%s1 + $0x1440] sm:$0xff]
    %v740 = vld [vmem:[%s1 + $0x1448] sm:$0xff]
    %v741 = vld [vmem:[%s1 + $0x1450] sm:$0xff]
    %v742 = vld [vmem:[%s1 + $0x1458] sm:$0xff]
    %v743 = vld [vmem:[%s1 + $0x1460] sm:$0xff]
    %v744 = vld [vmem:[%s1 + $0x1468] sm:$0xff]
    %v745 = vld [vmem:[%s1 + $0x1470] sm:$0xff]
    %v746 = vld [vmem:[%s1 + $0x1478] sm:$0xff]
    %v747 = vld [vmem:[%s1 + $0x1480] sm:$0xff]
    %v748 = vld [vmem:[%s1 + $0x1488] sm:$0xff]
    %v749 = vld [vmem:[%s1 + $0x1490] sm:$0xff]
    %v750 = vld [vmem:[%s1 + $0x1498] sm:$0xff]
    %v751 = vld [vmem:[%s1 + $0x14a0] sm:$0xff]
    %v752 = vld [vmem:[%s1 + $0x14a8] sm:$0xff]
    %v753 = vld [vmem:[%s1 + $0x14b0] sm:$0xff]
    %v754 = vld [vmem:[%s1 + $0x14b8] sm:$0xff]
    %v755 = vld [vmem:[%s1 + $0x14c0] sm:$0xff]
    %v756 = vld [vmem:[%s1 + $0x14c8] sm:$0xff]
    %v757 = vld [vmem:[%s1 + $0x14d0] sm:$0xff]
    %v758 = vld [vmem:[%s1 + $0x14d8] sm:$0xff]
    %v759 = vld [vmem:[%s1 + $0x14e0] sm:$0xff]
    %v760 = vld [vmem:[%s1 + $0x14e8] sm:$0xff]
    %v761 = vld [vmem:[%s1 + $0x14f0] sm:$0xff]
    %v762 = vld [vmem:[%s1 + $0x14f8] sm:$0xff]
    %v763 = vld [vmem:[%s1 + $0x1500] sm:$0xff]
    %v764 = vld [vmem:[%s1 + $0x1508] sm:$0xff]
    %v765 = vld [vmem:[%s1 + $0x1510] sm:$0xff]
    %v766 = vld [vmem:[%s1 + $0x1518] sm:$0xff]
    %v767 = vld [vmem:[%s1 + $0x1520] sm:$0xff]
    %v768 = vld [vmem:[%s1 + $0x1528] sm:$0xff]
    %v769 = vld [vmem:[%s1 + $0x1530] sm:$0xff]
    %v770 = vld [vmem:[%s1 + $0x1538] sm:$0xff]
    %v771 = vld [vmem:[%s1 + $0x1540] sm:$0xff]
    %v772 = vld [vmem:[%s1 + $0x1548] sm:$0xff]
    %v773 = vld [vmem:[%s1 + $0x1550] sm:$0xff]
    %v774 = vld [vmem:[%s1 + $0x1558] sm:$0xff]
    %v775 = vld [vmem:[%s1 + $0x1560] sm:$0xff]
    %v776 = vld [vmem:[%s1 + $0x1568] sm:$0xff]
    %v777 = vld [vmem:[%s1 + $0x1570] sm:$0xff]
    %v778 = vld [vmem:[%s1 + $0x1578] sm:$0xff]
    %v779 = vld [vmem:[%s1 + $0x1580] sm:$0xff]
    %v780 = vld [vmem:[%s1 + $0x1588] sm:$0xff]
    %v781 = vld [vmem:[%s1 + $0x1590] sm:$0xff]
    %v782 = vld [vmem:[%s1 + $0x1598] sm:$0xff]
    %v783 = vld [vmem:[%s1 + $0x15a0] sm:$0xff]
    %v784 = vld [vmem:[%s1 + $0x15a8] sm:$0xff]
    %v785 = vld [vmem:[%s1 + $0x15b0] sm:$0xff]
    %v786 = vld [vmem:[%s1 + $0x15b8] sm:$0xff]
    %v787 = vld [vmem:[%s1 + $0x15c0] sm:$0xff]
    %v788 = vld [vmem:[%s1 + $0x15c8] sm:$0xff]
    %v789 = vld [vmem:[%s1 + $0x15d0] sm:$0xff]
    %v790 = vld [vmem:[%s1 + $0x15d8] sm:$0xff]
    %v791 = vld [vmem:[%s1 + $0x15e0] sm:$0xff]
    %v792 = vld [vmem:[%s1 + $0x15e8] sm:$0xff]
    %v793 = vld [vmem:[%s1 + $0x15f0] sm:$0xff]
    %v794 = vld [vmem:[%s1 + $0x15f8] sm:$0xff]
    %v795 = vld [vmem:[%s1 + $0x1600] sm:$0xff]
    %v796 = vld [vmem:[%s1 + $0x1608] sm:$0xff]
    %v797 = vld [vmem:[%s1 + $0x1610] sm:$0xff]
    %v798 = vld [vmem:[%s1 + $0x1618] sm:$0xff]
    %v799 = vld [vmem:[%s1 + $0x1620] sm:$0xff]
    %v800 = vld [vmem:[%s1 + $0x1628] sm:$0xff]
    %v801 = vld [vmem:[%s1 + $0x1630] sm:$0xff]
    %v802 = vld [vmem:[%s1 + $0x1638] sm:$0xff]
    %v803 = vld [vmem:[%s1 + $0x1640] sm:$0xff]
    %v804 = vld [vmem:[%s1 + $0x1648] sm:$0xff]
    %v805 = vld [vmem:[%s1 + $0x1650] sm:$0xff]
    %v806 = vld [vmem:[%s1 + $0x1658] sm:$0xff]
    %v807 = vld [vmem:[%s1 + $0x1660] sm:$0xff]
    %v808 = vld [vmem:[%s1 + $0x1668] sm:$0xff]
    %v809 = vld [vmem:[%s1 + $0x1670] sm:$0xff]
    %v810 = vld [vmem:[%s1 + $0x1678] sm:$0xff]
    %v811 = vld [vmem:[%s1 + $0x1680] sm:$0xff]
    %v812 = vld [vmem:[%s1 + $0x1688] sm:$0xff]
    %v813 = vld [vmem:[%s1 + $0x1690] sm:$0xff]
    %v814 = vld [vmem:[%s1 + $0x1698] sm:$0xff]
    %v815 = vld [vmem:[%s1 + $0x16a0] sm:$0xff]
    %v816 = vld [vmem:[%s1 + $0x16a8] sm:$0xff]
    %v817 = vld [vmem:[%s1 + $0x16b0] sm:$0xff]
    %v818 = vld [vmem:[%s1 + $0x16b8] sm:$0xff]
    %v819 = vld [vmem:[%s1 + $0x16c0] sm:$0xff]
    %v820 = vld [vmem:[%s1 + $0x16c8] sm:$0xff]
    %v821 = vld [vmem:[%s1 + $0x16d0] sm:$0xff]
    %v822 = vld [vmem:[%s1 + $0x16d8] sm:$0xff]
    %v823 = vld [vmem:[%s1 + $0x16e0] sm:$0xff]
    %v824 = vld [vmem:[%s1 + $0x16e8] sm:$0xff]
    %v825 = vld [vmem:[%s1 + $0x16f0] sm:$0xff]
    %v826 = vld [vmem:[%s1 + $0x16f8] sm:$0xff]
    %v827 = vld [vmem:[%s1 + $0x1700] sm:$0xff]
    %v828 = vld [vmem:[%s1 + $0x1708] sm:$0xff]
    %v829 = vld [vmem:[%s1 + $0x1710] sm:$0xff]
    %v830 = vld [vmem:[%s1 + $0x1718] sm:$0xff]
    %v831 = vld [vmem:[%s1 + $0x1720] sm:$0xff]
    %v832 = vld [vmem:[%s1 + $0x1728] sm:$0xff]
    %v833 = vld [vmem:[%s1 + $0x1730] sm:$0xff]
    %v834 = vld [vmem:[%s1 + $0x1738] sm:$0xff]
    %v835 = vld [vmem:[%s1 + $0x1740] sm:$0xff]
    %v836 = vld [vmem:[%s1 + $0x1748] sm:$0xff]
    %v837 = vld [vmem:[%s1 + $0x1750] sm:$0xff]
    %v838 = vld [vmem:[%s1 + $0x1758] sm:$0xff]
    %v839 = vld [vmem:[%s1 + $0x1760] sm:$0xff]
    %v840 = vld [vmem:[%s1 + $0x1768] sm:$0xff]
    %v841 = vld [vmem:[%s1 + $0x1770] sm:$0xff]
    %v842 = vld [vmem:[%s1 + $0x1778] sm:$0xff]
    %v843 = vld [vmem:[%s1 + $0x1780] sm:$0xff]
    %v844 = vld [vmem:[%s1 + $0x1788] sm:$0xff]
    %v845 = vld [vmem:[%s1 + $0x1790] sm:$0xff]
    %v846 = vld [vmem:[%s1 + $0x1798] sm:$0xff]
    %v847 = vld [vmem:[%s1 + $0x17a0] sm:$0xff]
    %v848 = vld [vmem:[%s1 + $0x17a8] sm:$0xff]
    %v849 = vld [vmem:[%s1 + $0x17b0] sm:$0xff]
    %v850 = vld [vmem:[%s1 + $0x17b8] sm:$0xff]
    %v851 = vld [vmem:[%s1 + $0x17c0] sm:$0xff]
    %v852 = vld [vmem:[%s1 + $0x17c8] sm:$0xff]
    %v853 = vld [vmem:[%s1 + $0x17d0] sm:$0xff]
    %v854 = vld [vmem:[%s1 + $0x17d8] sm:$0xff]
    %v855 = vld [vmem:[%s1 + $0x17e0] sm:$0xff]
    %v856 = vld [vmem:[%s1 + $0x17e8] sm:$0xff]
    %v857 = vld [vmem:[%s1 + $0x17f0] sm:$0xff]
    %v858 = vld [vmem:[%s1 + $0x17f8] sm:$0xff]
    %v859 = vld [vmem:[%s1 + $0x1800] sm:$0xff]
    %v860 = vld [vmem:[%s1 + $0x1808] sm:$0xff]
    %v861 = vld [vmem:[%s1 + $0x1810] sm:$0xff]
    %v862 = vld [vmem:[%s1 + $0x1818] sm:$0xff]
    %v863 = vld [vmem:[%s1 + $0x1820] sm:$0xff]
    %v864 = vld [vmem:[%s1 + $0x1828] sm:$0xff]
    %v865 = vld [vmem:[%s1 + $0x1830] sm:$0xff]
    %v866 = vld [vmem:[%s1 + $0x1838] sm:$0xff]
    %v867 = vld [vmem:[%s1 + $0x1840] sm:$0xff]
    %v868 = vld [vmem:[%s1 + $0x1848] sm:$0xff]
    %v869 = vld [vmem:[%s1 + $0x1850] sm:$0xff]
    %v870 = vld [vmem:[%s1 + $0x1858] sm:$0xff]
    %v871 = vld [vmem:[%s1 + $0x1860] sm:$0xff]
    %v872 = vld [vmem:[%s1 + $0x1868] sm:$0xff]
    %v873 = vld [vmem:[%s1 + $0x1870] sm:$0xff]
    %v874 = vld [vmem:[%s1 + $0x1878] sm:$0xff]
    %v875 = vld [vmem:[%s1 + $0x1880] sm:$0xff]
    %v876 = vld [vmem:[%s1 + $0x1888] sm:$0xff]
    %v877 = vld [vmem:[%s1 + $0x1890] sm:$0xff]
    %v878 = vld [vmem:[%s1 + $0x1898] sm:$0xff]
    %v879 = vld [vmem:[%s1 + $0x18a0] sm:$0xff]
    %v880 = vld [vmem:[%s1 + $0x18a8] sm:$0xff]
    %v881 = vld [vmem:[%s1 + $0x18b0] sm:$0xff]
    %v882 = vld [vmem:[%s1 + $0x18b8] sm:$0xff]
    %v883 = vld [vmem:[%s1 + $0x18c0] sm:$0xff]
    %v884 = vld [vmem:[%s1 + $0x18c8] sm:$0xff]
    %v885 = vld [vmem:[%s1 + $0x18d0] sm:$0xff]
    %v886 = vld [vmem:[%s1 + $0x18d8] sm:$0xff]
    %v887 = vld [vmem:[%s1 + $0x18e0] sm:$0xff]
    %v888 = vld [vmem:[%s1 + $0x18e8] sm:$0xff]
    %v889 = vld [vmem:[%s1 + $0x18f0] sm:$0xff]
    %v890 = vld [vmem:[%s1 + $0x18f8] sm:$0xff]
    %v891 = vld [vmem:[%s1 + $0x1900] sm:$0xff]
    %v892 = vld [vmem:[%s1 + $0x1908] sm:$0xff]
    %v893 = vld [vmem:[%s1 + $0x1910] sm:$0xff]
    %v894 = vld [vmem:[%s1 + $0x1918] sm:$0xff]
    %v895 = vld [vmem:[%s1 + $0x1920] sm:$0xff]
    %v896 = vld [vmem:[%s1 + $0x1928] sm:$0xff]
    %v897 = vld [vmem:[%s1 + $0x1930] sm:$0xff]
    %v898 = vld [vmem:[%s1 + $0x1938] sm:$0xff]
    %v899 = vld [vmem:[%s1 + $0x1940] sm:$0xff]
    %v900 = vld [vmem:[%s1 + $0x1948] sm:$0xff]
    %v901 = vld [vmem:[%s1 + $0x1950] sm:$0xff]
    %v902 = vld [vmem:[%s1 + $0x1958] sm:$0xff]
    %v903 = vld [vmem:[%s1 + $0x1960] sm:$0xff]
    %v904 = vld [vmem:[%s1 + $0x1968] sm:$0xff]
    %v905 = vld [vmem:[%s1 + $0x1970] sm:$0xff]
    %v906 = vld [vmem:[%s1 + $0x1978] sm:$0xff]
    %v907 = vld [vmem:[%s1 + $0x1980] sm:$0xff]
    %v908 = vld [vmem:[%s1 + $0x1988] sm:$0xff]
    %v909 = vld [vmem:[%s1 + $0x1990] sm:$0xff]
    %v910 = vld [vmem:[%s1 + $0x1998] sm:$0xff]
    %v911 = vld [vmem:[%s1 + $0x19a0] sm:$0xff]
    %v912 = vld [vmem:[%s1 + $0x19a8] sm:$0xff]
    %v913 = vld [vmem:[%s1 + $0x19b0] sm:$0xff]
    %v914 = vld [vmem:[%s1 + $0x19b8] sm:$0xff]
    %v915 = vld [vmem:[%s1 + $0x19c0] sm:$0xff]
    %v916 = vld [vmem:[%s1 + $0x19c8] sm:$0xff]
    %v917 = vld [vmem:[%s1 + $0x19d0] sm:$0xff]
    %v918 = vld [vmem:[%s1 + $0x19d8] sm:$0xff]
    %v919 = vld [vmem:[%s1 + $0x19e0] sm:$0xff]
    %v920 = vld [vmem:[%s1 + $0x19e8] sm:$0xff]
    %v921 = vld [vmem:[%s1 + $0x19f0] sm:$0xff]
    %v922 = vld [vmem:[%s1 + $0x19f8] sm:$0xff]
    %v923 = vld [vmem:[%s1 + $0x1a00] sm:$0xff]
    %v924 = vld [vmem:[%s1 + $0x1a08] sm:$0xff]
    %v925 = vld [vmem:[%s1 + $0x1a10] sm:$0xff]
    %v926 = vld [vmem:[%s1 + $0x1a18] sm:$0xff]
    %v927 = vld [vmem:[%s1 + $0x1a20] sm:$0xff]
    %v928 = vld [vmem:[%s1 + $0x1a28] sm:$0xff]
    %v929 = vld [vmem:[%s1 + $0x1a30] sm:$0xff]
    %v930 = vld [vmem:[%s1 + $0x1a38] sm:$0xff]
    %v931 = vld [vmem:[%s1 + $0x1a40] sm:$0xff]
    %v932 = vld [vmem:[%s1 + $0x1a48] sm:$0xff]
    %v933 = vld [vmem:[%s1 + $0x1a50] sm:$0xff]
    %v934 = vld [vmem:[%s1 + $0x1a58] sm:$0xff]
    %v935 = vld [vmem:[%s1 + $0x1a60] sm:$0xff]
    %v936 = vld [vmem:[%s1 + $0x1a68] sm:$0xff]
    %v937 = vld [vmem:[%s1 + $0x1a70] sm:$0xff]
    %v938 = vld [vmem:[%s1 + $0x1a78] sm:$0xff]
    %v939 = vld [vmem:[%s1 + $0x1a80] sm:$0xff]
    %v940 = vld [vmem:[%s1 + $0x1a88] sm:$0xff]
    %v941 = vld [vmem:[%s1 + $0x1a90] sm:$0xff]
    %v942 = vld [vmem:[%s1 + $0x1a98] sm:$0xff]
    %v943 = vld [vmem:[%s1 + $0x1aa0] sm:$0xff]
    %v944 = vld [vmem:[%s1 + $0x1aa8] sm:$0xff]
    %v945 = vld [vmem:[%s1 + $0x1ab0] sm:$0xff]
    %v946 = vld [vmem:[%s1 + $0x1ab8] sm:$0xff]
    %v947 = vld [vmem:[%s1 + $0x1ac0] sm:$0xff]
    %v948 = vld [vmem:[%s1 + $0x1ac8] sm:$0xff]
    %v949 = vld [vmem:[%s1 + $0x1ad0] sm:$0xff]
    %v950 = vld [vmem:[%s1 + $0x1ad8] sm:$0xff]
    %v951 = vld [vmem:[%s1 + $0x1ae0] sm:$0xff]
    %v952 = vld [vmem:[%s1 + $0x1ae8] sm:$0xff]
    %v953 = vld [vmem:[%s1 + $0x1af0] sm:$0xff]
    %v954 = vld [vmem:[%s1 + $0x1af8] sm:$0xff]
    %v955 = vld [vmem:[%s1 + $0x1b00] sm:$0xff]
    %v956 = vld [vmem:[%s1 + $0x1b08] sm:$0xff]
    %v957 = vld [vmem:[%s1 + $0x1b10] sm:$0xff]
    %v958 = vld [vmem:[%s1 + $0x1b18] sm:$0xff]
    %v959 = vld [vmem:[%s1 + $0x1b20] sm:$0xff]
    %v960 = vld [vmem:[%s1 + $0x1b28] sm:$0xff]
    %v961 = vld [vmem:[%s1 + $0x1b30] sm:$0xff]
    %v962 = vld [vmem:[%s1 + $0x1b38] sm:$0xff]
    %v963 = vld [vmem:[%s1 + $0x1b40] sm:$0xff]
    %v964 = vld [vmem:[%s1 + $0x1b48] sm:$0xff]
    %v965 = vld [vmem:[%s1 + $0x1b50] sm:$0xff]
    %v966 = vld [vmem:[%s1 + $0x1b58] sm:$0xff]
    %v967 = vld [vmem:[%s1 + $0x1b60] sm:$0xff]
    %v968 = vld [vmem:[%s1 + $0x1b68] sm:$0xff]
    %v969 = vld [vmem:[%s1 + $0x1b70] sm:$0xff]
    %v970 = vld [vmem:[%s1 + $0x1b78] sm:$0xff]
    %v971 = vld [vmem:[%s1 + $0x1b80] sm:$0xff]
    %v972 = vld [vmem:[%s1 + $0x1b88] sm:$0xff]
    %v973 = vld [vmem:[%s1 + $0x1b90] sm:$0xff]
    %v974 = vld [vmem:[%s1 + $0x1b98] sm:$0xff]
    %v975 = vld [vmem:[%s1 + $0x1ba0] sm:$0xff]
    %v976 = vld [vmem:[%s1 + $0x1ba8] sm:$0xff]
    %v977 = vld [vmem:[%s1 + $0x1bb0] sm:$0xff]
    %v978 = vld [vmem:[%s1 + $0x1bb8] sm:$0xff]
    %v979 = vld [vmem:[%s1 + $0x1bc0] sm:$0xff]
    %v980 = vld [vmem:[%s1 + $0x1bc8] sm:$0xff]
    %v981 = vld [vmem:[%s1 + $0x1bd0] sm:$0xff]
    %v982 = vld [vmem:[%s1 + $0x1bd8] sm:$0xff]
    %v983 = vld [vmem:[%s1 + $0x1be0] sm:$0xff]
    %v984 = vld [vmem:[%s1 + $0x1be8] sm:$0xff]
    %v985 = vld [vmem:[%s1 + $0x1bf0] sm:$0xff]
    %v986 = vld [vmem:[%s1 + $0x1bf8] sm:$0xff]
    %v987 = vld [vmem:[%s1 + $0x1c00] sm:$0xff]
    %v988 = vld [vmem:[%s1 + $0x1c08] sm:$0xff]
    %v989 = vld [vmem:[%s1 + $0x1c10] sm:$0xff]
    %v990 = vld [vmem:[%s1 + $0x1c18] sm:$0xff]
    %v991 = vld [vmem:[%s1 + $0x1c20] sm:$0xff]
    %v992 = vld [vmem:[%s1 + $0x1c28] sm:$0xff]
    %v993 = vld [vmem:[%s1 + $0x1c30] sm:$0xff]
    %v994 = vld [vmem:[%s1 + $0x1c38] sm:$0xff]
    %v995 = vld [vmem:[%s1 + $0x1c40] sm:$0xff]
    %v996 = vld [vmem:[%s1 + $0x1c48] sm:$0xff]
    %v997 = vld [vmem:[%s1 + $0x1c50] sm:$0xff]
    %v998 = vld [vmem:[%s1 + $0x1c58] sm:$0xff]
    %v999 = vld [vmem:[%s1 + $0x1c60] sm:$0xff]
    %v1000 = vld [vmem:[%s1 + $0x1c68] sm:$0xff]
    %v1001 = vld [vmem:[%s1 + $0x1c70] sm:$0xff]
    %v1002 = vld [vmem:[%s1 + $0x1c78] sm:$0xff]
    %v1003 = vld [vmem:[%s1 + $0x1c80] sm:$0xff]
    %v1004 = vld [vmem:[%s1 + $0x1c88] sm:$0xff]
    %v1005 = vld [vmem:[%s1 + $0x1c90] sm:$0xff]
    %v1006 = vld [vmem:[%s1 + $0x1c98] sm:$0xff]
    %v1007 = vld [vmem:[%s1 + $0x1ca0] sm:$0xff]
    %v1008 = vld [vmem:[%s1 + $0x1ca8] sm:$0xff]
    %v1009 = vld [vmem:[%s1 + $0x1cb0] sm:$0xff]
    %v1010 = vld [vmem:[%s1 + $0x1cb8] sm:$0xff]
    %v1011 = vld [vmem:[%s1 + $0x1cc0] sm:$0xff]
    %v1012 = vld [vmem:[%s1 + $0x1cc8] sm:$0xff]
    %v1013 = vld [vmem:[%s1 + $0x1cd0] sm:$0xff]
    %v1014 = vld [vmem:[%s1 + $0x1cd8] sm:$0xff]
    %v1015 = vld [vmem:[%s1 + $0x1ce0] sm:$0xff]
    %v1016 = vld [vmem:[%s1 + $0x1ce8] sm:$0xff]
    %v1017 = vld [vmem:[%s1 + $0x1cf0] sm:$0xff]
    %v1018 = vld [vmem:[%s1 + $0x1cf8] sm:$0xff]
    %v1019 = vld [vmem:[%s1 + $0x1d00] sm:$0xff]
    %v1020 = vld [vmem:[%s1 + $0x1d08] sm:$0xff]
    %v1021 = vld [vmem:[%s1 + $0x1d10] sm:$0xff]
    %v1022 = vld [vmem:[%s1 + $0x1d18] sm:$0xff]
    %v1023 = vld [vmem:[%s1 + $0x1d20] sm:$0xff]
    %v1024 = vld [vmem:[%s1 + $0x1d28] sm:$0xff]
    %v1025 = vld [vmem:[%s1 + $0x1d30] sm:$0xff]
    %v1026 = vld [vmem:[%s1 + $0x1d38] sm:$0xff]
    %v1027 = vld [vmem:[%s1 + $0x1d40] sm:$0xff]
    %v1028 = vld [vmem:[%s1 + $0x1d48] sm:$0xff]
    %v1029 = vld [vmem:[%s1 + $0x1d50] sm:$0xff]
    %v1030 = vld [vmem:[%s1 + $0x1d58] sm:$0xff]
    %v1031 = vld [vmem:[%s1 + $0x1d60] sm:$0xff]
    %v1032 = vld [vmem:[%s1 + $0x1d68] sm:$0xff]
    %v1033 = vld [vmem:[%s1 + $0x1d70] sm:$0xff]
    %v1034 = vld [vmem:[%s1 + $0x1d78] sm:$0xff]
    %v1035 = vld [vmem:[%s1 + $0x1d80] sm:$0xff]
    %v1036 = vld [vmem:[%s1 + $0x1d88] sm:$0xff]
    %v1037 = vld [vmem:[%s1 + $0x1d90] sm:$0xff]
    %v1038 = vld [vmem:[%s1 + $0x1d98] sm:$0xff]
    %v1039 = vld [vmem:[%s1 + $0x1da0] sm:$0xff]
    %v1040 = vld [vmem:[%s1 + $0x1da8] sm:$0xff]
    %v1041 = vld [vmem:[%s1 + $0x1db0] sm:$0xff]
    %v1042 = vld [vmem:[%s1 + $0x1db8] sm:$0xff]
    %v1043 = vld [vmem:[%s1 + $0x1dc0] sm:$0xff]
    %v1044 = vld [vmem:[%s1 + $0x1dc8] sm:$0xff]
    %v1045 = vld [vmem:[%s1 + $0x1dd0] sm:$0xff]
    %v1046 = vld [vmem:[%s1 + $0x1dd8] sm:$0xff]
    %v1047 = vld [vmem:[%s1 + $0x1de0] sm:$0xff]
    %v1048 = vld [vmem:[%s1 + $0x1de8] sm:$0xff]
    %v1049 = vld [vmem:[%s1 + $0x1df0] sm:$0xff]
    %v1050 = vld [vmem:[%s1 + $0x1df8] sm:$0xff]
    %v1051 = vld [vmem:[%s1 + $0x1e00] sm:$0xff]
    %v1052 = vld [vmem:[%s1 + $0x1e08] sm:$0xff]
    %v1053 = vld [vmem:[%s1 + $0x1e10] sm:$0xff]
    %v1054 = vld [vmem:[%s1 + $0x1e18] sm:$0xff]
    %v1055 = vld [vmem:[%s1 + $0x1e20] sm:$0xff]
    %v1056 = vld [vmem:[%s1 + $0x1e28] sm:$0xff]
    %v1057 = vld [vmem:[%s1 + $0x1e30] sm:$0xff]
    %v1058 = vld [vmem:[%s1 + $0x1e38] sm:$0xff]
    %v1059 = vld [vmem:[%s1 + $0x1e40] sm:$0xff]
    %v1060 = vld [vmem:[%s1 + $0x1e48] sm:$0xff]
    %v1061 = vld [vmem:[%s1 + $0x1e50] sm:$0xff]
    %v1062 = vld [vmem:[%s1 + $0x1e58] sm:$0xff]
    %v1063 = vld [vmem:[%s1 + $0x1e60] sm:$0xff]
    %v1064 = vld [vmem:[%s1 + $0x1e68] sm:$0xff]
    %v1065 = vld [vmem:[%s1 + $0x1e70] sm:$0xff]
    %v1066 = vld [vmem:[%s1 + $0x1e78] sm:$0xff]
    %v1067 = vld [vmem:[%s1 + $0x1e80] sm:$0xff]
    %v1068 = vld [vmem:[%s1 + $0x1e88] sm:$0xff]
    %v1069 = vld [vmem:[%s1 + $0x1e90] sm:$0xff]
    %v1070 = vld [vmem:[%s1 + $0x1e98] sm:$0xff]
    %v1071 = vld [vmem:[%s1 + $0x1ea0] sm:$0xff]
    %v1072 = vld [vmem:[%s1 + $0x1ea8] sm:$0xff]
    %v1073 = vld [vmem:[%s1 + $0x1eb0] sm:$0xff]
    %v1074 = vld [vmem:[%s1 + $0x1eb8] sm:$0xff]
    %v1075 = vld [vmem:[%s1 + $0x1ec0] sm:$0xff]
    %v1076 = vld [vmem:[%s1 + $0x1ec8] sm:$0xff]
    %v1077 = vld [vmem:[%s1 + $0x1ed0] sm:$0xff]
    %v1078 = vld [vmem:[%s1 + $0x1ed8] sm:$0xff]
    %v1079 = vld [vmem:[%s1 + $0x1ee0] sm:$0xff]
    %v1080 = vld [vmem:[%s1 + $0x1ee8] sm:$0xff]
    %v1081 = vld [vmem:[%s1 + $0x1ef0] sm:$0xff]
    %v1082 = vld [vmem:[%s1 + $0x1ef8] sm:$0xff]
    %v1083 = vld [vmem:[%s1 + $0x1f00] sm:$0xff]
    %v1084 = vld [vmem:[%s1 + $0x1f08] sm:$0xff]
    %v1085 = vld [vmem:[%s1 + $0x1f10] sm:$0xff]
    %v1086 = vld [vmem:[%s1 + $0x1f18] sm:$0xff]
    %v1087 = vld [vmem:[%s1 + $0x1f20] sm:$0xff]
    %v1088 = vld [vmem:[%s1 + $0x1f28] sm:$0xff]
    %v1089 = vld [vmem:[%s1 + $0x1f30] sm:$0xff]
    %v1090 = vld [vmem:[%s1 + $0x1f38] sm:$0xff]
    %v1091 = vld [vmem:[%s1 + $0x1f40] sm:$0xff]
    %v1092 = vld [vmem:[%s1 + $0x1f48] sm:$0xff]
    %v1093 = vld [vmem:[%s1 + $0x1f50] sm:$0xff]
    %v1094 = vld [vmem:[%s1 + $0x1f58] sm:$0xff]
    %v1095 = vld [vmem:[%s1 + $0x1f60] sm:$0xff]
    %v1096 = vld [vmem:[%s1 + $0x1f68] sm:$0xff]
    %v1097 = vld [vmem:[%s1 + $0x1f70] sm:$0xff]
    %v1098 = vld [vmem:[%s1 + $0x1f78] sm:$0xff]
    %v1099 = vld [vmem:[%s1 + $0x1f80] sm:$0xff]
    %v1100 = vld [vmem:[%s1 + $0x1f88] sm:$0xff]
    %v1101 = vld [vmem:[%s1 + $0x1f90] sm:$0xff]
    %v1102 = vld [vmem:[%s1 + $0x1f98] sm:$0xff]
    %v1103 = vld [vmem:[%s1 + $0x1fa0] sm:$0xff]
    %v1104 = vld [vmem:[%s1 + $0x1fa8] sm:$0xff]
    %v1105 = vld [vmem:[%s1 + $0x1fb0] sm:$0xff]
    %v1106 = vld [vmem:[%s1 + $0x1fb8] sm:$0xff]
    %v1107 = vld [vmem:[%s1 + $0x1fc0] sm:$0xff]
    %v1108 = vld [vmem:[%s1 + $0x1fc8] sm:$0xff]
    %v1109 = vld [vmem:[%s1 + $0x1fd0] sm:$0xff]
    %v1110 = vld [vmem:[%s1 + $0x1fd8] sm:$0xff]
    %v1111 = vld [vmem:[%s1 + $0x1fe0] sm:$0xff]
    %v1112 = vld [vmem:[%s1 + $0x1fe8] sm:$0xff]
    %v1113 = vld [vmem:[%s1 + $0x1ff0] sm:$0xff]
    %v1114 = vld [vmem:[%s1 + $0x1ff8] sm:$0xff]
    %v1115 = vld [vmem:[%s2] sm:$0x1]
    %v1117 = vlaneseq
    %v1118 = vshrl.u32 %v1117, 7
    %v1119 = vsub.s32 0, %v1118
    %v1120 = vrot.slane %v1115, %v1119
    %1122 = vmatprep.subr.mxu0 0.0
    %1123 = vmatpush1.msra.mxu0 %v91
    %1124 = vmatprep.subr.mxu0 0.0
    %1125 = vmatpush1.msra.mxu0 %v92
    %1126 = vmatprep.subr.mxu0 0.0
    %1127 = vmatpush1.msra.mxu0 %v93
    %1128 = vmatprep.subr.mxu0 0.0
    %1129 = vmatpush1.msra.mxu0 %v94
    %1130 = vmatprep.subr.mxu0 0.0
    %1131 = vmatpush1.msra.mxu0 %v95
    %1132 = vmatprep.subr.mxu0 0.0
    %1133 = vmatpush1.msra.mxu0 %v96
    %1134 = vmatprep.subr.mxu0 0.0
    %1135 = vmatpush1.msra.mxu0 %v97
    %1136 = vmatprep.subr.mxu0 0.0
    %1137 = vmatpush1.msra.mxu0 %v98
    %1138 = vmatprep.subr.mxu0 0.0
    %1139 = vmatpush1.msra.mxu0 %v99
    %1140 = vmatprep.subr.mxu0 0.0
    %1141 = vmatpush1.msra.mxu0 %v100
    %1142 = vmatprep.subr.mxu0 0.0
    %1143 = vmatpush1.msra.mxu0 %v101
    %1144 = vmatprep.subr.mxu0 0.0
    %1145 = vmatpush1.msra.mxu0 %v102
    %1146 = vmatprep.subr.mxu0 0.0
    %1147 = vmatpush1.msra.mxu0 %v103
    %1148 = vmatprep.subr.mxu0 0.0
    %1149 = vmatpush1.msra.mxu0 %v104
    %1150 = vmatprep.subr.mxu0 0.0
    %1151 = vmatpush1.msra.mxu0 %v105
    %1152 = vmatprep.subr.mxu0 0.0
    %1153 = vmatpush1.msra.mxu0 %v106
    %1154 = vmatprep.subr.mxu0 0.0
    %1155 = vmatpush1.msra.mxu0 %v107
    %1156 = vmatprep.subr.mxu0 0.0
    %1157 = vmatpush1.msra.mxu0 %v108
    %1158 = vmatprep.subr.mxu0 0.0
    %1159 = vmatpush1.msra.mxu0 %v109
    %1160 = vmatprep.subr.mxu0 0.0
    %1161 = vmatpush1.msra.mxu0 %v110
    %1162 = vmatprep.subr.mxu0 0.0
    %1163 = vmatpush1.msra.mxu0 %v111
    %1164 = vmatprep.subr.mxu0 0.0
    %1165 = vmatpush1.msra.mxu0 %v112
    %1166 = vmatprep.subr.mxu0 0.0
    %1167 = vmatpush1.msra.mxu0 %v113
    %1168 = vmatprep.subr.mxu0 0.0
    %1169 = vmatpush1.msra.mxu0 %v114
    %1170 = vmatprep.subr.mxu0 0.0
    %1171 = vmatpush1.msra.mxu0 %v115
    %1172 = vmatprep.subr.mxu0 0.0
    %1173 = vmatpush1.msra.mxu0 %v116
    %1174 = vmatprep.subr.mxu0 0.0
    %1175 = vmatpush1.msra.mxu0 %v117
    %1176 = vmatprep.subr.mxu0 0.0
    %1177 = vmatpush1.msra.mxu0 %v118
    %1178 = vmatprep.subr.mxu0 0.0
    %1179 = vmatpush1.msra.mxu0 %v119
    %1180 = vmatprep.subr.mxu0 0.0
    %1181 = vmatpush1.msra.mxu0 %v120
    %1182 = vmatprep.subr.mxu0 0.0
    %1183 = vmatpush1.msra.mxu0 %v121
    %1184 = vmatprep.subr.mxu0 0.0
    %1185 = vmatpush1.msra.mxu0 %v122
    %1186 = vmatprep.mubr.f32.mxu0 %v28
    %1187 = vmatmul.mubr.f32.gmra.mrb[0].mxu0 %v27
    %v1188 = vpop.f32.mrb[0].mxu0
    %v1189 = vadd.f32 %v1120, %v1188
    %v1190 = vpop.f32.mrb[0].mxu0
    %1191 = vdwg.mxu0
    %1192 = vmatprep.subr.mxu0 0.0
    %1193 = vmatpush1.msra.mxu0 %v123
    %1194 = vmatprep.subr.mxu0 0.0
    %1195 = vmatpush1.msra.mxu0 %v124
    %1196 = vmatprep.subr.mxu0 0.0
    %1197 = vmatpush1.msra.mxu0 %v125
    %1198 = vmatprep.subr.mxu0 0.0
    %1199 = vmatpush1.msra.mxu0 %v126
    %1200 = vmatprep.subr.mxu0 0.0
    %1201 = vmatpush1.msra.mxu0 %v127
    %1202 = vmatprep.subr.mxu0 0.0
    %1203 = vmatpush1.msra.mxu0 %v128
    %1204 = vmatprep.subr.mxu0 0.0
    %1205 = vmatpush1.msra.mxu0 %v129
    %1206 = vmatprep.subr.mxu0 0.0
    %1207 = vmatpush1.msra.mxu0 %v130
    %1208 = vmatprep.subr.mxu0 0.0
    %1209 = vmatpush1.msra.mxu0 %v131
    %1210 = vmatprep.subr.mxu0 0.0
    %1211 = vmatpush1.msra.mxu0 %v132
    %1212 = vmatprep.subr.mxu0 0.0
    %1213 = vmatpush1.msra.mxu0 %v133
    %1214 = vmatprep.subr.mxu0 0.0
    %1215 = vmatpush1.msra.mxu0 %v134
    %1216 = vmatprep.subr.mxu0 0.0
    %1217 = vmatpush1.msra.mxu0 %v135
    %1218 = vmatprep.subr.mxu0 0.0
    %1219 = vmatpush1.msra.mxu0 %v136
    %1220 = vmatprep.subr.mxu0 0.0
    %1221 = vmatpush1.msra.mxu0 %v137
    %1222 = vmatprep.subr.mxu0 0.0
    %1223 = vmatpush1.msra.mxu0 %v138
    %1224 = vmatprep.subr.mxu0 0.0
    %1225 = vmatpush1.msra.mxu0 %v139
    %1226 = vmatprep.subr.mxu0 0.0
    %1227 = vmatpush1.msra.mxu0 %v140
    %1228 = vmatprep.subr.mxu0 0.0
    %1229 = vmatpush1.msra.mxu0 %v141
    %1230 = vmatprep.subr.mxu0 0.0
    %1231 = vmatpush1.msra.mxu0 %v142
    %1232 = vmatprep.subr.mxu0 0.0
    %1233 = vmatpush1.msra.mxu0 %v143
    %1234 = vmatprep.subr.mxu0 0.0
    %1235 = vmatpush1.msra.mxu0 %v144
    %1236 = vmatprep.subr.mxu0 0.0
    %1237 = vmatpush1.msra.mxu0 %v145
    %1238 = vmatprep.subr.mxu0 0.0
    %1239 = vmatpush1.msra.mxu0 %v146
    %1240 = vmatprep.subr.mxu0 0.0
    %1241 = vmatpush1.msra.mxu0 %v147
    %1242 = vmatprep.subr.mxu0 0.0
    %1243 = vmatpush1.msra.mxu0 %v148
    %1244 = vmatprep.subr.mxu0 0.0
    %1245 = vmatpush1.msra.mxu0 %v149
    %1246 = vmatprep.subr.mxu0 0.0
    %1247 = vmatpush1.msra.mxu0 %v150
    %1248 = vmatprep.subr.mxu0 0.0
    %1249 = vmatpush1.msra.mxu0 %v151
    %1250 = vmatprep.subr.mxu0 0.0
    %1251 = vmatpush1.msra.mxu0 %v152
    %1252 = vmatprep.subr.mxu0 0.0
    %1253 = vmatpush1.msra.mxu0 %v153
    %1254 = vmatprep.subr.mxu0 0.0
    %1255 = vmatpush1.msra.mxu0 %v154
    %1256 = vmatprep.mubr.f32.mxu0 %v30
    %1257 = vmatmul.mubr.f32.gmra.mrb[0].mxu0 %v29
    %v1258 = vpop.f32.mrb[0].mxu0
    %v1259 = vadd.f32 %v1189, %v1258
    %v1260 = vpop.f32.mrb[0].mxu0
    %1261 = vdwg.mxu0
    %1262 = vmatprep.subr.mxu0 0.0
    %1263 = vmatpush1.msra.mxu0 %v155
    %1264 = vmatprep.subr.mxu0 0.0
    %1265 = vmatpush1.msra.mxu0 %v156
    %1266 = vmatprep.subr.mxu0 0.0
    %1267 = vmatpush1.msra.mxu0 %v157
    %1268 = vmatprep.subr.mxu0 0.0
    %1269 = vmatpush1.msra.mxu0 %v158
    %1270 = vmatprep.subr.mxu0 0.0
    %1271 = vmatpush1.msra.mxu0 %v159
    %1272 = vmatprep.subr.mxu0 0.0
    %1273 = vmatpush1.msra.mxu0 %v160
    %1274 = vmatprep.subr.mxu0 0.0
    %1275 = vmatpush1.msra.mxu0 %v161
    %1276 = vmatprep.subr.mxu0 0.0
    %1277 = vmatpush1.msra.mxu0 %v162
    %1278 = vmatprep.subr.mxu0 0.0
    %1279 = vmatpush1.msra.mxu0 %v163
    %1280 = vmatprep.subr.mxu0 0.0
    %1281 = vmatpush1.msra.mxu0 %v164
    %1282 = vmatprep.subr.mxu0 0.0
    %1283 = vmatpush1.msra.mxu0 %v165
    %1284 = vmatprep.subr.mxu0 0.0
    %1285 = vmatpush1.msra.mxu0 %v166
    %1286 = vmatprep.subr.mxu0 0.0
    %1287 = vmatpush1.msra.mxu0 %v167
    %1288 = vmatprep.subr.mxu0 0.0
    %1289 = vmatpush1.msra.mxu0 %v168
    %1290 = vmatprep.subr.mxu0 0.0
    %1291 = vmatpush1.msra.mxu0 %v169
    %1292 = vmatprep.subr.mxu0 0.0
    %1293 = vmatpush1.msra.mxu0 %v170
    %1294 = vmatprep.subr.mxu0 0.0
    %1295 = vmatpush1.msra.mxu0 %v171
    %1296 = vmatprep.subr.mxu0 0.0
    %1297 = vmatpush1.msra.mxu0 %v172
    %1298 = vmatprep.subr.mxu0 0.0
    %1299 = vmatpush1.msra.mxu0 %v173
    %1300 = vmatprep.subr.mxu0 0.0
    %1301 = vmatpush1.msra.mxu0 %v174
    %1302 = vmatprep.subr.mxu0 0.0
    %1303 = vmatpush1.msra.mxu0 %v175
    %1304 = vmatprep.subr.mxu0 0.0
    %1305 = vmatpush1.msra.mxu0 %v176
    %1306 = vmatprep.subr.mxu0 0.0
    %1307 = vmatpush1.msra.mxu0 %v177
    %1308 = vmatprep.subr.mxu0 0.0
    %1309 = vmatpush1.msra.mxu0 %v178
    %1310 = vmatprep.subr.mxu0 0.0
    %1311 = vmatpush1.msra.mxu0 %v179
    %1312 = vmatprep.subr.mxu0 0.0
    %1313 = vmatpush1.msra.mxu0 %v180
    %1314 = vmatprep.subr.mxu0 0.0
    %1315 = vmatpush1.msra.mxu0 %v181
    %1316 = vmatprep.subr.mxu0 0.0
    %1317 = vmatpush1.msra.mxu0 %v182
    %1318 = vmatprep.subr.mxu0 0.0
    %1319 = vmatpush1.msra.mxu0 %v183
    %1320 = vmatprep.subr.mxu0 0.0
    %1321 = vmatpush1.msra.mxu0 %v184
    %1322 = vmatprep.subr.mxu0 0.0
    %1323 = vmatpush1.msra.mxu0 %v185
    %1324 = vmatprep.subr.mxu0 0.0
    %1325 = vmatpush1.msra.mxu0 %v186
    %1326 = vmatprep.mubr.f32.mxu0 %v32
    %1327 = vmatmul.mubr.f32.gmra.mrb[0].mxu0 %v31
    %v1328 = vpop.f32.mrb[0].mxu0
    %v1329 = vadd.f32 %v1259, %v1328
    %v1330 = vpop.f32.mrb[0].mxu0
    %1331 = vdwg.mxu0
    %1332 = vmatprep.subr.mxu0 0.0
    %1333 = vmatpush1.msra.mxu0 %v187
    %1334 = vmatprep.subr.mxu0 0.0
    %1335 = vmatpush1.msra.mxu0 %v188
    %1336 = vmatprep.subr.mxu0 0.0
    %1337 = vmatpush1.msra.mxu0 %v189
    %1338 = vmatprep.subr.mxu0 0.0
    %1339 = vmatpush1.msra.mxu0 %v190
    %1340 = vmatprep.subr.mxu0 0.0
    %1341 = vmatpush1.msra.mxu0 %v191
    %1342 = vmatprep.subr.mxu0 0.0
    %1343 = vmatpush1.msra.mxu0 %v192
    %1344 = vmatprep.subr.mxu0 0.0
    %1345 = vmatpush1.msra.mxu0 %v193
    %1346 = vmatprep.subr.mxu0 0.0
    %1347 = vmatpush1.msra.mxu0 %v194
    %1348 = vmatprep.subr.mxu0 0.0
    %1349 = vmatpush1.msra.mxu0 %v195
    %1350 = vmatprep.subr.mxu0 0.0
    %1351 = vmatpush1.msra.mxu0 %v196
    %1352 = vmatprep.subr.mxu0 0.0
    %1353 = vmatpush1.msra.mxu0 %v197
    %1354 = vmatprep.subr.mxu0 0.0
    %1355 = vmatpush1.msra.mxu0 %v198
    %1356 = vmatprep.subr.mxu0 0.0
    %1357 = vmatpush1.msra.mxu0 %v199
    %1358 = vmatprep.subr.mxu0 0.0
    %1359 = vmatpush1.msra.mxu0 %v200
    %1360 = vmatprep.subr.mxu0 0.0
    %1361 = vmatpush1.msra.mxu0 %v201
    %1362 = vmatprep.subr.mxu0 0.0
    %1363 = vmatpush1.msra.mxu0 %v202
    %1364 = vmatprep.subr.mxu0 0.0
    %1365 = vmatpush1.msra.mxu0 %v203
    %1366 = vmatprep.subr.mxu0 0.0
    %1367 = vmatpush1.msra.mxu0 %v204
    %1368 = vmatprep.subr.mxu0 0.0
    %1369 = vmatpush1.msra.mxu0 %v205
    %1370 = vmatprep.subr.mxu0 0.0
    %1371 = vmatpush1.msra.mxu0 %v206
    %1372 = vmatprep.subr.mxu0 0.0
    %1373 = vmatpush1.msra.mxu0 %v207
    %1374 = vmatprep.subr.mxu0 0.0
    %1375 = vmatpush1.msra.mxu0 %v208
    %1376 = vmatprep.subr.mxu0 0.0
    %1377 = vmatpush1.msra.mxu0 %v209
    %1378 = vmatprep.subr.mxu0 0.0
    %1379 = vmatpush1.msra.mxu0 %v210
    %1380 = vmatprep.subr.mxu0 0.0
    %1381 = vmatpush1.msra.mxu0 %v211
    %1382 = vmatprep.subr.mxu0 0.0
    %1383 = vmatpush1.msra.mxu0 %v212
    %1384 = vmatprep.subr.mxu0 0.0
    %1385 = vmatpush1.msra.mxu0 %v213
    %1386 = vmatprep.subr.mxu0 0.0
    %1387 = vmatpush1.msra.mxu0 %v214
    %1388 = vmatprep.subr.mxu0 0.0
    %1389 = vmatpush1.msra.mxu0 %v215
    %1390 = vmatprep.subr.mxu0 0.0
    %1391 = vmatpush1.msra.mxu0 %v216
    %1392 = vmatprep.subr.mxu0 0.0
    %1393 = vmatpush1.msra.mxu0 %v217
    %1394 = vmatprep.subr.mxu0 0.0
    %1395 = vmatpush1.msra.mxu0 %v218
    %1396 = vmatprep.mubr.f32.mxu0 %v34
    %1397 = vmatmul.mubr.f32.gmra.mrb[0].mxu0 %v33
    %v1398 = vpop.f32.mrb[0].mxu0
    %v1399 = vadd.f32 %v1329, %v1398
    %v1400 = vpop.f32.mrb[0].mxu0
    %1401 = vdwg.mxu0
    %1402 = vmatprep.subr.mxu0 0.0
    %1403 = vmatpush1.msra.mxu0 %v219
    %1404 = vmatprep.subr.mxu0 0.0
    %1405 = vmatpush1.msra.mxu0 %v220
    %1406 = vmatprep.subr.mxu0 0.0
    %1407 = vmatpush1.msra.mxu0 %v221
    %1408 = vmatprep.subr.mxu0 0.0
    %1409 = vmatpush1.msra.mxu0 %v222
    %1410 = vmatprep.subr.mxu0 0.0
    %1411 = vmatpush1.msra.mxu0 %v223
    %1412 = vmatprep.subr.mxu0 0.0
    %1413 = vmatpush1.msra.mxu0 %v224
    %1414 = vmatprep.subr.mxu0 0.0
    %1415 = vmatpush1.msra.mxu0 %v225
    %1416 = vmatprep.subr.mxu0 0.0
    %1417 = vmatpush1.msra.mxu0 %v226
    %1418 = vmatprep.subr.mxu0 0.0
    %1419 = vmatpush1.msra.mxu0 %v227
    %1420 = vmatprep.subr.mxu0 0.0
    %1421 = vmatpush1.msra.mxu0 %v228
    %1422 = vmatprep.subr.mxu0 0.0
    %1423 = vmatpush1.msra.mxu0 %v229
    %1424 = vmatprep.subr.mxu0 0.0
    %1425 = vmatpush1.msra.mxu0 %v230
    %1426 = vmatprep.subr.mxu0 0.0
    %1427 = vmatpush1.msra.mxu0 %v231
    %1428 = vmatprep.subr.mxu0 0.0
    %1429 = vmatpush1.msra.mxu0 %v232
    %1430 = vmatprep.subr.mxu0 0.0
    %1431 = vmatpush1.msra.mxu0 %v233
    %1432 = vmatprep.subr.mxu0 0.0
    %1433 = vmatpush1.msra.mxu0 %v234
    %1434 = vmatprep.subr.mxu0 0.0
    %1435 = vmatpush1.msra.mxu0 %v235
    %1436 = vmatprep.subr.mxu0 0.0
    %1437 = vmatpush1.msra.mxu0 %v236
    %1438 = vmatprep.subr.mxu0 0.0
    %1439 = vmatpush1.msra.mxu0 %v237
    %1440 = vmatprep.subr.mxu0 0.0
    %1441 = vmatpush1.msra.mxu0 %v238
    %1442 = vmatprep.subr.mxu0 0.0
    %1443 = vmatpush1.msra.mxu0 %v239
    %1444 = vmatprep.subr.mxu0 0.0
    %1445 = vmatpush1.msra.mxu0 %v240
    %1446 = vmatprep.subr.mxu0 0.0
    %1447 = vmatpush1.msra.mxu0 %v241
    %1448 = vmatprep.subr.mxu0 0.0
    %1449 = vmatpush1.msra.mxu0 %v242
    %1450 = vmatprep.subr.mxu0 0.0
    %1451 = vmatpush1.msra.mxu0 %v243
    %1452 = vmatprep.subr.mxu0 0.0
    %1453 = vmatpush1.msra.mxu0 %v244
    %1454 = vmatprep.subr.mxu0 0.0
    %1455 = vmatpush1.msra.mxu0 %v245
    %1456 = vmatprep.subr.mxu0 0.0
    %1457 = vmatpush1.msra.mxu0 %v246
    %1458 = vmatprep.subr.mxu0 0.0
    %1459 = vmatpush1.msra.mxu0 %v247
    %1460 = vmatprep.subr.mxu0 0.0
    %1461 = vmatpush1.msra.mxu0 %v248
    %1462 = vmatprep.subr.mxu0 0.0
    %1463 = vmatpush1.msra.mxu0 %v249
    %1464 = vmatprep.subr.mxu0 0.0
    %1465 = vmatpush1.msra.mxu0 %v250
    %1466 = vmatprep.mubr.f32.mxu0 %v36
    %1467 = vmatmul.mubr.f32.gmra.mrb[0].mxu0 %v35
    %v1468 = vpop.f32.mrb[0].mxu0
    %v1469 = vadd.f32 %v1399, %v1468
    %v1470 = vpop.f32.mrb[0].mxu0
    %1471 = vdwg.mxu0
    %1472 = vmatprep.subr.mxu0 0.0
    %1473 = vmatpush1.msra.mxu0 %v251
    %1474 = vmatprep.subr.mxu0 0.0
    %1475 = vmatpush1.msra.mxu0 %v252
    %1476 = vmatprep.subr.mxu0 0.0
    %1477 = vmatpush1.msra.mxu0 %v253
    %1478 = vmatprep.subr.mxu0 0.0
    %1479 = vmatpush1.msra.mxu0 %v254
    %1480 = vmatprep.subr.mxu0 0.0
    %1481 = vmatpush1.msra.mxu0 %v255
    %1482 = vmatprep.subr.mxu0 0.0
    %1483 = vmatpush1.msra.mxu0 %v256
    %1484 = vmatprep.subr.mxu0 0.0
    %1485 = vmatpush1.msra.mxu0 %v257
    %1486 = vmatprep.subr.mxu0 0.0
    %1487 = vmatpush1.msra.mxu0 %v258
    %1488 = vmatprep.subr.mxu0 0.0
    %1489 = vmatpush1.msra.mxu0 %v259
    %1490 = vmatprep.subr.mxu0 0.0
    %1491 = vmatpush1.msra.mxu0 %v260
    %1492 = vmatprep.subr.mxu0 0.0
    %1493 = vmatpush1.msra.mxu0 %v261
    %1494 = vmatprep.subr.mxu0 0.0
    %1495 = vmatpush1.msra.mxu0 %v262
    %1496 = vmatprep.subr.mxu0 0.0
    %1497 = vmatpush1.msra.mxu0 %v263
    %1498 = vmatprep.subr.mxu0 0.0
    %1499 = vmatpush1.msra.mxu0 %v264
    %1500 = vmatprep.subr.mxu0 0.0
    %1501 = vmatpush1.msra.mxu0 %v265
    %1502 = vmatprep.subr.mxu0 0.0
    %1503 = vmatpush1.msra.mxu0 %v266
    %1504 = vmatprep.subr.mxu0 0.0
    %1505 = vmatpush1.msra.mxu0 %v267
    %1506 = vmatprep.subr.mxu0 0.0
    %1507 = vmatpush1.msra.mxu0 %v268
    %1508 = vmatprep.subr.mxu0 0.0
    %1509 = vmatpush1.msra.mxu0 %v269
    %1510 = vmatprep.subr.mxu0 0.0
    %1511 = vmatpush1.msra.mxu0 %v270
    %1512 = vmatprep.subr.mxu0 0.0
    %1513 = vmatpush1.msra.mxu0 %v271
    %1514 = vmatprep.subr.mxu0 0.0
    %1515 = vmatpush1.msra.mxu0 %v272
    %1516 = vmatprep.subr.mxu0 0.0
    %1517 = vmatpush1.msra.mxu0 %v273
    %1518 = vmatprep.subr.mxu0 0.0
    %1519 = vmatpush1.msra.mxu0 %v274
    %1520 = vmatprep.subr.mxu0 0.0
    %1521 = vmatpush1.msra.mxu0 %v275
    %1522 = vmatprep.subr.mxu0 0.0
    %1523 = vmatpush1.msra.mxu0 %v276
    %1524 = vmatprep.subr.mxu0 0.0
    %1525 = vmatpush1.msra.mxu0 %v277
    %1526 = vmatprep.subr.mxu0 0.0
    %1527 = vmatpush1.msra.mxu0 %v278
    %1528 = vmatprep.subr.mxu0 0.0
    %1529 = vmatpush1.msra.mxu0 %v279
    %1530 = vmatprep.subr.mxu0 0.0
    %1531 = vmatpush1.msra.mxu0 %v280
    %1532 = vmatprep.subr.mxu0 0.0
    %1533 = vmatpush1.msra.mxu0 %v281
    %1534 = vmatprep.subr.mxu0 0.0
    %1535 = vmatpush1.msra.mxu0 %v282
    %1536 = vmatprep.mubr.f32.mxu0 %v38
    %1537 = vmatmul.mubr.f32.gmra.mrb[0].mxu0 %v37
    %v1538 = vpop.f32.mrb[0].mxu0
    %v1539 = vadd.f32 %v1469, %v1538
    %v1540 = vpop.f32.mrb[0].mxu0
    %1541 = vdwg.mxu0
    %1542 = vmatprep.subr.mxu0 0.0
    %1543 = vmatpush1.msra.mxu0 %v283
    %1544 = vmatprep.subr.mxu0 0.0
    %1545 = vmatpush1.msra.mxu0 %v284
    %1546 = vmatprep.subr.mxu0 0.0
    %1547 = vmatpush1.msra.mxu0 %v285
    %1548 = vmatprep.subr.mxu0 0.0
    %1549 = vmatpush1.msra.mxu0 %v286
    %1550 = vmatprep.subr.mxu0 0.0
    %1551 = vmatpush1.msra.mxu0 %v287
    %1552 = vmatprep.subr.mxu0 0.0
    %1553 = vmatpush1.msra.mxu0 %v288
    %1554 = vmatprep.subr.mxu0 0.0
    %1555 = vmatpush1.msra.mxu0 %v289
    %1556 = vmatprep.subr.mxu0 0.0
    %1557 = vmatpush1.msra.mxu0 %v290
    %1558 = vmatprep.subr.mxu0 0.0
    %1559 = vmatpush1.msra.mxu0 %v291
    %1560 = vmatprep.subr.mxu0 0.0
    %1561 = vmatpush1.msra.mxu0 %v292
    %1562 = vmatprep.subr.mxu0 0.0
    %1563 = vmatpush1.msra.mxu0 %v293
    %1564 = vmatprep.subr.mxu0 0.0
    %1565 = vmatpush1.msra.mxu0 %v294
    %1566 = vmatprep.subr.mxu0 0.0
    %1567 = vmatpush1.msra.mxu0 %v295
    %1568 = vmatprep.subr.mxu0 0.0
    %1569 = vmatpush1.msra.mxu0 %v296
    %1570 = vmatprep.subr.mxu0 0.0
    %1571 = vmatpush1.msra.mxu0 %v297
    %1572 = vmatprep.subr.mxu0 0.0
    %1573 = vmatpush1.msra.mxu0 %v298
    %1574 = vmatprep.subr.mxu0 0.0
    %1575 = vmatpush1.msra.mxu0 %v299
    %1576 = vmatprep.subr.mxu0 0.0
    %1577 = vmatpush1.msra.mxu0 %v300
    %1578 = vmatprep.subr.mxu0 0.0
    %1579 = vmatpush1.msra.mxu0 %v301
    %1580 = vmatprep.subr.mxu0 0.0
    %1581 = vmatpush1.msra.mxu0 %v302
    %1582 = vmatprep.subr.mxu0 0.0
    %1583 = vmatpush1.msra.mxu0 %v303
    %1584 = vmatprep.subr.mxu0 0.0
    %1585 = vmatpush1.msra.mxu0 %v304
    %1586 = vmatprep.subr.mxu0 0.0
    %1587 = vmatpush1.msra.mxu0 %v305
    %1588 = vmatprep.subr.mxu0 0.0
    %1589 = vmatpush1.msra.mxu0 %v306
    %1590 = vmatprep.subr.mxu0 0.0
    %1591 = vmatpush1.msra.mxu0 %v307
    %1592 = vmatprep.subr.mxu0 0.0
    %1593 = vmatpush1.msra.mxu0 %v308
    %1594 = vmatprep.subr.mxu0 0.0
    %1595 = vmatpush1.msra.mxu0 %v309
    %1596 = vmatprep.subr.mxu0 0.0
    %1597 = vmatpush1.msra.mxu0 %v310
    %1598 = vmatprep.subr.mxu0 0.0
    %1599 = vmatpush1.msra.mxu0 %v311
    %1600 = vmatprep.subr.mxu0 0.0
    %1601 = vmatpush1.msra.mxu0 %v312
    %1602 = vmatprep.subr.mxu0 0.0
    %1603 = vmatpush1.msra.mxu0 %v313
    %1604 = vmatprep.subr.mxu0 0.0
    %1605 = vmatpush1.msra.mxu0 %v314
    %1606 = vmatprep.mubr.f32.mxu0 %v40
    %1607 = vmatmul.mubr.f32.gmra.mrb[0].mxu0 %v39
    %v1608 = vpop.f32.mrb[0].mxu0
    %v1609 = vadd.f32 %v1539, %v1608
    %v1610 = vpop.f32.mrb[0].mxu0
    %1611 = vdwg.mxu0
    %1612 = vmatprep.subr.mxu0 0.0
    %1613 = vmatpush1.msra.mxu0 %v315
    %1614 = vmatprep.subr.mxu0 0.0
    %1615 = vmatpush1.msra.mxu0 %v316
    %1616 = vmatprep.subr.mxu0 0.0
    %1617 = vmatpush1.msra.mxu0 %v317
    %1618 = vmatprep.subr.mxu0 0.0
    %1619 = vmatpush1.msra.mxu0 %v318
    %1620 = vmatprep.subr.mxu0 0.0
    %1621 = vmatpush1.msra.mxu0 %v319
    %1622 = vmatprep.subr.mxu0 0.0
    %1623 = vmatpush1.msra.mxu0 %v320
    %1624 = vmatprep.subr.mxu0 0.0
    %1625 = vmatpush1.msra.mxu0 %v321
    %1626 = vmatprep.subr.mxu0 0.0
    %1627 = vmatpush1.msra.mxu0 %v322
    %1628 = vmatprep.subr.mxu0 0.0
    %1629 = vmatpush1.msra.mxu0 %v323
    %1630 = vmatprep.subr.mxu0 0.0
    %1631 = vmatpush1.msra.mxu0 %v324
    %1632 = vmatprep.subr.mxu0 0.0
    %1633 = vmatpush1.msra.mxu0 %v325
    %1634 = vmatprep.subr.mxu0 0.0
    %1635 = vmatpush1.msra.mxu0 %v326
    %1636 = vmatprep.subr.mxu0 0.0
    %1637 = vmatpush1.msra.mxu0 %v327
    %1638 = vmatprep.subr.mxu0 0.0
    %1639 = vmatpush1.msra.mxu0 %v328
    %1640 = vmatprep.subr.mxu0 0.0
    %1641 = vmatpush1.msra.mxu0 %v329
    %1642 = vmatprep.subr.mxu0 0.0
    %1643 = vmatpush1.msra.mxu0 %v330
    %1644 = vmatprep.subr.mxu0 0.0
    %1645 = vmatpush1.msra.mxu0 %v331
    %1646 = vmatprep.subr.mxu0 0.0
    %1647 = vmatpush1.msra.mxu0 %v332
    %1648 = vmatprep.subr.mxu0 0.0
    %1649 = vmatpush1.msra.mxu0 %v333
    %1650 = vmatprep.subr.mxu0 0.0
    %1651 = vmatpush1.msra.mxu0 %v334
    %1652 = vmatprep.subr.mxu0 0.0
    %1653 = vmatpush1.msra.mxu0 %v335
    %1654 = vmatprep.subr.mxu0 0.0
    %1655 = vmatpush1.msra.mxu0 %v336
    %1656 = vmatprep.subr.mxu0 0.0
    %1657 = vmatpush1.msra.mxu0 %v337
    %1658 = vmatprep.subr.mxu0 0.0
    %1659 = vmatpush1.msra.mxu0 %v338
    %1660 = vmatprep.subr.mxu0 0.0
    %1661 = vmatpush1.msra.mxu0 %v339
    %1662 = vmatprep.subr.mxu0 0.0
    %1663 = vmatpush1.msra.mxu0 %v340
    %1664 = vmatprep.subr.mxu0 0.0
    %1665 = vmatpush1.msra.mxu0 %v341
    %1666 = vmatprep.subr.mxu0 0.0
    %1667 = vmatpush1.msra.mxu0 %v342
    %1668 = vmatprep.subr.mxu0 0.0
    %1669 = vmatpush1.msra.mxu0 %v343
    %1670 = vmatprep.subr.mxu0 0.0
    %1671 = vmatpush1.msra.mxu0 %v344
    %1672 = vmatprep.subr.mxu0 0.0
    %1673 = vmatpush1.msra.mxu0 %v345
    %1674 = vmatprep.subr.mxu0 0.0
    %1675 = vmatpush1.msra.mxu0 %v346
    %1676 = vmatprep.mubr.f32.mxu0 %v42
    %1677 = vmatmul.mubr.f32.gmra.mrb[0].mxu0 %v41
    %v1678 = vpop.f32.mrb[0].mxu0
    %v1679 = vadd.f32 %v1609, %v1678
    %v1680 = vpop.f32.mrb[0].mxu0
    %1681 = vdwg.mxu0
    %1682 = vmatprep.subr.mxu0 0.0
    %1683 = vmatpush1.msra.mxu0 %v347
    %1684 = vmatprep.subr.mxu0 0.0
    %1685 = vmatpush1.msra.mxu0 %v348
    %1686 = vmatprep.subr.mxu0 0.0
    %1687 = vmatpush1.msra.mxu0 %v349
    %1688 = vmatprep.subr.mxu0 0.0
    %1689 = vmatpush1.msra.mxu0 %v350
    %1690 = vmatprep.subr.mxu0 0.0
    %1691 = vmatpush1.msra.mxu0 %v351
    %1692 = vmatprep.subr.mxu0 0.0
    %1693 = vmatpush1.msra.mxu0 %v352
    %1694 = vmatprep.subr.mxu0 0.0
    %1695 = vmatpush1.msra.mxu0 %v353
    %1696 = vmatprep.subr.mxu0 0.0
    %1697 = vmatpush1.msra.mxu0 %v354
    %1698 = vmatprep.subr.mxu0 0.0
    %1699 = vmatpush1.msra.mxu0 %v355
    %1700 = vmatprep.subr.mxu0 0.0
    %1701 = vmatpush1.msra.mxu0 %v356
    %1702 = vmatprep.subr.mxu0 0.0
    %1703 = vmatpush1.msra.mxu0 %v357
    %1704 = vmatprep.subr.mxu0 0.0
    %1705 = vmatpush1.msra.mxu0 %v358
    %1706 = vmatprep.subr.mxu0 0.0
    %1707 = vmatpush1.msra.mxu0 %v359
    %1708 = vmatprep.subr.mxu0 0.0
    %1709 = vmatpush1.msra.mxu0 %v360
    %1710 = vmatprep.subr.mxu0 0.0
    %1711 = vmatpush1.msra.mxu0 %v361
    %1712 = vmatprep.subr.mxu0 0.0
    %1713 = vmatpush1.msra.mxu0 %v362
    %1714 = vmatprep.subr.mxu0 0.0
    %1715 = vmatpush1.msra.mxu0 %v363
    %1716 = vmatprep.subr.mxu0 0.0
    %1717 = vmatpush1.msra.mxu0 %v364
    %1718 = vmatprep.subr.mxu0 0.0
    %1719 = vmatpush1.msra.mxu0 %v365
    %1720 = vmatprep.subr.mxu0 0.0
    %1721 = vmatpush1.msra.mxu0 %v366
    %1722 = vmatprep.subr.mxu0 0.0
    %1723 = vmatpush1.msra.mxu0 %v367
    %1724 = vmatprep.subr.mxu0 0.0
    %1725 = vmatpush1.msra.mxu0 %v368
    %1726 = vmatprep.subr.mxu0 0.0
    %1727 = vmatpush1.msra.mxu0 %v369
    %1728 = vmatprep.subr.mxu0 0.0
    %1729 = vmatpush1.msra.mxu0 %v370
    %1730 = vmatprep.subr.mxu0 0.0
    %1731 = vmatpush1.msra.mxu0 %v371
    %1732 = vmatprep.subr.mxu0 0.0
    %1733 = vmatpush1.msra.mxu0 %v372
    %1734 = vmatprep.subr.mxu0 0.0
    %1735 = vmatpush1.msra.mxu0 %v373
    %1736 = vmatprep.subr.mxu0 0.0
    %1737 = vmatpush1.msra.mxu0 %v374
    %1738 = vmatprep.subr.mxu0 0.0
    %1739 = vmatpush1.msra.mxu0 %v375
    %1740 = vmatprep.subr.mxu0 0.0
    %1741 = vmatpush1.msra.mxu0 %v376
    %1742 = vmatprep.subr.mxu0 0.0
    %1743 = vmatpush1.msra.mxu0 %v377
    %1744 = vmatprep.subr.mxu0 0.0
    %1745 = vmatpush1.msra.mxu0 %v378
    %1746 = vmatprep.mubr.f32.mxu0 %v44
    %1747 = vmatmul.mubr.f32.gmra.mrb[0].mxu0 %v43
    %v1748 = vpop.f32.mrb[0].mxu0
    %v1749 = vadd.f32 %v1679, %v1748
    %v1750 = vpop.f32.mrb[0].mxu0
    %1751 = vdwg.mxu0
    %1752 = vmatprep.subr.mxu0 0.0
    %1753 = vmatpush1.msra.mxu0 %v379
    %1754 = vmatprep.subr.mxu0 0.0
    %1755 = vmatpush1.msra.mxu0 %v380
    %1756 = vmatprep.subr.mxu0 0.0
    %1757 = vmatpush1.msra.mxu0 %v381
    %1758 = vmatprep.subr.mxu0 0.0
    %1759 = vmatpush1.msra.mxu0 %v382
    %1760 = vmatprep.subr.mxu0 0.0
    %1761 = vmatpush1.msra.mxu0 %v383
    %1762 = vmatprep.subr.mxu0 0.0
    %1763 = vmatpush1.msra.mxu0 %v384
    %1764 = vmatprep.subr.mxu0 0.0
    %1765 = vmatpush1.msra.mxu0 %v385
    %1766 = vmatprep.subr.mxu0 0.0
    %1767 = vmatpush1.msra.mxu0 %v386
    %1768 = vmatprep.subr.mxu0 0.0
    %1769 = vmatpush1.msra.mxu0 %v387
    %1770 = vmatprep.subr.mxu0 0.0
    %1771 = vmatpush1.msra.mxu0 %v388
    %1772 = vmatprep.subr.mxu0 0.0
    %1773 = vmatpush1.msra.mxu0 %v389
    %1774 = vmatprep.subr.mxu0 0.0
    %1775 = vmatpush1.msra.mxu0 %v390
    %1776 = vmatprep.subr.mxu0 0.0
    %1777 = vmatpush1.msra.mxu0 %v391
    %1778 = vmatprep.subr.mxu0 0.0
    %1779 = vmatpush1.msra.mxu0 %v392
    %1780 = vmatprep.subr.mxu0 0.0
    %1781 = vmatpush1.msra.mxu0 %v393
    %1782 = vmatprep.subr.mxu0 0.0
    %1783 = vmatpush1.msra.mxu0 %v394
    %1784 = vmatprep.subr.mxu0 0.0
    %1785 = vmatpush1.msra.mxu0 %v395
    %1786 = vmatprep.subr.mxu0 0.0
    %1787 = vmatpush1.msra.mxu0 %v396
    %1788 = vmatprep.subr.mxu0 0.0
    %1789 = vmatpush1.msra.mxu0 %v397
    %1790 = vmatprep.subr.mxu0 0.0
    %1791 = vmatpush1.msra.mxu0 %v398
    %1792 = vmatprep.subr.mxu0 0.0
    %1793 = vmatpush1.msra.mxu0 %v399
    %1794 = vmatprep.subr.mxu0 0.0
    %1795 = vmatpush1.msra.mxu0 %v400
    %1796 = vmatprep.subr.mxu0 0.0
    %1797 = vmatpush1.msra.mxu0 %v401
    %1798 = vmatprep.subr.mxu0 0.0
    %1799 = vmatpush1.msra.mxu0 %v402
    %1800 = vmatprep.subr.mxu0 0.0
    %1801 = vmatpush1.msra.mxu0 %v403
    %1802 = vmatprep.subr.mxu0 0.0
    %1803 = vmatpush1.msra.mxu0 %v404
    %1804 = vmatprep.subr.mxu0 0.0
    %1805 = vmatpush1.msra.mxu0 %v405
    %1806 = vmatprep.subr.mxu0 0.0
    %1807 = vmatpush1.msra.mxu0 %v406
    %1808 = vmatprep.subr.mxu0 0.0
    %1809 = vmatpush1.msra.mxu0 %v407
    %1810 = vmatprep.subr.mxu0 0.0
    %1811 = vmatpush1.msra.mxu0 %v408
    %1812 = vmatprep.subr.mxu0 0.0
    %1813 = vmatpush1.msra.mxu0 %v409
    %1814 = vmatprep.subr.mxu0 0.0
    %1815 = vmatpush1.msra.mxu0 %v410
    %1816 = vmatprep.mubr.f32.mxu0 %v46
    %1817 = vmatmul.mubr.f32.gmra.mrb[0].mxu0 %v45
    %v1818 = vpop.f32.mrb[0].mxu0
    %v1819 = vadd.f32 %v1749, %v1818
    %v1820 = vpop.f32.mrb[0].mxu0
    %1821 = vdwg.mxu0
    %1822 = vmatprep.subr.mxu0 0.0
    %1823 = vmatpush1.msra.mxu0 %v411
    %1824 = vmatprep.subr.mxu0 0.0
    %1825 = vmatpush1.msra.mxu0 %v412
    %1826 = vmatprep.subr.mxu0 0.0
    %1827 = vmatpush1.msra.mxu0 %v413
    %1828 = vmatprep.subr.mxu0 0.0
    %1829 = vmatpush1.msra.mxu0 %v414
    %1830 = vmatprep.subr.mxu0 0.0
    %1831 = vmatpush1.msra.mxu0 %v415
    %1832 = vmatprep.subr.mxu0 0.0
    %1833 = vmatpush1.msra.mxu0 %v416
    %1834 = vmatprep.subr.mxu0 0.0
    %1835 = vmatpush1.msra.mxu0 %v417
    %1836 = vmatprep.subr.mxu0 0.0
    %1837 = vmatpush1.msra.mxu0 %v418
    %1838 = vmatprep.subr.mxu0 0.0
    %1839 = vmatpush1.msra.mxu0 %v419
    %1840 = vmatprep.subr.mxu0 0.0
    %1841 = vmatpush1.msra.mxu0 %v420
    %1842 = vmatprep.subr.mxu0 0.0
    %1843 = vmatpush1.msra.mxu0 %v421
    %1844 = vmatprep.subr.mxu0 0.0
    %1845 = vmatpush1.msra.mxu0 %v422
    %1846 = vmatprep.subr.mxu0 0.0
    %1847 = vmatpush1.msra.mxu0 %v423
    %1848 = vmatprep.subr.mxu0 0.0
    %1849 = vmatpush1.msra.mxu0 %v424
    %1850 = vmatprep.subr.mxu0 0.0
    %1851 = vmatpush1.msra.mxu0 %v425
    %1852 = vmatprep.subr.mxu0 0.0
    %1853 = vmatpush1.msra.mxu0 %v426
    %1854 = vmatprep.subr.mxu0 0.0
    %1855 = vmatpush1.msra.mxu0 %v427
    %1856 = vmatprep.subr.mxu0 0.0
    %1857 = vmatpush1.msra.mxu0 %v428
    %1858 = vmatprep.subr.mxu0 0.0
    %1859 = vmatpush1.msra.mxu0 %v429
    %1860 = vmatprep.subr.mxu0 0.0
    %1861 = vmatpush1.msra.mxu0 %v430
    %1862 = vmatprep.subr.mxu0 0.0
    %1863 = vmatpush1.msra.mxu0 %v431
    %1864 = vmatprep.subr.mxu0 0.0
    %1865 = vmatpush1.msra.mxu0 %v432
    %1866 = vmatprep.subr.mxu0 0.0
    %1867 = vmatpush1.msra.mxu0 %v433
    %1868 = vmatprep.subr.mxu0 0.0
    %1869 = vmatpush1.msra.mxu0 %v434
    %1870 = vmatprep.subr.mxu0 0.0
    %1871 = vmatpush1.msra.mxu0 %v435
    %1872 = vmatprep.subr.mxu0 0.0
    %1873 = vmatpush1.msra.mxu0 %v436
    %1874 = vmatprep.subr.mxu0 0.0
    %1875 = vmatpush1.msra.mxu0 %v437
    %1876 = vmatprep.subr.mxu0 0.0
    %1877 = vmatpush1.msra.mxu0 %v438
    %1878 = vmatprep.subr.mxu0 0.0
    %1879 = vmatpush1.msra.mxu0 %v439
    %1880 = vmatprep.subr.mxu0 0.0
    %1881 = vmatpush1.msra.mxu0 %v440
    %1882 = vmatprep.subr.mxu0 0.0
    %1883 = vmatpush1.msra.mxu0 %v441
    %1884 = vmatprep.subr.mxu0 0.0
    %1885 = vmatpush1.msra.mxu0 %v442
    %1886 = vmatprep.mubr.f32.mxu0 %v48
    %1887 = vmatmul.mubr.f32.gmra.mrb[0].mxu0 %v47
    %v1888 = vpop.f32.mrb[0].mxu0
    %v1889 = vadd.f32 %v1819, %v1888
    %v1890 = vpop.f32.mrb[0].mxu0
    %1891 = vdwg.mxu0
    %1892 = vmatprep.subr.mxu0 0.0
    %1893 = vmatpush1.msra.mxu0 %v443
    %1894 = vmatprep.subr.mxu0 0.0
    %1895 = vmatpush1.msra.mxu0 %v444
    %1896 = vmatprep.subr.mxu0 0.0
    %1897 = vmatpush1.msra.mxu0 %v445
    %1898 = vmatprep.subr.mxu0 0.0
    %1899 = vmatpush1.msra.mxu0 %v446
    %1900 = vmatprep.subr.mxu0 0.0
    %1901 = vmatpush1.msra.mxu0 %v447
    %1902 = vmatprep.subr.mxu0 0.0
    %1903 = vmatpush1.msra.mxu0 %v448
    %1904 = vmatprep.subr.mxu0 0.0
    %1905 = vmatpush1.msra.mxu0 %v449
    %1906 = vmatprep.subr.mxu0 0.0
    %1907 = vmatpush1.msra.mxu0 %v450
    %1908 = vmatprep.subr.mxu0 0.0
    %1909 = vmatpush1.msra.mxu0 %v451
    %1910 = vmatprep.subr.mxu0 0.0
    %1911 = vmatpush1.msra.mxu0 %v452
    %1912 = vmatprep.subr.mxu0 0.0
    %1913 = vmatpush1.msra.mxu0 %v453
    %1914 = vmatprep.subr.mxu0 0.0
    %1915 = vmatpush1.msra.mxu0 %v454
    %1916 = vmatprep.subr.mxu0 0.0
    %1917 = vmatpush1.msra.mxu0 %v455
    %1918 = vmatprep.subr.mxu0 0.0
    %1919 = vmatpush1.msra.mxu0 %v456
    %1920 = vmatprep.subr.mxu0 0.0
    %1921 = vmatpush1.msra.mxu0 %v457
    %1922 = vmatprep.subr.mxu0 0.0
    %1923 = vmatpush1.msra.mxu0 %v458
    %1924 = vmatprep.subr.mxu0 0.0
    %1925 = vmatpush1.msra.mxu0 %v459
    %1926 = vmatprep.subr.mxu0 0.0
    %1927 = vmatpush1.msra.mxu0 %v460
    %1928 = vmatprep.subr.mxu0 0.0
    %1929 = vmatpush1.msra.mxu0 %v461
    %1930 = vmatprep.subr.mxu0 0.0
    %1931 = vmatpush1.msra.mxu0 %v462
    %1932 = vmatprep.subr.mxu0 0.0
    %1933 = vmatpush1.msra.mxu0 %v463
    %1934 = vmatprep.subr.mxu0 0.0
    %1935 = vmatpush1.msra.mxu0 %v464
    %1936 = vmatprep.subr.mxu0 0.0
    %1937 = vmatpush1.msra.mxu0 %v465
    %1938 = vmatprep.subr.mxu0 0.0
    %1939 = vmatpush1.msra.mxu0 %v466
    %1940 = vmatprep.subr.mxu0 0.0
    %1941 = vmatpush1.msra.mxu0 %v467
    %1942 = vmatprep.subr.mxu0 0.0
    %1943 = vmatpush1.msra.mxu0 %v468
    %1944 = vmatprep.subr.mxu0 0.0
    %1945 = vmatpush1.msra.mxu0 %v469
    %1946 = vmatprep.subr.mxu0 0.0
    %1947 = vmatpush1.msra.mxu0 %v470
    %1948 = vmatprep.subr.mxu0 0.0
    %1949 = vmatpush1.msra.mxu0 %v471
    %1950 = vmatprep.subr.mxu0 0.0
    %1951 = vmatpush1.msra.mxu0 %v472
    %1952 = vmatprep.subr.mxu0 0.0
    %1953 = vmatpush1.msra.mxu0 %v473
    %1954 = vmatprep.subr.mxu0 0.0
    %1955 = vmatpush1.msra.mxu0 %v474
    %1956 = vmatprep.mubr.f32.mxu0 %v50
    %1957 = vmatmul.mubr.f32.gmra.mrb[0].mxu0 %v49
    %v1958 = vpop.f32.mrb[0].mxu0
    %v1959 = vadd.f32 %v1889, %v1958
    %v1960 = vpop.f32.mrb[0].mxu0
    %1961 = vdwg.mxu0
    %1962 = vmatprep.subr.mxu0 0.0
    %1963 = vmatpush1.msra.mxu0 %v475
    %1964 = vmatprep.subr.mxu0 0.0
    %1965 = vmatpush1.msra.mxu0 %v476
    %1966 = vmatprep.subr.mxu0 0.0
    %1967 = vmatpush1.msra.mxu0 %v477
    %1968 = vmatprep.subr.mxu0 0.0
    %1969 = vmatpush1.msra.mxu0 %v478
    %1970 = vmatprep.subr.mxu0 0.0
    %1971 = vmatpush1.msra.mxu0 %v479
    %1972 = vmatprep.subr.mxu0 0.0
    %1973 = vmatpush1.msra.mxu0 %v480
    %1974 = vmatprep.subr.mxu0 0.0
    %1975 = vmatpush1.msra.mxu0 %v481
    %1976 = vmatprep.subr.mxu0 0.0
    %1977 = vmatpush1.msra.mxu0 %v482
    %1978 = vmatprep.subr.mxu0 0.0
    %1979 = vmatpush1.msra.mxu0 %v483
    %1980 = vmatprep.subr.mxu0 0.0
    %1981 = vmatpush1.msra.mxu0 %v484
    %1982 = vmatprep.subr.mxu0 0.0
    %1983 = vmatpush1.msra.mxu0 %v485
    %1984 = vmatprep.subr.mxu0 0.0
    %1985 = vmatpush1.msra.mxu0 %v486
    %1986 = vmatprep.subr.mxu0 0.0
    %1987 = vmatpush1.msra.mxu0 %v487
    %1988 = vmatprep.subr.mxu0 0.0
    %1989 = vmatpush1.msra.mxu0 %v488
    %1990 = vmatprep.subr.mxu0 0.0
    %1991 = vmatpush1.msra.mxu0 %v489
    %1992 = vmatprep.subr.mxu0 0.0
    %1993 = vmatpush1.msra.mxu0 %v490
    %1994 = vmatprep.subr.mxu0 0.0
    %1995 = vmatpush1.msra.mxu0 %v491
    %1996 = vmatprep.subr.mxu0 0.0
    %1997 = vmatpush1.msra.mxu0 %v492
    %1998 = vmatprep.subr.mxu0 0.0
    %1999 = vmatpush1.msra.mxu0 %v493
    %2000 = vmatprep.subr.mxu0 0.0
    %2001 = vmatpush1.msra.mxu0 %v494
    %2002 = vmatprep.subr.mxu0 0.0
    %2003 = vmatpush1.msra.mxu0 %v495
    %2004 = vmatprep.subr.mxu0 0.0
    %2005 = vmatpush1.msra.mxu0 %v496
    %2006 = vmatprep.subr.mxu0 0.0
    %2007 = vmatpush1.msra.mxu0 %v497
    %2008 = vmatprep.subr.mxu0 0.0
    %2009 = vmatpush1.msra.mxu0 %v498
    %2010 = vmatprep.subr.mxu0 0.0
    %2011 = vmatpush1.msra.mxu0 %v499
    %2012 = vmatprep.subr.mxu0 0.0
    %2013 = vmatpush1.msra.mxu0 %v500
    %2014 = vmatprep.subr.mxu0 0.0
    %2015 = vmatpush1.msra.mxu0 %v501
    %2016 = vmatprep.subr.mxu0 0.0
    %2017 = vmatpush1.msra.mxu0 %v502
    %2018 = vmatprep.subr.mxu0 0.0
    %2019 = vmatpush1.msra.mxu0 %v503
    %2020 = vmatprep.subr.mxu0 0.0
    %2021 = vmatpush1.msra.mxu0 %v504
    %2022 = vmatprep.subr.mxu0 0.0
    %2023 = vmatpush1.msra.mxu0 %v505
    %2024 = vmatprep.subr.mxu0 0.0
    %2025 = vmatpush1.msra.mxu0 %v506
    %2026 = vmatprep.mubr.f32.mxu0 %v52
    %2027 = vmatmul.mubr.f32.gmra.mrb[0].mxu0 %v51
    %v2028 = vpop.f32.mrb[0].mxu0
    %v2029 = vadd.f32 %v1959, %v2028
    %v2030 = vpop.f32.mrb[0].mxu0
    %2031 = vdwg.mxu0
    %2032 = vmatprep.subr.mxu0 0.0
    %2033 = vmatpush1.msra.mxu0 %v507
    %2034 = vmatprep.subr.mxu0 0.0
    %2035 = vmatpush1.msra.mxu0 %v508
    %2036 = vmatprep.subr.mxu0 0.0
    %2037 = vmatpush1.msra.mxu0 %v509
    %2038 = vmatprep.subr.mxu0 0.0
    %2039 = vmatpush1.msra.mxu0 %v510
    %2040 = vmatprep.subr.mxu0 0.0
    %2041 = vmatpush1.msra.mxu0 %v511
    %2042 = vmatprep.subr.mxu0 0.0
    %2043 = vmatpush1.msra.mxu0 %v512
    %2044 = vmatprep.subr.mxu0 0.0
    %2045 = vmatpush1.msra.mxu0 %v513
    %2046 = vmatprep.subr.mxu0 0.0
    %2047 = vmatpush1.msra.mxu0 %v514
    %2048 = vmatprep.subr.mxu0 0.0
    %2049 = vmatpush1.msra.mxu0 %v515
    %2050 = vmatprep.subr.mxu0 0.0
    %2051 = vmatpush1.msra.mxu0 %v516
    %2052 = vmatprep.subr.mxu0 0.0
    %2053 = vmatpush1.msra.mxu0 %v517
    %2054 = vmatprep.subr.mxu0 0.0
    %2055 = vmatpush1.msra.mxu0 %v518
    %2056 = vmatprep.subr.mxu0 0.0
    %2057 = vmatpush1.msra.mxu0 %v519
    %2058 = vmatprep.subr.mxu0 0.0
    %2059 = vmatpush1.msra.mxu0 %v520
    %2060 = vmatprep.subr.mxu0 0.0
    %2061 = vmatpush1.msra.mxu0 %v521
    %2062 = vmatprep.subr.mxu0 0.0
    %2063 = vmatpush1.msra.mxu0 %v522
    %2064 = vmatprep.subr.mxu0 0.0
    %2065 = vmatpush1.msra.mxu0 %v523
    %2066 = vmatprep.subr.mxu0 0.0
    %2067 = vmatpush1.msra.mxu0 %v524
    %2068 = vmatprep.subr.mxu0 0.0
    %2069 = vmatpush1.msra.mxu0 %v525
    %2070 = vmatprep.subr.mxu0 0.0
    %2071 = vmatpush1.msra.mxu0 %v526
    %2072 = vmatprep.subr.mxu0 0.0
    %2073 = vmatpush1.msra.mxu0 %v527
    %2074 = vmatprep.subr.mxu0 0.0
    %2075 = vmatpush1.msra.mxu0 %v528
    %2076 = vmatprep.subr.mxu0 0.0
    %2077 = vmatpush1.msra.mxu0 %v529
    %2078 = vmatprep.subr.mxu0 0.0
    %2079 = vmatpush1.msra.mxu0 %v530
    %2080 = vmatprep.subr.mxu0 0.0
    %2081 = vmatpush1.msra.mxu0 %v531
    %2082 = vmatprep.subr.mxu0 0.0
    %2083 = vmatpush1.msra.mxu0 %v532
    %2084 = vmatprep.subr.mxu0 0.0
    %2085 = vmatpush1.msra.mxu0 %v533
    %2086 = vmatprep.subr.mxu0 0.0
    %2087 = vmatpush1.msra.mxu0 %v534
    %2088 = vmatprep.subr.mxu0 0.0
    %2089 = vmatpush1.msra.mxu0 %v535
    %2090 = vmatprep.subr.mxu0 0.0
    %2091 = vmatpush1.msra.mxu0 %v536
    %2092 = vmatprep.subr.mxu0 0.0
    %2093 = vmatpush1.msra.mxu0 %v537
    %2094 = vmatprep.subr.mxu0 0.0
    %2095 = vmatpush1.msra.mxu0 %v538
    %2096 = vmatprep.mubr.f32.mxu0 %v54
    %2097 = vmatmul.mubr.f32.gmra.mrb[0].mxu0 %v53
    %v2098 = vpop.f32.mrb[0].mxu0
    %v2099 = vadd.f32 %v2029, %v2098
    %v2100 = vpop.f32.mrb[0].mxu0
    %2101 = vdwg.mxu0
    %2102 = vmatprep.subr.mxu0 0.0
    %2103 = vmatpush1.msra.mxu0 %v539
    %2104 = vmatprep.subr.mxu0 0.0
    %2105 = vmatpush1.msra.mxu0 %v540
    %2106 = vmatprep.subr.mxu0 0.0
    %2107 = vmatpush1.msra.mxu0 %v541
    %2108 = vmatprep.subr.mxu0 0.0
    %2109 = vmatpush1.msra.mxu0 %v542
    %2110 = vmatprep.subr.mxu0 0.0
    %2111 = vmatpush1.msra.mxu0 %v543
    %2112 = vmatprep.subr.mxu0 0.0
    %2113 = vmatpush1.msra.mxu0 %v544
    %2114 = vmatprep.subr.mxu0 0.0
    %2115 = vmatpush1.msra.mxu0 %v545
    %2116 = vmatprep.subr.mxu0 0.0
    %2117 = vmatpush1.msra.mxu0 %v546
    %2118 = vmatprep.subr.mxu0 0.0
    %2119 = vmatpush1.msra.mxu0 %v547
    %2120 = vmatprep.subr.mxu0 0.0
    %2121 = vmatpush1.msra.mxu0 %v548
    %2122 = vmatprep.subr.mxu0 0.0
    %2123 = vmatpush1.msra.mxu0 %v549
    %2124 = vmatprep.subr.mxu0 0.0
    %2125 = vmatpush1.msra.mxu0 %v550
    %2126 = vmatprep.subr.mxu0 0.0
    %2127 = vmatpush1.msra.mxu0 %v551
    %2128 = vmatprep.subr.mxu0 0.0
    %2129 = vmatpush1.msra.mxu0 %v552
    %2130 = vmatprep.subr.mxu0 0.0
    %2131 = vmatpush1.msra.mxu0 %v553
    %2132 = vmatprep.subr.mxu0 0.0
    %2133 = vmatpush1.msra.mxu0 %v554
    %2134 = vmatprep.subr.mxu0 0.0
    %2135 = vmatpush1.msra.mxu0 %v555
    %2136 = vmatprep.subr.mxu0 0.0
    %2137 = vmatpush1.msra.mxu0 %v556
    %2138 = vmatprep.subr.mxu0 0.0
    %2139 = vmatpush1.msra.mxu0 %v557
    %2140 = vmatprep.subr.mxu0 0.0
    %2141 = vmatpush1.msra.mxu0 %v558
    %2142 = vmatprep.subr.mxu0 0.0
    %2143 = vmatpush1.msra.mxu0 %v559
    %2144 = vmatprep.subr.mxu0 0.0
    %2145 = vmatpush1.msra.mxu0 %v560
    %2146 = vmatprep.subr.mxu0 0.0
    %2147 = vmatpush1.msra.mxu0 %v561
    %2148 = vmatprep.subr.mxu0 0.0
    %2149 = vmatpush1.msra.mxu0 %v562
    %2150 = vmatprep.subr.mxu0 0.0
    %2151 = vmatpush1.msra.mxu0 %v563
    %2152 = vmatprep.subr.mxu0 0.0
    %2153 = vmatpush1.msra.mxu0 %v564
    %2154 = vmatprep.subr.mxu0 0.0
    %2155 = vmatpush1.msra.mxu0 %v565
    %2156 = vmatprep.subr.mxu0 0.0
    %2157 = vmatpush1.msra.mxu0 %v566
    %2158 = vmatprep.subr.mxu0 0.0
    %2159 = vmatpush1.msra.mxu0 %v567
    %2160 = vmatprep.subr.mxu0 0.0
    %2161 = vmatpush1.msra.mxu0 %v568
    %2162 = vmatprep.subr.mxu0 0.0
    %2163 = vmatpush1.msra.mxu0 %v569
    %2164 = vmatprep.subr.mxu0 0.0
    %2165 = vmatpush1.msra.mxu0 %v570
    %2166 = vmatprep.mubr.f32.mxu0 %v56
    %2167 = vmatmul.mubr.f32.gmra.mrb[0].mxu0 %v55
    %v2168 = vpop.f32.mrb[0].mxu0
    %v2169 = vadd.f32 %v2099, %v2168
    %v2170 = vpop.f32.mrb[0].mxu0
    %2171 = vdwg.mxu0
    %2172 = vmatprep.subr.mxu0 0.0
    %2173 = vmatpush1.msra.mxu0 %v571
    %2174 = vmatprep.subr.mxu0 0.0
    %2175 = vmatpush1.msra.mxu0 %v572
    %2176 = vmatprep.subr.mxu0 0.0
    %2177 = vmatpush1.msra.mxu0 %v573
    %2178 = vmatprep.subr.mxu0 0.0
    %2179 = vmatpush1.msra.mxu0 %v574
    %2180 = vmatprep.subr.mxu0 0.0
    %2181 = vmatpush1.msra.mxu0 %v575
    %2182 = vmatprep.subr.mxu0 0.0
    %2183 = vmatpush1.msra.mxu0 %v576
    %2184 = vmatprep.subr.mxu0 0.0
    %2185 = vmatpush1.msra.mxu0 %v577
    %2186 = vmatprep.subr.mxu0 0.0
    %2187 = vmatpush1.msra.mxu0 %v578
    %2188 = vmatprep.subr.mxu0 0.0
    %2189 = vmatpush1.msra.mxu0 %v579
    %2190 = vmatprep.subr.mxu0 0.0
    %2191 = vmatpush1.msra.mxu0 %v580
    %2192 = vmatprep.subr.mxu0 0.0
    %2193 = vmatpush1.msra.mxu0 %v581
    %2194 = vmatprep.subr.mxu0 0.0
    %2195 = vmatpush1.msra.mxu0 %v582
    %2196 = vmatprep.subr.mxu0 0.0
    %2197 = vmatpush1.msra.mxu0 %v583
    %2198 = vmatprep.subr.mxu0 0.0
    %2199 = vmatpush1.msra.mxu0 %v584
    %2200 = vmatprep.subr.mxu0 0.0
    %2201 = vmatpush1.msra.mxu0 %v585
    %2202 = vmatprep.subr.mxu0 0.0
    %2203 = vmatpush1.msra.mxu0 %v586
    %2204 = vmatprep.subr.mxu0 0.0
    %2205 = vmatpush1.msra.mxu0 %v587
    %2206 = vmatprep.subr.mxu0 0.0
    %2207 = vmatpush1.msra.mxu0 %v588
    %2208 = vmatprep.subr.mxu0 0.0
    %2209 = vmatpush1.msra.mxu0 %v589
    %2210 = vmatprep.subr.mxu0 0.0
    %2211 = vmatpush1.msra.mxu0 %v590
    %2212 = vmatprep.subr.mxu0 0.0
    %2213 = vmatpush1.msra.mxu0 %v591
    %2214 = vmatprep.subr.mxu0 0.0
    %2215 = vmatpush1.msra.mxu0 %v592
    %2216 = vmatprep.subr.mxu0 0.0
    %2217 = vmatpush1.msra.mxu0 %v593
    %2218 = vmatprep.subr.mxu0 0.0
    %2219 = vmatpush1.msra.mxu0 %v594
    %2220 = vmatprep.subr.mxu0 0.0
    %2221 = vmatpush1.msra.mxu0 %v595
    %2222 = vmatprep.subr.mxu0 0.0
    %2223 = vmatpush1.msra.mxu0 %v596
    %2224 = vmatprep.subr.mxu0 0.0
    %2225 = vmatpush1.msra.mxu0 %v597
    %2226 = vmatprep.subr.mxu0 0.0
    %2227 = vmatpush1.msra.mxu0 %v598
    %2228 = vmatprep.subr.mxu0 0.0
    %2229 = vmatpush1.msra.mxu0 %v599
    %2230 = vmatprep.subr.mxu0 0.0
    %2231 = vmatpush1.msra.mxu0 %v600
    %2232 = vmatprep.subr.mxu0 0.0
    %2233 = vmatpush1.msra.mxu0 %v601
    %2234 = vmatprep.subr.mxu0 0.0
    %2235 = vmatpush1.msra.mxu0 %v602
    %2236 = vmatprep.mubr.f32.mxu0 %v58
    %2237 = vmatmul.mubr.f32.gmra.mrb[0].mxu0 %v57
    %v2238 = vpop.f32.mrb[0].mxu0
    %v2239 = vadd.f32 %v2169, %v2238
    %v2240 = vpop.f32.mrb[0].mxu0
    %2241 = vdwg.mxu0
    %2242 = vmatprep.subr.mxu0 0.0
    %2243 = vmatpush1.msra.mxu0 %v603
    %2244 = vmatprep.subr.mxu0 0.0
    %2245 = vmatpush1.msra.mxu0 %v604
    %2246 = vmatprep.subr.mxu0 0.0
    %2247 = vmatpush1.msra.mxu0 %v605
    %2248 = vmatprep.subr.mxu0 0.0
    %2249 = vmatpush1.msra.mxu0 %v606
    %2250 = vmatprep.subr.mxu0 0.0
    %2251 = vmatpush1.msra.mxu0 %v607
    %2252 = vmatprep.subr.mxu0 0.0
    %2253 = vmatpush1.msra.mxu0 %v608
    %2254 = vmatprep.subr.mxu0 0.0
    %2255 = vmatpush1.msra.mxu0 %v609
    %2256 = vmatprep.subr.mxu0 0.0
    %2257 = vmatpush1.msra.mxu0 %v610
    %2258 = vmatprep.subr.mxu0 0.0
    %2259 = vmatpush1.msra.mxu0 %v611
    %2260 = vmatprep.subr.mxu0 0.0
    %2261 = vmatpush1.msra.mxu0 %v612
    %2262 = vmatprep.subr.mxu0 0.0
    %2263 = vmatpush1.msra.mxu0 %v613
    %2264 = vmatprep.subr.mxu0 0.0
    %2265 = vmatpush1.msra.mxu0 %v614
    %2266 = vmatprep.subr.mxu0 0.0
    %2267 = vmatpush1.msra.mxu0 %v615
    %2268 = vmatprep.subr.mxu0 0.0
    %2269 = vmatpush1.msra.mxu0 %v616
    %2270 = vmatprep.subr.mxu0 0.0
    %2271 = vmatpush1.msra.mxu0 %v617
    %2272 = vmatprep.subr.mxu0 0.0
    %2273 = vmatpush1.msra.mxu0 %v618
    %2274 = vmatprep.subr.mxu0 0.0
    %2275 = vmatpush1.msra.mxu0 %v619
    %2276 = vmatprep.subr.mxu0 0.0
    %2277 = vmatpush1.msra.mxu0 %v620
    %2278 = vmatprep.subr.mxu0 0.0
    %2279 = vmatpush1.msra.mxu0 %v621
    %2280 = vmatprep.subr.mxu0 0.0
    %2281 = vmatpush1.msra.mxu0 %v622
    %2282 = vmatprep.subr.mxu0 0.0
    %2283 = vmatpush1.msra.mxu0 %v623
    %2284 = vmatprep.subr.mxu0 0.0
    %2285 = vmatpush1.msra.mxu0 %v624
    %2286 = vmatprep.subr.mxu0 0.0
    %2287 = vmatpush1.msra.mxu0 %v625
    %2288 = vmatprep.subr.mxu0 0.0
    %2289 = vmatpush1.msra.mxu0 %v626
    %2290 = vmatprep.subr.mxu0 0.0
    %2291 = vmatpush1.msra.mxu0 %v627
    %2292 = vmatprep.subr.mxu0 0.0
    %2293 = vmatpush1.msra.mxu0 %v628
    %2294 = vmatprep.subr.mxu0 0.0
    %2295 = vmatpush1.msra.mxu0 %v629
    %2296 = vmatprep.subr.mxu0 0.0
    %2297 = vmatpush1.msra.mxu0 %v630
    %2298 = vmatprep.subr.mxu0 0.0
    %2299 = vmatpush1.msra.mxu0 %v631
    %2300 = vmatprep.subr.mxu0 0.0
    %2301 = vmatpush1.msra.mxu0 %v632
    %2302 = vmatprep.subr.mxu0 0.0
    %2303 = vmatpush1.msra.mxu0 %v633
    %2304 = vmatprep.subr.mxu0 0.0
    %2305 = vmatpush1.msra.mxu0 %v634
    %2306 = vmatprep.mubr.f32.mxu0 %v60
    %2307 = vmatmul.mubr.f32.gmra.mrb[0].mxu0 %v59
    %v2308 = vpop.f32.mrb[0].mxu0
    %v2309 = vadd.f32 %v2239, %v2308
    %v2310 = vpop.f32.mrb[0].mxu0
    %2311 = vdwg.mxu0
    %2312 = vmatprep.subr.mxu0 0.0
    %2313 = vmatpush1.msra.mxu0 %v635
    %2314 = vmatprep.subr.mxu0 0.0
    %2315 = vmatpush1.msra.mxu0 %v636
    %2316 = vmatprep.subr.mxu0 0.0
    %2317 = vmatpush1.msra.mxu0 %v637
    %2318 = vmatprep.subr.mxu0 0.0
    %2319 = vmatpush1.msra.mxu0 %v638
    %2320 = vmatprep.subr.mxu0 0.0
    %2321 = vmatpush1.msra.mxu0 %v639
    %2322 = vmatprep.subr.mxu0 0.0
    %2323 = vmatpush1.msra.mxu0 %v640
    %2324 = vmatprep.subr.mxu0 0.0
    %2325 = vmatpush1.msra.mxu0 %v641
    %2326 = vmatprep.subr.mxu0 0.0
    %2327 = vmatpush1.msra.mxu0 %v642
    %2328 = vmatprep.subr.mxu0 0.0
    %2329 = vmatpush1.msra.mxu0 %v643
    %2330 = vmatprep.subr.mxu0 0.0
    %2331 = vmatpush1.msra.mxu0 %v644
    %2332 = vmatprep.subr.mxu0 0.0
    %2333 = vmatpush1.msra.mxu0 %v645
    %2334 = vmatprep.subr.mxu0 0.0
    %2335 = vmatpush1.msra.mxu0 %v646
    %2336 = vmatprep.subr.mxu0 0.0
    %2337 = vmatpush1.msra.mxu0 %v647
    %2338 = vmatprep.subr.mxu0 0.0
    %2339 = vmatpush1.msra.mxu0 %v648
    %2340 = vmatprep.subr.mxu0 0.0
    %2341 = vmatpush1.msra.mxu0 %v649
    %2342 = vmatprep.subr.mxu0 0.0
    %2343 = vmatpush1.msra.mxu0 %v650
    %2344 = vmatprep.subr.mxu0 0.0
    %2345 = vmatpush1.msra.mxu0 %v651
    %2346 = vmatprep.subr.mxu0 0.0
    %2347 = vmatpush1.msra.mxu0 %v652
    %2348 = vmatprep.subr.mxu0 0.0
    %2349 = vmatpush1.msra.mxu0 %v653
    %2350 = vmatprep.subr.mxu0 0.0
    %2351 = vmatpush1.msra.mxu0 %v654
    %2352 = vmatprep.subr.mxu0 0.0
    %2353 = vmatpush1.msra.mxu0 %v655
    %2354 = vmatprep.subr.mxu0 0.0
    %2355 = vmatpush1.msra.mxu0 %v656
    %2356 = vmatprep.subr.mxu0 0.0
    %2357 = vmatpush1.msra.mxu0 %v657
    %2358 = vmatprep.subr.mxu0 0.0
    %2359 = vmatpush1.msra.mxu0 %v658
    %2360 = vmatprep.subr.mxu0 0.0
    %2361 = vmatpush1.msra.mxu0 %v659
    %2362 = vmatprep.subr.mxu0 0.0
    %2363 = vmatpush1.msra.mxu0 %v660
    %2364 = vmatprep.subr.mxu0 0.0
    %2365 = vmatpush1.msra.mxu0 %v661
    %2366 = vmatprep.subr.mxu0 0.0
    %2367 = vmatpush1.msra.mxu0 %v662
    %2368 = vmatprep.subr.mxu0 0.0
    %2369 = vmatpush1.msra.mxu0 %v663
    %2370 = vmatprep.subr.mxu0 0.0
    %2371 = vmatpush1.msra.mxu0 %v664
    %2372 = vmatprep.subr.mxu0 0.0
    %2373 = vmatpush1.msra.mxu0 %v665
    %2374 = vmatprep.subr.mxu0 0.0
    %2375 = vmatpush1.msra.mxu0 %v666
    %2376 = vmatprep.mubr.f32.mxu0 %v62
    %2377 = vmatmul.mubr.f32.gmra.mrb[0].mxu0 %v61
    %v2378 = vpop.f32.mrb[0].mxu0
    %v2379 = vadd.f32 %v2309, %v2378
    %v2380 = vpop.f32.mrb[0].mxu0
    %2381 = vdwg.mxu0
    %2382 = vmatprep.subr.mxu0 0.0
    %2383 = vmatpush1.msra.mxu0 %v667
    %2384 = vmatprep.subr.mxu0 0.0
    %2385 = vmatpush1.msra.mxu0 %v668
    %2386 = vmatprep.subr.mxu0 0.0
    %2387 = vmatpush1.msra.mxu0 %v669
    %2388 = vmatprep.subr.mxu0 0.0
    %2389 = vmatpush1.msra.mxu0 %v670
    %2390 = vmatprep.subr.mxu0 0.0
    %2391 = vmatpush1.msra.mxu0 %v671
    %2392 = vmatprep.subr.mxu0 0.0
    %2393 = vmatpush1.msra.mxu0 %v672
    %2394 = vmatprep.subr.mxu0 0.0
    %2395 = vmatpush1.msra.mxu0 %v673
    %2396 = vmatprep.subr.mxu0 0.0
    %2397 = vmatpush1.msra.mxu0 %v674
    %2398 = vmatprep.subr.mxu0 0.0
    %2399 = vmatpush1.msra.mxu0 %v675
    %2400 = vmatprep.subr.mxu0 0.0
    %2401 = vmatpush1.msra.mxu0 %v676
    %2402 = vmatprep.subr.mxu0 0.0
    %2403 = vmatpush1.msra.mxu0 %v677
    %2404 = vmatprep.subr.mxu0 0.0
    %2405 = vmatpush1.msra.mxu0 %v678
    %2406 = vmatprep.subr.mxu0 0.0
    %2407 = vmatpush1.msra.mxu0 %v679
    %2408 = vmatprep.subr.mxu0 0.0
    %2409 = vmatpush1.msra.mxu0 %v680
    %2410 = vmatprep.subr.mxu0 0.0
    %2411 = vmatpush1.msra.mxu0 %v681
    %2412 = vmatprep.subr.mxu0 0.0
    %2413 = vmatpush1.msra.mxu0 %v682
    %2414 = vmatprep.subr.mxu0 0.0
    %2415 = vmatpush1.msra.mxu0 %v683
    %2416 = vmatprep.subr.mxu0 0.0
    %2417 = vmatpush1.msra.mxu0 %v684
    %2418 = vmatprep.subr.mxu0 0.0
    %2419 = vmatpush1.msra.mxu0 %v685
    %2420 = vmatprep.subr.mxu0 0.0
    %2421 = vmatpush1.msra.mxu0 %v686
    %2422 = vmatprep.subr.mxu0 0.0
    %2423 = vmatpush1.msra.mxu0 %v687
    %2424 = vmatprep.subr.mxu0 0.0
    %2425 = vmatpush1.msra.mxu0 %v688
    %2426 = vmatprep.subr.mxu0 0.0
    %2427 = vmatpush1.msra.mxu0 %v689
    %2428 = vmatprep.subr.mxu0 0.0
    %2429 = vmatpush1.msra.mxu0 %v690
    %2430 = vmatprep.subr.mxu0 0.0
    %2431 = vmatpush1.msra.mxu0 %v691
    %2432 = vmatprep.subr.mxu0 0.0
    %2433 = vmatpush1.msra.mxu0 %v692
    %2434 = vmatprep.subr.mxu0 0.0
    %2435 = vmatpush1.msra.mxu0 %v693
    %2436 = vmatprep.subr.mxu0 0.0
    %2437 = vmatpush1.msra.mxu0 %v694
    %2438 = vmatprep.subr.mxu0 0.0
    %2439 = vmatpush1.msra.mxu0 %v695
    %2440 = vmatprep.subr.mxu0 0.0
    %2441 = vmatpush1.msra.mxu0 %v696
    %2442 = vmatprep.subr.mxu0 0.0
    %2443 = vmatpush1.msra.mxu0 %v697
    %2444 = vmatprep.subr.mxu0 0.0
    %2445 = vmatpush1.msra.mxu0 %v698
    %2446 = vmatprep.mubr.f32.mxu0 %v64
    %2447 = vmatmul.mubr.f32.gmra.mrb[0].mxu0 %v63
    %v2448 = vpop.f32.mrb[0].mxu0
    %v2449 = vadd.f32 %v2379, %v2448
    %v2450 = vpop.f32.mrb[0].mxu0
    %2451 = vdwg.mxu0
    %2452 = vmatprep.subr.mxu0 0.0
    %2453 = vmatpush1.msra.mxu0 %v699
    %2454 = vmatprep.subr.mxu0 0.0
    %2455 = vmatpush1.msra.mxu0 %v700
    %2456 = vmatprep.subr.mxu0 0.0
    %2457 = vmatpush1.msra.mxu0 %v701
    %2458 = vmatprep.subr.mxu0 0.0
    %2459 = vmatpush1.msra.mxu0 %v702
    %2460 = vmatprep.subr.mxu0 0.0
    %2461 = vmatpush1.msra.mxu0 %v703
    %2462 = vmatprep.subr.mxu0 0.0
    %2463 = vmatpush1.msra.mxu0 %v704
    %2464 = vmatprep.subr.mxu0 0.0
    %2465 = vmatpush1.msra.mxu0 %v705
    %2466 = vmatprep.subr.mxu0 0.0
    %2467 = vmatpush1.msra.mxu0 %v706
    %2468 = vmatprep.subr.mxu0 0.0
    %2469 = vmatpush1.msra.mxu0 %v707
    %2470 = vmatprep.subr.mxu0 0.0
    %2471 = vmatpush1.msra.mxu0 %v708
    %2472 = vmatprep.subr.mxu0 0.0
    %2473 = vmatpush1.msra.mxu0 %v709
    %2474 = vmatprep.subr.mxu0 0.0
    %2475 = vmatpush1.msra.mxu0 %v710
    %2476 = vmatprep.subr.mxu0 0.0
    %2477 = vmatpush1.msra.mxu0 %v711
    %2478 = vmatprep.subr.mxu0 0.0
    %2479 = vmatpush1.msra.mxu0 %v712
    %2480 = vmatprep.subr.mxu0 0.0
    %2481 = vmatpush1.msra.mxu0 %v713
    %2482 = vmatprep.subr.mxu0 0.0
    %2483 = vmatpush1.msra.mxu0 %v714
    %2484 = vmatprep.subr.mxu0 0.0
    %2485 = vmatpush1.msra.mxu0 %v715
    %2486 = vmatprep.subr.mxu0 0.0
    %2487 = vmatpush1.msra.mxu0 %v716
    %2488 = vmatprep.subr.mxu0 0.0
    %2489 = vmatpush1.msra.mxu0 %v717
    %2490 = vmatprep.subr.mxu0 0.0
    %2491 = vmatpush1.msra.mxu0 %v718
    %2492 = vmatprep.subr.mxu0 0.0
    %2493 = vmatpush1.msra.mxu0 %v719
    %2494 = vmatprep.subr.mxu0 0.0
    %2495 = vmatpush1.msra.mxu0 %v720
    %2496 = vmatprep.subr.mxu0 0.0
    %2497 = vmatpush1.msra.mxu0 %v721
    %2498 = vmatprep.subr.mxu0 0.0
    %2499 = vmatpush1.msra.mxu0 %v722
    %2500 = vmatprep.subr.mxu0 0.0
    %2501 = vmatpush1.msra.mxu0 %v723
    %2502 = vmatprep.subr.mxu0 0.0
    %2503 = vmatpush1.msra.mxu0 %v724
    %2504 = vmatprep.subr.mxu0 0.0
    %2505 = vmatpush1.msra.mxu0 %v725
    %2506 = vmatprep.subr.mxu0 0.0
    %2507 = vmatpush1.msra.mxu0 %v726
    %2508 = vmatprep.subr.mxu0 0.0
    %2509 = vmatpush1.msra.mxu0 %v727
    %2510 = vmatprep.subr.mxu0 0.0
    %2511 = vmatpush1.msra.mxu0 %v728
    %2512 = vmatprep.subr.mxu0 0.0
    %2513 = vmatpush1.msra.mxu0 %v729
    %2514 = vmatprep.subr.mxu0 0.0
    %2515 = vmatpush1.msra.mxu0 %v730
    %2516 = vmatprep.mubr.f32.mxu0 %v66
    %2517 = vmatmul.mubr.f32.gmra.mrb[0].mxu0 %v65
    %v2518 = vpop.f32.mrb[0].mxu0
    %v2519 = vadd.f32 %v2449, %v2518
    %v2520 = vpop.f32.mrb[0].mxu0
    %2521 = vdwg.mxu0
    %2522 = vmatprep.subr.mxu0 0.0
    %2523 = vmatpush1.msra.mxu0 %v731
    %2524 = vmatprep.subr.mxu0 0.0
    %2525 = vmatpush1.msra.mxu0 %v732
    %2526 = vmatprep.subr.mxu0 0.0
    %2527 = vmatpush1.msra.mxu0 %v733
    %2528 = vmatprep.subr.mxu0 0.0
    %2529 = vmatpush1.msra.mxu0 %v734
    %2530 = vmatprep.subr.mxu0 0.0
    %2531 = vmatpush1.msra.mxu0 %v735
    %2532 = vmatprep.subr.mxu0 0.0
    %2533 = vmatpush1.msra.mxu0 %v736
    %2534 = vmatprep.subr.mxu0 0.0
    %2535 = vmatpush1.msra.mxu0 %v737
    %2536 = vmatprep.subr.mxu0 0.0
    %2537 = vmatpush1.msra.mxu0 %v738
    %2538 = vmatprep.subr.mxu0 0.0
    %2539 = vmatpush1.msra.mxu0 %v739
    %2540 = vmatprep.subr.mxu0 0.0
    %2541 = vmatpush1.msra.mxu0 %v740
    %2542 = vmatprep.subr.mxu0 0.0
    %2543 = vmatpush1.msra.mxu0 %v741
    %2544 = vmatprep.subr.mxu0 0.0
    %2545 = vmatpush1.msra.mxu0 %v742
    %2546 = vmatprep.subr.mxu0 0.0
    %2547 = vmatpush1.msra.mxu0 %v743
    %2548 = vmatprep.subr.mxu0 0.0
    %2549 = vmatpush1.msra.mxu0 %v744
    %2550 = vmatprep.subr.mxu0 0.0
    %2551 = vmatpush1.msra.mxu0 %v745
    %2552 = vmatprep.subr.mxu0 0.0
    %2553 = vmatpush1.msra.mxu0 %v746
    %2554 = vmatprep.subr.mxu0 0.0
    %2555 = vmatpush1.msra.mxu0 %v747
    %2556 = vmatprep.subr.mxu0 0.0
    %2557 = vmatpush1.msra.mxu0 %v748
    %2558 = vmatprep.subr.mxu0 0.0
    %2559 = vmatpush1.msra.mxu0 %v749
    %2560 = vmatprep.subr.mxu0 0.0
    %2561 = vmatpush1.msra.mxu0 %v750
    %2562 = vmatprep.subr.mxu0 0.0
    %2563 = vmatpush1.msra.mxu0 %v751
    %2564 = vmatprep.subr.mxu0 0.0
    %2565 = vmatpush1.msra.mxu0 %v752
    %2566 = vmatprep.subr.mxu0 0.0
    %2567 = vmatpush1.msra.mxu0 %v753
    %2568 = vmatprep.subr.mxu0 0.0
    %2569 = vmatpush1.msra.mxu0 %v754
    %2570 = vmatprep.subr.mxu0 0.0
    %2571 = vmatpush1.msra.mxu0 %v755
    %2572 = vmatprep.subr.mxu0 0.0
    %2573 = vmatpush1.msra.mxu0 %v756
    %2574 = vmatprep.subr.mxu0 0.0
    %2575 = vmatpush1.msra.mxu0 %v757
    %2576 = vmatprep.subr.mxu0 0.0
    %2577 = vmatpush1.msra.mxu0 %v758
    %2578 = vmatprep.subr.mxu0 0.0
    %2579 = vmatpush1.msra.mxu0 %v759
    %2580 = vmatprep.subr.mxu0 0.0
    %2581 = vmatpush1.msra.mxu0 %v760
    %2582 = vmatprep.subr.mxu0 0.0
    %2583 = vmatpush1.msra.mxu0 %v761
    %2584 = vmatprep.subr.mxu0 0.0
    %2585 = vmatpush1.msra.mxu0 %v762
    %2586 = vmatprep.mubr.f32.mxu0 %v68
    %2587 = vmatmul.mubr.f32.gmra.mrb[0].mxu0 %v67
    %v2588 = vpop.f32.mrb[0].mxu0
    %v2589 = vadd.f32 %v2519, %v2588
    %v2590 = vpop.f32.mrb[0].mxu0
    %2591 = vdwg.mxu0
    %2592 = vmatprep.subr.mxu0 0.0
    %2593 = vmatpush1.msra.mxu0 %v763
    %2594 = vmatprep.subr.mxu0 0.0
    %2595 = vmatpush1.msra.mxu0 %v764
    %2596 = vmatprep.subr.mxu0 0.0
    %2597 = vmatpush1.msra.mxu0 %v765
    %2598 = vmatprep.subr.mxu0 0.0
    %2599 = vmatpush1.msra.mxu0 %v766
    %2600 = vmatprep.subr.mxu0 0.0
    %2601 = vmatpush1.msra.mxu0 %v767
    %2602 = vmatprep.subr.mxu0 0.0
    %2603 = vmatpush1.msra.mxu0 %v768
    %2604 = vmatprep.subr.mxu0 0.0
    %2605 = vmatpush1.msra.mxu0 %v769
    %2606 = vmatprep.subr.mxu0 0.0
    %2607 = vmatpush1.msra.mxu0 %v770
    %2608 = vmatprep.subr.mxu0 0.0
    %2609 = vmatpush1.msra.mxu0 %v771
    %2610 = vmatprep.subr.mxu0 0.0
    %2611 = vmatpush1.msra.mxu0 %v772
    %2612 = vmatprep.subr.mxu0 0.0
    %2613 = vmatpush1.msra.mxu0 %v773
    %2614 = vmatprep.subr.mxu0 0.0
    %2615 = vmatpush1.msra.mxu0 %v774
    %2616 = vmatprep.subr.mxu0 0.0
    %2617 = vmatpush1.msra.mxu0 %v775
    %2618 = vmatprep.subr.mxu0 0.0
    %2619 = vmatpush1.msra.mxu0 %v776
    %2620 = vmatprep.subr.mxu0 0.0
    %2621 = vmatpush1.msra.mxu0 %v777
    %2622 = vmatprep.subr.mxu0 0.0
    %2623 = vmatpush1.msra.mxu0 %v778
    %2624 = vmatprep.subr.mxu0 0.0
    %2625 = vmatpush1.msra.mxu0 %v779
    %2626 = vmatprep.subr.mxu0 0.0
    %2627 = vmatpush1.msra.mxu0 %v780
    %2628 = vmatprep.subr.mxu0 0.0
    %2629 = vmatpush1.msra.mxu0 %v781
    %2630 = vmatprep.subr.mxu0 0.0
    %2631 = vmatpush1.msra.mxu0 %v782
    %2632 = vmatprep.subr.mxu0 0.0
    %2633 = vmatpush1.msra.mxu0 %v783
    %2634 = vmatprep.subr.mxu0 0.0
    %2635 = vmatpush1.msra.mxu0 %v784
    %2636 = vmatprep.subr.mxu0 0.0
    %2637 = vmatpush1.msra.mxu0 %v785
    %2638 = vmatprep.subr.mxu0 0.0
    %2639 = vmatpush1.msra.mxu0 %v786
    %2640 = vmatprep.subr.mxu0 0.0
    %2641 = vmatpush1.msra.mxu0 %v787
    %2642 = vmatprep.subr.mxu0 0.0
    %2643 = vmatpush1.msra.mxu0 %v788
    %2644 = vmatprep.subr.mxu0 0.0
    %2645 = vmatpush1.msra.mxu0 %v789
    %2646 = vmatprep.subr.mxu0 0.0
    %2647 = vmatpush1.msra.mxu0 %v790
    %2648 = vmatprep.subr.mxu0 0.0
    %2649 = vmatpush1.msra.mxu0 %v791
    %2650 = vmatprep.subr.mxu0 0.0
    %2651 = vmatpush1.msra.mxu0 %v792
    %2652 = vmatprep.subr.mxu0 0.0
    %2653 = vmatpush1.msra.mxu0 %v793
    %2654 = vmatprep.subr.mxu0 0.0
    %2655 = vmatpush1.msra.mxu0 %v794
    %2656 = vmatprep.mubr.f32.mxu0 %v70
    %2657 = vmatmul.mubr.f32.gmra.mrb[0].mxu0 %v69
    %v2658 = vpop.f32.mrb[0].mxu0
    %v2659 = vadd.f32 %v2589, %v2658
    %v2660 = vpop.f32.mrb[0].mxu0
    %2661 = vdwg.mxu0
    %2662 = vmatprep.subr.mxu0 0.0
    %2663 = vmatpush1.msra.mxu0 %v795
    %2664 = vmatprep.subr.mxu0 0.0
    %2665 = vmatpush1.msra.mxu0 %v796
    %2666 = vmatprep.subr.mxu0 0.0
    %2667 = vmatpush1.msra.mxu0 %v797
    %2668 = vmatprep.subr.mxu0 0.0
    %2669 = vmatpush1.msra.mxu0 %v798
    %2670 = vmatprep.subr.mxu0 0.0
    %2671 = vmatpush1.msra.mxu0 %v799
    %2672 = vmatprep.subr.mxu0 0.0
    %2673 = vmatpush1.msra.mxu0 %v800
    %2674 = vmatprep.subr.mxu0 0.0
    %2675 = vmatpush1.msra.mxu0 %v801
    %2676 = vmatprep.subr.mxu0 0.0
    %2677 = vmatpush1.msra.mxu0 %v802
    %2678 = vmatprep.subr.mxu0 0.0
    %2679 = vmatpush1.msra.mxu0 %v803
    %2680 = vmatprep.subr.mxu0 0.0
    %2681 = vmatpush1.msra.mxu0 %v804
    %2682 = vmatprep.subr.mxu0 0.0
    %2683 = vmatpush1.msra.mxu0 %v805
    %2684 = vmatprep.subr.mxu0 0.0
    %2685 = vmatpush1.msra.mxu0 %v806
    %2686 = vmatprep.subr.mxu0 0.0
    %2687 = vmatpush1.msra.mxu0 %v807
    %2688 = vmatprep.subr.mxu0 0.0
    %2689 = vmatpush1.msra.mxu0 %v808
    %2690 = vmatprep.subr.mxu0 0.0
    %2691 = vmatpush1.msra.mxu0 %v809
    %2692 = vmatprep.subr.mxu0 0.0
    %2693 = vmatpush1.msra.mxu0 %v810
    %2694 = vmatprep.subr.mxu0 0.0
    %2695 = vmatpush1.msra.mxu0 %v811
    %2696 = vmatprep.subr.mxu0 0.0
    %2697 = vmatpush1.msra.mxu0 %v812
    %2698 = vmatprep.subr.mxu0 0.0
    %2699 = vmatpush1.msra.mxu0 %v813
    %2700 = vmatprep.subr.mxu0 0.0
    %2701 = vmatpush1.msra.mxu0 %v814
    %2702 = vmatprep.subr.mxu0 0.0
    %2703 = vmatpush1.msra.mxu0 %v815
    %2704 = vmatprep.subr.mxu0 0.0
    %2705 = vmatpush1.msra.mxu0 %v816
    %2706 = vmatprep.subr.mxu0 0.0
    %2707 = vmatpush1.msra.mxu0 %v817
    %2708 = vmatprep.subr.mxu0 0.0
    %2709 = vmatpush1.msra.mxu0 %v818
    %2710 = vmatprep.subr.mxu0 0.0
    %2711 = vmatpush1.msra.mxu0 %v819
    %2712 = vmatprep.subr.mxu0 0.0
    %2713 = vmatpush1.msra.mxu0 %v820
    %2714 = vmatprep.subr.mxu0 0.0
    %2715 = vmatpush1.msra.mxu0 %v821
    %2716 = vmatprep.subr.mxu0 0.0
    %2717 = vmatpush1.msra.mxu0 %v822
    %2718 = vmatprep.subr.mxu0 0.0
    %2719 = vmatpush1.msra.mxu0 %v823
    %2720 = vmatprep.subr.mxu0 0.0
    %2721 = vmatpush1.msra.mxu0 %v824
    %2722 = vmatprep.subr.mxu0 0.0
    %2723 = vmatpush1.msra.mxu0 %v825
    %2724 = vmatprep.subr.mxu0 0.0
    %2725 = vmatpush1.msra.mxu0 %v826
    %2726 = vmatprep.mubr.f32.mxu0 %v72
    %2727 = vmatmul.mubr.f32.gmra.mrb[0].mxu0 %v71
    %v2728 = vpop.f32.mrb[0].mxu0
    %v2729 = vadd.f32 %v2659, %v2728
    %v2730 = vpop.f32.mrb[0].mxu0
    %2731 = vdwg.mxu0
    %2732 = vmatprep.subr.mxu0 0.0
    %2733 = vmatpush1.msra.mxu0 %v827
    %2734 = vmatprep.subr.mxu0 0.0
    %2735 = vmatpush1.msra.mxu0 %v828
    %2736 = vmatprep.subr.mxu0 0.0
    %2737 = vmatpush1.msra.mxu0 %v829
    %2738 = vmatprep.subr.mxu0 0.0
    %2739 = vmatpush1.msra.mxu0 %v830
    %2740 = vmatprep.subr.mxu0 0.0
    %2741 = vmatpush1.msra.mxu0 %v831
    %2742 = vmatprep.subr.mxu0 0.0
    %2743 = vmatpush1.msra.mxu0 %v832
    %2744 = vmatprep.subr.mxu0 0.0
    %2745 = vmatpush1.msra.mxu0 %v833
    %2746 = vmatprep.subr.mxu0 0.0
    %2747 = vmatpush1.msra.mxu0 %v834
    %2748 = vmatprep.subr.mxu0 0.0
    %2749 = vmatpush1.msra.mxu0 %v835
    %2750 = vmatprep.subr.mxu0 0.0
    %2751 = vmatpush1.msra.mxu0 %v836
    %2752 = vmatprep.subr.mxu0 0.0
    %2753 = vmatpush1.msra.mxu0 %v837
    %2754 = vmatprep.subr.mxu0 0.0
    %2755 = vmatpush1.msra.mxu0 %v838
    %2756 = vmatprep.subr.mxu0 0.0
    %2757 = vmatpush1.msra.mxu0 %v839
    %2758 = vmatprep.subr.mxu0 0.0
    %2759 = vmatpush1.msra.mxu0 %v840
    %2760 = vmatprep.subr.mxu0 0.0
    %2761 = vmatpush1.msra.mxu0 %v841
    %2762 = vmatprep.subr.mxu0 0.0
    %2763 = vmatpush1.msra.mxu0 %v842
    %2764 = vmatprep.subr.mxu0 0.0
    %2765 = vmatpush1.msra.mxu0 %v843
    %2766 = vmatprep.subr.mxu0 0.0
    %2767 = vmatpush1.msra.mxu0 %v844
    %2768 = vmatprep.subr.mxu0 0.0
    %2769 = vmatpush1.msra.mxu0 %v845
    %2770 = vmatprep.subr.mxu0 0.0
    %2771 = vmatpush1.msra.mxu0 %v846
    %2772 = vmatprep.subr.mxu0 0.0
    %2773 = vmatpush1.msra.mxu0 %v847
    %2774 = vmatprep.subr.mxu0 0.0
    %2775 = vmatpush1.msra.mxu0 %v848
    %2776 = vmatprep.subr.mxu0 0.0
    %2777 = vmatpush1.msra.mxu0 %v849
    %2778 = vmatprep.subr.mxu0 0.0
    %2779 = vmatpush1.msra.mxu0 %v850
    %2780 = vmatprep.subr.mxu0 0.0
    %2781 = vmatpush1.msra.mxu0 %v851
    %2782 = vmatprep.subr.mxu0 0.0
    %2783 = vmatpush1.msra.mxu0 %v852
    %2784 = vmatprep.subr.mxu0 0.0
    %2785 = vmatpush1.msra.mxu0 %v853
    %2786 = vmatprep.subr.mxu0 0.0
    %2787 = vmatpush1.msra.mxu0 %v854
    %2788 = vmatprep.subr.mxu0 0.0
    %2789 = vmatpush1.msra.mxu0 %v855
    %2790 = vmatprep.subr.mxu0 0.0
    %2791 = vmatpush1.msra.mxu0 %v856
    %2792 = vmatprep.subr.mxu0 0.0
    %2793 = vmatpush1.msra.mxu0 %v857
    %2794 = vmatprep.subr.mxu0 0.0
    %2795 = vmatpush1.msra.mxu0 %v858
    %2796 = vmatprep.mubr.f32.mxu0 %v74
    %2797 = vmatmul.mubr.f32.gmra.mrb[0].mxu0 %v73
    %v2798 = vpop.f32.mrb[0].mxu0
    %v2799 = vadd.f32 %v2729, %v2798
    %v2800 = vpop.f32.mrb[0].mxu0
    %2801 = vdwg.mxu0
    %2802 = vmatprep.subr.mxu0 0.0
    %2803 = vmatpush1.msra.mxu0 %v859
    %2804 = vmatprep.subr.mxu0 0.0
    %2805 = vmatpush1.msra.mxu0 %v860
    %2806 = vmatprep.subr.mxu0 0.0
    %2807 = vmatpush1.msra.mxu0 %v861
    %2808 = vmatprep.subr.mxu0 0.0
    %2809 = vmatpush1.msra.mxu0 %v862
    %2810 = vmatprep.subr.mxu0 0.0
    %2811 = vmatpush1.msra.mxu0 %v863
    %2812 = vmatprep.subr.mxu0 0.0
    %2813 = vmatpush1.msra.mxu0 %v864
    %2814 = vmatprep.subr.mxu0 0.0
    %2815 = vmatpush1.msra.mxu0 %v865
    %2816 = vmatprep.subr.mxu0 0.0
    %2817 = vmatpush1.msra.mxu0 %v866
    %2818 = vmatprep.subr.mxu0 0.0
    %2819 = vmatpush1.msra.mxu0 %v867
    %2820 = vmatprep.subr.mxu0 0.0
    %2821 = vmatpush1.msra.mxu0 %v868
    %2822 = vmatprep.subr.mxu0 0.0
    %2823 = vmatpush1.msra.mxu0 %v869
    %2824 = vmatprep.subr.mxu0 0.0
    %2825 = vmatpush1.msra.mxu0 %v870
    %2826 = vmatprep.subr.mxu0 0.0
    %2827 = vmatpush1.msra.mxu0 %v871
    %2828 = vmatprep.subr.mxu0 0.0
    %2829 = vmatpush1.msra.mxu0 %v872
    %2830 = vmatprep.subr.mxu0 0.0
    %2831 = vmatpush1.msra.mxu0 %v873
    %2832 = vmatprep.subr.mxu0 0.0
    %2833 = vmatpush1.msra.mxu0 %v874
    %2834 = vmatprep.subr.mxu0 0.0
    %2835 = vmatpush1.msra.mxu0 %v875
    %2836 = vmatprep.subr.mxu0 0.0
    %2837 = vmatpush1.msra.mxu0 %v876
    %2838 = vmatprep.subr.mxu0 0.0
    %2839 = vmatpush1.msra.mxu0 %v877
    %2840 = vmatprep.subr.mxu0 0.0
    %2841 = vmatpush1.msra.mxu0 %v878
    %2842 = vmatprep.subr.mxu0 0.0
    %2843 = vmatpush1.msra.mxu0 %v879
    %2844 = vmatprep.subr.mxu0 0.0
    %2845 = vmatpush1.msra.mxu0 %v880
    %2846 = vmatprep.subr.mxu0 0.0
    %2847 = vmatpush1.msra.mxu0 %v881
    %2848 = vmatprep.subr.mxu0 0.0
    %2849 = vmatpush1.msra.mxu0 %v882
    %2850 = vmatprep.subr.mxu0 0.0
    %2851 = vmatpush1.msra.mxu0 %v883
    %2852 = vmatprep.subr.mxu0 0.0
    %2853 = vmatpush1.msra.mxu0 %v884
    %2854 = vmatprep.subr.mxu0 0.0
    %2855 = vmatpush1.msra.mxu0 %v885
    %2856 = vmatprep.subr.mxu0 0.0
    %2857 = vmatpush1.msra.mxu0 %v886
    %2858 = vmatprep.subr.mxu0 0.0
    %2859 = vmatpush1.msra.mxu0 %v887
    %2860 = vmatprep.subr.mxu0 0.0
    %2861 = vmatpush1.msra.mxu0 %v888
    %2862 = vmatprep.subr.mxu0 0.0
    %2863 = vmatpush1.msra.mxu0 %v889
    %2864 = vmatprep.subr.mxu0 0.0
    %2865 = vmatpush1.msra.mxu0 %v890
    %2866 = vmatprep.mubr.f32.mxu0 %v76
    %2867 = vmatmul.mubr.f32.gmra.mrb[0].mxu0 %v75
    %v2868 = vpop.f32.mrb[0].mxu0
    %v2869 = vadd.f32 %v2799, %v2868
    %v2870 = vpop.f32.mrb[0].mxu0
    %2871 = vdwg.mxu0
    %2872 = vmatprep.subr.mxu0 0.0
    %2873 = vmatpush1.msra.mxu0 %v891
    %2874 = vmatprep.subr.mxu0 0.0
    %2875 = vmatpush1.msra.mxu0 %v892
    %2876 = vmatprep.subr.mxu0 0.0
    %2877 = vmatpush1.msra.mxu0 %v893
    %2878 = vmatprep.subr.mxu0 0.0
    %2879 = vmatpush1.msra.mxu0 %v894
    %2880 = vmatprep.subr.mxu0 0.0
    %2881 = vmatpush1.msra.mxu0 %v895
    %2882 = vmatprep.subr.mxu0 0.0
    %2883 = vmatpush1.msra.mxu0 %v896
    %2884 = vmatprep.subr.mxu0 0.0
    %2885 = vmatpush1.msra.mxu0 %v897
    %2886 = vmatprep.subr.mxu0 0.0
    %2887 = vmatpush1.msra.mxu0 %v898
    %2888 = vmatprep.subr.mxu0 0.0
    %2889 = vmatpush1.msra.mxu0 %v899
    %2890 = vmatprep.subr.mxu0 0.0
    %2891 = vmatpush1.msra.mxu0 %v900
    %2892 = vmatprep.subr.mxu0 0.0
    %2893 = vmatpush1.msra.mxu0 %v901
    %2894 = vmatprep.subr.mxu0 0.0
    %2895 = vmatpush1.msra.mxu0 %v902
    %2896 = vmatprep.subr.mxu0 0.0
    %2897 = vmatpush1.msra.mxu0 %v903
    %2898 = vmatprep.subr.mxu0 0.0
    %2899 = vmatpush1.msra.mxu0 %v904
    %2900 = vmatprep.subr.mxu0 0.0
    %2901 = vmatpush1.msra.mxu0 %v905
    %2902 = vmatprep.subr.mxu0 0.0
    %2903 = vmatpush1.msra.mxu0 %v906
    %2904 = vmatprep.subr.mxu0 0.0
    %2905 = vmatpush1.msra.mxu0 %v907
    %2906 = vmatprep.subr.mxu0 0.0
    %2907 = vmatpush1.msra.mxu0 %v908
    %2908 = vmatprep.subr.mxu0 0.0
    %2909 = vmatpush1.msra.mxu0 %v909
    %2910 = vmatprep.subr.mxu0 0.0
    %2911 = vmatpush1.msra.mxu0 %v910
    %2912 = vmatprep.subr.mxu0 0.0
    %2913 = vmatpush1.msra.mxu0 %v911
    %2914 = vmatprep.subr.mxu0 0.0
    %2915 = vmatpush1.msra.mxu0 %v912
    %2916 = vmatprep.subr.mxu0 0.0
    %2917 = vmatpush1.msra.mxu0 %v913
    %2918 = vmatprep.subr.mxu0 0.0
    %2919 = vmatpush1.msra.mxu0 %v914
    %2920 = vmatprep.subr.mxu0 0.0
    %2921 = vmatpush1.msra.mxu0 %v915
    %2922 = vmatprep.subr.mxu0 0.0
    %2923 = vmatpush1.msra.mxu0 %v916
    %2924 = vmatprep.subr.mxu0 0.0
    %2925 = vmatpush1.msra.mxu0 %v917
    %2926 = vmatprep.subr.mxu0 0.0
    %2927 = vmatpush1.msra.mxu0 %v918
    %2928 = vmatprep.subr.mxu0 0.0
    %2929 = vmatpush1.msra.mxu0 %v919
    %2930 = vmatprep.subr.mxu0 0.0
    %2931 = vmatpush1.msra.mxu0 %v920
    %2932 = vmatprep.subr.mxu0 0.0
    %2933 = vmatpush1.msra.mxu0 %v921
    %2934 = vmatprep.subr.mxu0 0.0
    %2935 = vmatpush1.msra.mxu0 %v922
    %2936 = vmatprep.mubr.f32.mxu0 %v78
    %2937 = vmatmul.mubr.f32.gmra.mrb[0].mxu0 %v77
    %v2938 = vpop.f32.mrb[0].mxu0
    %v2939 = vadd.f32 %v2869, %v2938
    %v2940 = vpop.f32.mrb[0].mxu0
    %2941 = vdwg.mxu0
    %2942 = vmatprep.subr.mxu0 0.0
    %2943 = vmatpush1.msra.mxu0 %v923
    %2944 = vmatprep.subr.mxu0 0.0
    %2945 = vmatpush1.msra.mxu0 %v924
    %2946 = vmatprep.subr.mxu0 0.0
    %2947 = vmatpush1.msra.mxu0 %v925
    %2948 = vmatprep.subr.mxu0 0.0
    %2949 = vmatpush1.msra.mxu0 %v926
    %2950 = vmatprep.subr.mxu0 0.0
    %2951 = vmatpush1.msra.mxu0 %v927
    %2952 = vmatprep.subr.mxu0 0.0
    %2953 = vmatpush1.msra.mxu0 %v928
    %2954 = vmatprep.subr.mxu0 0.0
    %2955 = vmatpush1.msra.mxu0 %v929
    %2956 = vmatprep.subr.mxu0 0.0
    %2957 = vmatpush1.msra.mxu0 %v930
    %2958 = vmatprep.subr.mxu0 0.0
    %2959 = vmatpush1.msra.mxu0 %v931
    %2960 = vmatprep.subr.mxu0 0.0
    %2961 = vmatpush1.msra.mxu0 %v932
    %2962 = vmatprep.subr.mxu0 0.0
    %2963 = vmatpush1.msra.mxu0 %v933
    %2964 = vmatprep.subr.mxu0 0.0
    %2965 = vmatpush1.msra.mxu0 %v934
    %2966 = vmatprep.subr.mxu0 0.0
    %2967 = vmatpush1.msra.mxu0 %v935
    %2968 = vmatprep.subr.mxu0 0.0
    %2969 = vmatpush1.msra.mxu0 %v936
    %2970 = vmatprep.subr.mxu0 0.0
    %2971 = vmatpush1.msra.mxu0 %v937
    %2972 = vmatprep.subr.mxu0 0.0
    %2973 = vmatpush1.msra.mxu0 %v938
    %2974 = vmatprep.subr.mxu0 0.0
    %2975 = vmatpush1.msra.mxu0 %v939
    %2976 = vmatprep.subr.mxu0 0.0
    %2977 = vmatpush1.msra.mxu0 %v940
    %2978 = vmatprep.subr.mxu0 0.0
    %2979 = vmatpush1.msra.mxu0 %v941
    %2980 = vmatprep.subr.mxu0 0.0
    %2981 = vmatpush1.msra.mxu0 %v942
    %2982 = vmatprep.subr.mxu0 0.0
    %2983 = vmatpush1.msra.mxu0 %v943
    %2984 = vmatprep.subr.mxu0 0.0
    %2985 = vmatpush1.msra.mxu0 %v944
    %2986 = vmatprep.subr.mxu0 0.0
    %2987 = vmatpush1.msra.mxu0 %v945
    %2988 = vmatprep.subr.mxu0 0.0
    %2989 = vmatpush1.msra.mxu0 %v946
    %2990 = vmatprep.subr.mxu0 0.0
    %2991 = vmatpush1.msra.mxu0 %v947
    %2992 = vmatprep.subr.mxu0 0.0
    %2993 = vmatpush1.msra.mxu0 %v948
    %2994 = vmatprep.subr.mxu0 0.0
    %2995 = vmatpush1.msra.mxu0 %v949
    %2996 = vmatprep.subr.mxu0 0.0
    %2997 = vmatpush1.msra.mxu0 %v950
    %2998 = vmatprep.subr.mxu0 0.0
    %2999 = vmatpush1.msra.mxu0 %v951
    %3000 = vmatprep.subr.mxu0 0.0
    %3001 = vmatpush1.msra.mxu0 %v952
    %3002 = vmatprep.subr.mxu0 0.0
    %3003 = vmatpush1.msra.mxu0 %v953
    %3004 = vmatprep.subr.mxu0 0.0
    %3005 = vmatpush1.msra.mxu0 %v954
    %3006 = vmatprep.mubr.f32.mxu0 %v80
    %3007 = vmatmul.mubr.f32.gmra.mrb[0].mxu0 %v79
    %v3008 = vpop.f32.mrb[0].mxu0
    %v3009 = vadd.f32 %v2939, %v3008
    %v3010 = vpop.f32.mrb[0].mxu0
    %3011 = vdwg.mxu0
    %3012 = vmatprep.subr.mxu0 0.0
    %3013 = vmatpush1.msra.mxu0 %v955
    %3014 = vmatprep.subr.mxu0 0.0
    %3015 = vmatpush1.msra.mxu0 %v956
    %3016 = vmatprep.subr.mxu0 0.0
    %3017 = vmatpush1.msra.mxu0 %v957
    %3018 = vmatprep.subr.mxu0 0.0
    %3019 = vmatpush1.msra.mxu0 %v958
    %3020 = vmatprep.subr.mxu0 0.0
    %3021 = vmatpush1.msra.mxu0 %v959
    %3022 = vmatprep.subr.mxu0 0.0
    %3023 = vmatpush1.msra.mxu0 %v960
    %3024 = vmatprep.subr.mxu0 0.0
    %3025 = vmatpush1.msra.mxu0 %v961
    %3026 = vmatprep.subr.mxu0 0.0
    %3027 = vmatpush1.msra.mxu0 %v962
    %3028 = vmatprep.subr.mxu0 0.0
    %3029 = vmatpush1.msra.mxu0 %v963
    %3030 = vmatprep.subr.mxu0 0.0
    %3031 = vmatpush1.msra.mxu0 %v964
    %3032 = vmatprep.subr.mxu0 0.0
    %3033 = vmatpush1.msra.mxu0 %v965
    %3034 = vmatprep.subr.mxu0 0.0
    %3035 = vmatpush1.msra.mxu0 %v966
    %3036 = vmatprep.subr.mxu0 0.0
    %3037 = vmatpush1.msra.mxu0 %v967
    %3038 = vmatprep.subr.mxu0 0.0
    %3039 = vmatpush1.msra.mxu0 %v968
    %3040 = vmatprep.subr.mxu0 0.0
    %3041 = vmatpush1.msra.mxu0 %v969
    %3042 = vmatprep.subr.mxu0 0.0
    %3043 = vmatpush1.msra.mxu0 %v970
    %3044 = vmatprep.subr.mxu0 0.0
    %3045 = vmatpush1.msra.mxu0 %v971
    %3046 = vmatprep.subr.mxu0 0.0
    %3047 = vmatpush1.msra.mxu0 %v972
    %3048 = vmatprep.subr.mxu0 0.0
    %3049 = vmatpush1.msra.mxu0 %v973
    %3050 = vmatprep.subr.mxu0 0.0
    %3051 = vmatpush1.msra.mxu0 %v974
    %3052 = vmatprep.subr.mxu0 0.0
    %3053 = vmatpush1.msra.mxu0 %v975
    %3054 = vmatprep.subr.mxu0 0.0
    %3055 = vmatpush1.msra.mxu0 %v976
    %3056 = vmatprep.subr.mxu0 0.0
    %3057 = vmatpush1.msra.mxu0 %v977
    %3058 = vmatprep.subr.mxu0 0.0
    %3059 = vmatpush1.msra.mxu0 %v978
    %3060 = vmatprep.subr.mxu0 0.0
    %3061 = vmatpush1.msra.mxu0 %v979
    %3062 = vmatprep.subr.mxu0 0.0
    %3063 = vmatpush1.msra.mxu0 %v980
    %3064 = vmatprep.subr.mxu0 0.0
    %3065 = vmatpush1.msra.mxu0 %v981
    %3066 = vmatprep.subr.mxu0 0.0
    %3067 = vmatpush1.msra.mxu0 %v982
    %3068 = vmatprep.subr.mxu0 0.0
    %3069 = vmatpush1.msra.mxu0 %v983
    %3070 = vmatprep.subr.mxu0 0.0
    %3071 = vmatpush1.msra.mxu0 %v984
    %3072 = vmatprep.subr.mxu0 0.0
    %3073 = vmatpush1.msra.mxu0 %v985
    %3074 = vmatprep.subr.mxu0 0.0
    %3075 = vmatpush1.msra.mxu0 %v986
    %3076 = vmatprep.mubr.f32.mxu0 %v82
    %3077 = vmatmul.mubr.f32.gmra.mrb[0].mxu0 %v81
    %v3078 = vpop.f32.mrb[0].mxu0
    %v3079 = vadd.f32 %v3009, %v3078
    %v3080 = vpop.f32.mrb[0].mxu0
    %3081 = vdwg.mxu0
    %3082 = vmatprep.subr.mxu0 0.0
    %3083 = vmatpush1.msra.mxu0 %v987
    %3084 = vmatprep.subr.mxu0 0.0
    %3085 = vmatpush1.msra.mxu0 %v988
    %3086 = vmatprep.subr.mxu0 0.0
    %3087 = vmatpush1.msra.mxu0 %v989
    %3088 = vmatprep.subr.mxu0 0.0
    %3089 = vmatpush1.msra.mxu0 %v990
    %3090 = vmatprep.subr.mxu0 0.0
    %3091 = vmatpush1.msra.mxu0 %v991
    %3092 = vmatprep.subr.mxu0 0.0
    %3093 = vmatpush1.msra.mxu0 %v992
    %3094 = vmatprep.subr.mxu0 0.0
    %3095 = vmatpush1.msra.mxu0 %v993
    %3096 = vmatprep.subr.mxu0 0.0
    %3097 = vmatpush1.msra.mxu0 %v994
    %3098 = vmatprep.subr.mxu0 0.0
    %3099 = vmatpush1.msra.mxu0 %v995
    %3100 = vmatprep.subr.mxu0 0.0
    %3101 = vmatpush1.msra.mxu0 %v996
    %3102 = vmatprep.subr.mxu0 0.0
    %3103 = vmatpush1.msra.mxu0 %v997
    %3104 = vmatprep.subr.mxu0 0.0
    %3105 = vmatpush1.msra.mxu0 %v998
    %3106 = vmatprep.subr.mxu0 0.0
    %3107 = vmatpush1.msra.mxu0 %v999
    %3108 = vmatprep.subr.mxu0 0.0
    %3109 = vmatpush1.msra.mxu0 %v1000
    %3110 = vmatprep.subr.mxu0 0.0
    %3111 = vmatpush1.msra.mxu0 %v1001
    %3112 = vmatprep.subr.mxu0 0.0
    %3113 = vmatpush1.msra.mxu0 %v1002
    %3114 = vmatprep.subr.mxu0 0.0
    %3115 = vmatpush1.msra.mxu0 %v1003
    %3116 = vmatprep.subr.mxu0 0.0
    %3117 = vmatpush1.msra.mxu0 %v1004
    %3118 = vmatprep.subr.mxu0 0.0
    %3119 = vmatpush1.msra.mxu0 %v1005
    %3120 = vmatprep.subr.mxu0 0.0
    %3121 = vmatpush1.msra.mxu0 %v1006
    %3122 = vmatprep.subr.mxu0 0.0
    %3123 = vmatpush1.msra.mxu0 %v1007
    %3124 = vmatprep.subr.mxu0 0.0
    %3125 = vmatpush1.msra.mxu0 %v1008
    %3126 = vmatprep.subr.mxu0 0.0
    %3127 = vmatpush1.msra.mxu0 %v1009
    %3128 = vmatprep.subr.mxu0 0.0
    %3129 = vmatpush1.msra.mxu0 %v1010
    %3130 = vmatprep.subr.mxu0 0.0
    %3131 = vmatpush1.msra.mxu0 %v1011
    %3132 = vmatprep.subr.mxu0 0.0
    %3133 = vmatpush1.msra.mxu0 %v1012
    %3134 = vmatprep.subr.mxu0 0.0
    %3135 = vmatpush1.msra.mxu0 %v1013
    %3136 = vmatprep.subr.mxu0 0.0
    %3137 = vmatpush1.msra.mxu0 %v1014
    %3138 = vmatprep.subr.mxu0 0.0
    %3139 = vmatpush1.msra.mxu0 %v1015
    %3140 = vmatprep.subr.mxu0 0.0
    %3141 = vmatpush1.msra.mxu0 %v1016
    %3142 = vmatprep.subr.mxu0 0.0
    %3143 = vmatpush1.msra.mxu0 %v1017
    %3144 = vmatprep.subr.mxu0 0.0
    %3145 = vmatpush1.msra.mxu0 %v1018
    %3146 = vmatprep.mubr.f32.mxu0 %v84
    %3147 = vmatmul.mubr.f32.gmra.mrb[0].mxu0 %v83
    %v3148 = vpop.f32.mrb[0].mxu0
    %v3149 = vadd.f32 %v3079, %v3148
    %v3150 = vpop.f32.mrb[0].mxu0
    %3151 = vdwg.mxu0
    %3152 = vmatprep.subr.mxu0 0.0
    %3153 = vmatpush1.msra.mxu0 %v1019
    %3154 = vmatprep.subr.mxu0 0.0
    %3155 = vmatpush1.msra.mxu0 %v1020
    %3156 = vmatprep.subr.mxu0 0.0
    %3157 = vmatpush1.msra.mxu0 %v1021
    %3158 = vmatprep.subr.mxu0 0.0
    %3159 = vmatpush1.msra.mxu0 %v1022
    %3160 = vmatprep.subr.mxu0 0.0
    %3161 = vmatpush1.msra.mxu0 %v1023
    %3162 = vmatprep.subr.mxu0 0.0
    %3163 = vmatpush1.msra.mxu0 %v1024
    %3164 = vmatprep.subr.mxu0 0.0
    %3165 = vmatpush1.msra.mxu0 %v1025
    %3166 = vmatprep.subr.mxu0 0.0
    %3167 = vmatpush1.msra.mxu0 %v1026
    %3168 = vmatprep.subr.mxu0 0.0
    %3169 = vmatpush1.msra.mxu0 %v1027
    %3170 = vmatprep.subr.mxu0 0.0
    %3171 = vmatpush1.msra.mxu0 %v1028
    %3172 = vmatprep.subr.mxu0 0.0
    %3173 = vmatpush1.msra.mxu0 %v1029
    %3174 = vmatprep.subr.mxu0 0.0
    %3175 = vmatpush1.msra.mxu0 %v1030
    %3176 = vmatprep.subr.mxu0 0.0
    %3177 = vmatpush1.msra.mxu0 %v1031
    %3178 = vmatprep.subr.mxu0 0.0
    %3179 = vmatpush1.msra.mxu0 %v1032
    %3180 = vmatprep.subr.mxu0 0.0
    %3181 = vmatpush1.msra.mxu0 %v1033
    %3182 = vmatprep.subr.mxu0 0.0
    %3183 = vmatpush1.msra.mxu0 %v1034
    %3184 = vmatprep.subr.mxu0 0.0
    %3185 = vmatpush1.msra.mxu0 %v1035
    %3186 = vmatprep.subr.mxu0 0.0
    %3187 = vmatpush1.msra.mxu0 %v1036
    %3188 = vmatprep.subr.mxu0 0.0
    %3189 = vmatpush1.msra.mxu0 %v1037
    %3190 = vmatprep.subr.mxu0 0.0
    %3191 = vmatpush1.msra.mxu0 %v1038
    %3192 = vmatprep.subr.mxu0 0.0
    %3193 = vmatpush1.msra.mxu0 %v1039
    %3194 = vmatprep.subr.mxu0 0.0
    %3195 = vmatpush1.msra.mxu0 %v1040
    %3196 = vmatprep.subr.mxu0 0.0
    %3197 = vmatpush1.msra.mxu0 %v1041
    %3198 = vmatprep.subr.mxu0 0.0
    %3199 = vmatpush1.msra.mxu0 %v1042
    %3200 = vmatprep.subr.mxu0 0.0
    %3201 = vmatpush1.msra.mxu0 %v1043
    %3202 = vmatprep.subr.mxu0 0.0
    %3203 = vmatpush1.msra.mxu0 %v1044
    %3204 = vmatprep.subr.mxu0 0.0
    %3205 = vmatpush1.msra.mxu0 %v1045
    %3206 = vmatprep.subr.mxu0 0.0
    %3207 = vmatpush1.msra.mxu0 %v1046
    %3208 = vmatprep.subr.mxu0 0.0
    %3209 = vmatpush1.msra.mxu0 %v1047
    %3210 = vmatprep.subr.mxu0 0.0
    %3211 = vmatpush1.msra.mxu0 %v1048
    %3212 = vmatprep.subr.mxu0 0.0
    %3213 = vmatpush1.msra.mxu0 %v1049
    %3214 = vmatprep.subr.mxu0 0.0
    %3215 = vmatpush1.msra.mxu0 %v1050
    %3216 = vmatprep.mubr.f32.mxu0 %v86
    %3217 = vmatmul.mubr.f32.gmra.mrb[0].mxu0 %v85
    %v3218 = vpop.f32.mrb[0].mxu0
    %v3219 = vadd.f32 %v3149, %v3218
    %v3220 = vpop.f32.mrb[0].mxu0
    %3221 = vdwg.mxu0
    %3222 = vmatprep.subr.mxu0 0.0
    %3223 = vmatpush1.msra.mxu0 %v1051
    %3224 = vmatprep.subr.mxu0 0.0
    %3225 = vmatpush1.msra.mxu0 %v1052
    %3226 = vmatprep.subr.mxu0 0.0
    %3227 = vmatpush1.msra.mxu0 %v1053
    %3228 = vmatprep.subr.mxu0 0.0
    %3229 = vmatpush1.msra.mxu0 %v1054
    %3230 = vmatprep.subr.mxu0 0.0
    %3231 = vmatpush1.msra.mxu0 %v1055
    %3232 = vmatprep.subr.mxu0 0.0
    %3233 = vmatpush1.msra.mxu0 %v1056
    %3234 = vmatprep.subr.mxu0 0.0
    %3235 = vmatpush1.msra.mxu0 %v1057
    %3236 = vmatprep.subr.mxu0 0.0
    %3237 = vmatpush1.msra.mxu0 %v1058
    %3238 = vmatprep.subr.mxu0 0.0
    %3239 = vmatpush1.msra.mxu0 %v1059
    %3240 = vmatprep.subr.mxu0 0.0
    %3241 = vmatpush1.msra.mxu0 %v1060
    %3242 = vmatprep.subr.mxu0 0.0
    %3243 = vmatpush1.msra.mxu0 %v1061
    %3244 = vmatprep.subr.mxu0 0.0
    %3245 = vmatpush1.msra.mxu0 %v1062
    %3246 = vmatprep.subr.mxu0 0.0
    %3247 = vmatpush1.msra.mxu0 %v1063
    %3248 = vmatprep.subr.mxu0 0.0
    %3249 = vmatpush1.msra.mxu0 %v1064
    %3250 = vmatprep.subr.mxu0 0.0
    %3251 = vmatpush1.msra.mxu0 %v1065
    %3252 = vmatprep.subr.mxu0 0.0
    %3253 = vmatpush1.msra.mxu0 %v1066
    %3254 = vmatprep.subr.mxu0 0.0
    %3255 = vmatpush1.msra.mxu0 %v1067
    %3256 = vmatprep.subr.mxu0 0.0
    %3257 = vmatpush1.msra.mxu0 %v1068
    %3258 = vmatprep.subr.mxu0 0.0
    %3259 = vmatpush1.msra.mxu0 %v1069
    %3260 = vmatprep.subr.mxu0 0.0
    %3261 = vmatpush1.msra.mxu0 %v1070
    %3262 = vmatprep.subr.mxu0 0.0
    %3263 = vmatpush1.msra.mxu0 %v1071
    %3264 = vmatprep.subr.mxu0 0.0
    %3265 = vmatpush1.msra.mxu0 %v1072
    %3266 = vmatprep.subr.mxu0 0.0
    %3267 = vmatpush1.msra.mxu0 %v1073
    %3268 = vmatprep.subr.mxu0 0.0
    %3269 = vmatpush1.msra.mxu0 %v1074
    %3270 = vmatprep.subr.mxu0 0.0
    %3271 = vmatpush1.msra.mxu0 %v1075
    %3272 = vmatprep.subr.mxu0 0.0
    %3273 = vmatpush1.msra.mxu0 %v1076
    %3274 = vmatprep.subr.mxu0 0.0
    %3275 = vmatpush1.msra.mxu0 %v1077
    %3276 = vmatprep.subr.mxu0 0.0
    %3277 = vmatpush1.msra.mxu0 %v1078
    %3278 = vmatprep.subr.mxu0 0.0
    %3279 = vmatpush1.msra.mxu0 %v1079
    %3280 = vmatprep.subr.mxu0 0.0
    %3281 = vmatpush1.msra.mxu0 %v1080
    %3282 = vmatprep.subr.mxu0 0.0
    %3283 = vmatpush1.msra.mxu0 %v1081
    %3284 = vmatprep.subr.mxu0 0.0
    %3285 = vmatpush1.msra.mxu0 %v1082
    %3286 = vmatprep.mubr.f32.mxu0 %v88
    %3287 = vmatmul.mubr.f32.gmra.mrb[0].mxu0 %v87
    %v3288 = vpop.f32.mrb[0].mxu0
    %v3289 = vadd.f32 %v3219, %v3288
    %v3290 = vpop.f32.mrb[0].mxu0
    %3291 = vdwg.mxu0
    %3292 = vmatprep.subr.mxu0 0.0
    %3293 = vmatpush1.msra.mxu0 %v1083
    %3294 = vmatprep.subr.mxu0 0.0
    %3295 = vmatpush1.msra.mxu0 %v1084
    %3296 = vmatprep.subr.mxu0 0.0
    %3297 = vmatpush1.msra.mxu0 %v1085
    %3298 = vmatprep.subr.mxu0 0.0
    %3299 = vmatpush1.msra.mxu0 %v1086
    %3300 = vmatprep.subr.mxu0 0.0
    %3301 = vmatpush1.msra.mxu0 %v1087
    %3302 = vmatprep.subr.mxu0 0.0
    %3303 = vmatpush1.msra.mxu0 %v1088
    %3304 = vmatprep.subr.mxu0 0.0
    %3305 = vmatpush1.msra.mxu0 %v1089
    %3306 = vmatprep.subr.mxu0 0.0
    %3307 = vmatpush1.msra.mxu0 %v1090
    %3308 = vmatprep.subr.mxu0 0.0
    %3309 = vmatpush1.msra.mxu0 %v1091
    %3310 = vmatprep.subr.mxu0 0.0
    %3311 = vmatpush1.msra.mxu0 %v1092
    %3312 = vmatprep.subr.mxu0 0.0
    %3313 = vmatpush1.msra.mxu0 %v1093
    %3314 = vmatprep.subr.mxu0 0.0
    %3315 = vmatpush1.msra.mxu0 %v1094
    %3316 = vmatprep.subr.mxu0 0.0
    %3317 = vmatpush1.msra.mxu0 %v1095
    %3318 = vmatprep.subr.mxu0 0.0
    %3319 = vmatpush1.msra.mxu0 %v1096
    %3320 = vmatprep.subr.mxu0 0.0
    %3321 = vmatpush1.msra.mxu0 %v1097
    %3322 = vmatprep.subr.mxu0 0.0
    %3323 = vmatpush1.msra.mxu0 %v1098
    %3324 = vmatprep.subr.mxu0 0.0
    %3325 = vmatpush1.msra.mxu0 %v1099
    %3326 = vmatprep.subr.mxu0 0.0
    %3327 = vmatpush1.msra.mxu0 %v1100
    %3328 = vmatprep.subr.mxu0 0.0
    %3329 = vmatpush1.msra.mxu0 %v1101
    %3330 = vmatprep.subr.mxu0 0.0
    %3331 = vmatpush1.msra.mxu0 %v1102
    %3332 = vmatprep.subr.mxu0 0.0
    %3333 = vmatpush1.msra.mxu0 %v1103
    %3334 = vmatprep.subr.mxu0 0.0
    %3335 = vmatpush1.msra.mxu0 %v1104
    %3336 = vmatprep.subr.mxu0 0.0
    %3337 = vmatpush1.msra.mxu0 %v1105
    %3338 = vmatprep.subr.mxu0 0.0
    %3339 = vmatpush1.msra.mxu0 %v1106
    %3340 = vmatprep.subr.mxu0 0.0
    %3341 = vmatpush1.msra.mxu0 %v1107
    %3342 = vmatprep.subr.mxu0 0.0
    %3343 = vmatpush1.msra.mxu0 %v1108
    %3344 = vmatprep.subr.mxu0 0.0
    %3345 = vmatpush1.msra.mxu0 %v1109
    %3346 = vmatprep.subr.mxu0 0.0
    %3347 = vmatpush1.msra.mxu0 %v1110
    %3348 = vmatprep.subr.mxu0 0.0
    %3349 = vmatpush1.msra.mxu0 %v1111
    %3350 = vmatprep.subr.mxu0 0.0
    %3351 = vmatpush1.msra.mxu0 %v1112
    %3352 = vmatprep.subr.mxu0 0.0
    %3353 = vmatpush1.msra.mxu0 %v1113
    %3354 = vmatprep.subr.mxu0 0.0
    %3355 = vmatpush1.msra.mxu0 %v1114
    %3356 = vmatprep.mubr.f32.mxu0 %v90
    %3357 = vmatmul.mubr.f32.gmra.mrb[0].mxu0 %v89
    %v3358 = vpop.f32.mrb[0].mxu0
    %v3359 = vadd.f32 %v3289, %v3358
    %v3360 = vpop.f32.mrb[0].mxu0
    %3361 = vdwg.mxu0
    %v3362 = vmax.f32 %v3359, 0.0
    %v3363 = vld [vmem:[%s3] sm:$0xff]
    %v3364 = vld [vmem:[%s3 + $0x8] sm:$0xff]
    %v3365 = vld [vmem:[%s3 + $0x10] sm:$0xff]
    %v3366 = vld [vmem:[%s3 + $0x18] sm:$0xff]
    %v3367 = vld [vmem:[%s3 + $0x20] sm:$0xff]
    %v3368 = vld [vmem:[%s3 + $0x28] sm:$0xff]
    %v3369 = vld [vmem:[%s3 + $0x30] sm:$0xff]
    %v3370 = vld [vmem:[%s3 + $0x38] sm:$0xff]
    %v3371 = vld [vmem:[%s4] sm:$0x1]
    %v3373 = vlaneseq
    %v3374 = vshrl.u32 %v3373, 7
    %v3375 = vsub.s32 0, %v3374
    %v3376 = vrot.slane %v3371, %v3375
    %vm3378 = vcmask 523264
    %v3380 = vsel %vm3378, %v3362, 0
    %3382 = vmatprep.subr.mxu0 0.0
    %3383 = vmatpush1.msra.mxu0 %v3363
    %3384 = vmatprep.subr.mxu0 0.0
    %3385 = vmatpush1.msra.mxu0 %v3364
    %3386 = vmatprep.subr.mxu0 0.0
    %3387 = vmatpush1.msra.mxu0 %v3365
    %3388 = vmatprep.subr.mxu0 0.0
    %3389 = vmatpush1.msra.mxu0 %v3366
    %3390 = vmatprep.subr.mxu0 0.0
    %3391 = vmatpush1.msra.mxu0 %v3367
    %3392 = vmatprep.subr.mxu0 0.0
    %3393 = vmatpush1.msra.mxu0 %v3368
    %3394 = vmatprep.subr.mxu0 0.0
    %3395 = vmatpush1.msra.mxu0 %v3369
    %3396 = vmatprep.subr.mxu0 0.0
    %3397 = vmatpush1.msra.mxu0 %v3370
    %3398 = vmatprep.subr.mxu0 0.0
    %3399 = vmatpush1.msra.mxu0 0.0
    %3400 = vmatprep.subr.mxu0 0.0
    %3401 = vmatpush1.msra.mxu0 0.0
    %3402 = vmatprep.subr.mxu0 0.0
    %3403 = vmatpush1.msra.mxu0 0.0
    %3404 = vmatprep.subr.mxu0 0.0
    %3405 = vmatpush1.msra.mxu0 0.0
    %3406 = vmatprep.subr.mxu0 0.0
    %3407 = vmatpush1.msra.mxu0 0.0
    %3408 = vmatprep.subr.mxu0 0.0
    %3409 = vmatpush1.msra.mxu0 0.0
    %3410 = vmatprep.subr.mxu0 0.0
    %3411 = vmatpush1.msra.mxu0 0.0
    %3412 = vmatprep.subr.mxu0 0.0
    %3413 = vmatpush1.msra.mxu0 0.0
    %3414 = vmatprep.subr.mxu0 0.0
    %3415 = vmatpush1.msra.mxu0 0.0
    %3416 = vmatprep.subr.mxu0 0.0
    %3417 = vmatpush1.msra.mxu0 0.0
    %3418 = vmatprep.subr.mxu0 0.0
    %3419 = vmatpush1.msra.mxu0 0.0
    %3420 = vmatprep.subr.mxu0 0.0
    %3421 = vmatpush1.msra.mxu0 0.0
    %3422 = vmatprep.subr.mxu0 0.0
    %3423 = vmatpush1.msra.mxu0 0.0
    %3424 = vmatprep.subr.mxu0 0.0
    %3425 = vmatpush1.msra.mxu0 0.0
    %3426 = vmatprep.subr.mxu0 0.0
    %3427 = vmatpush1.msra.mxu0 0.0
    %3428 = vmatprep.subr.mxu0 0.0
    %3429 = vmatpush1.msra.mxu0 0.0
    %3430 = vmatprep.subr.mxu0 0.0
    %3431 = vmatpush1.msra.mxu0 0.0
    %3432 = vmatprep.subr.mxu0 0.0
    %3433 = vmatpush1.msra.mxu0 0.0
    %3434 = vmatprep.subr.mxu0 0.0
    %3435 = vmatpush1.msra.mxu0 0.0
    %3436 = vmatprep.subr.mxu0 0.0
    %3437 = vmatpush1.msra.mxu0 0.0
    %3438 = vmatprep.subr.mxu0 0.0
    %3439 = vmatpush1.msra.mxu0 0.0
    %3440 = vmatprep.subr.mxu0 0.0
    %3441 = vmatpush1.msra.mxu0 0.0
    %3442 = vmatprep.subr.mxu0 0.0
    %3443 = vmatpush1.msra.mxu0 0.0
    %3444 = vmatprep.subr.mxu0 0.0
    %3445 = vmatpush1.msra.mxu0 0.0
    %3446 = vmatprep.mubr.f32.mxu0 0.0
    %3447 = vmatmul.mubr.f32.gmra.mrb[0].mxu0 %v3380
    %v3448 = vpop.f32.mrb[0].mxu0
    %v3449 = vadd.f32 %v3376, %v3448
    %v3450 = vpop.f32.mrb[0].mxu0
    %3451 = vdwg.mxu0
    %v3452 = vmax.f32 %v3449, 0.0
    %v3453 = vld [vmem:[%s5] sm:$0xff]
    %v3454 = vld [vmem:[%s6] sm:$0x1]
    %v3456 = vlaneseq
    %v3457 = vshrl.u32 %v3456, 7
    %v3458 = vsub.s32 0, %v3457
    %v3459 = vrot.slane %v3454, %v3458
    %vm3461 = vcmask 64512
    %v3463 = vsel %vm3461, %v3452, 0
    %3465 = vmatprep.subr.mxu0 0.0
    %3466 = vmatpush1.msra.mxu0 %v3453
    %3467 = vmatprep.subr.mxu0 0.0
    %3468 = vmatpush1.msra.mxu0 0.0
    %3469 = vmatprep.subr.mxu0 0.0
    %3470 = vmatpush1.msra.mxu0 0.0
    %3471 = vmatprep.subr.mxu0 0.0
    %3472 = vmatpush1.msra.mxu0 0.0
    %3473 = vmatprep.subr.mxu0 0.0
    %3474 = vmatpush1.msra.mxu0 0.0
    %3475 = vmatprep.subr.mxu0 0.0
    %3476 = vmatpush1.msra.mxu0 0.0
    %3477 = vmatprep.subr.mxu0 0.0
    %3478 = vmatpush1.msra.mxu0 0.0
    %3479 = vmatprep.subr.mxu0 0.0
    %3480 = vmatpush1.msra.mxu0 0.0
    %3481 = vmatprep.subr.mxu0 0.0
    %3482 = vmatpush1.msra.mxu0 0.0
    %3483 = vmatprep.subr.mxu0 0.0
    %3484 = vmatpush1.msra.mxu0 0.0
    %3485 = vmatprep.subr.mxu0 0.0
    %3486 = vmatpush1.msra.mxu0 0.0
    %3487 = vmatprep.subr.mxu0 0.0
    %3488 = vmatpush1.msra.mxu0 0.0
    %3489 = vmatprep.subr.mxu0 0.0
    %3490 = vmatpush1.msra.mxu0 0.0
    %3491 = vmatprep.subr.mxu0 0.0
    %3492 = vmatpush1.msra.mxu0 0.0
    %3493 = vmatprep.subr.mxu0 0.0
    %3494 = vmatpush1.msra.mxu0 0.0
    %3495 = vmatprep.subr.mxu0 0.0
    %3496 = vmatpush1.msra.mxu0 0.0
    %3497 = vmatprep.subr.mxu0 0.0
    %3498 = vmatpush1.msra.mxu0 0.0
    %3499 = vmatprep.subr.mxu0 0.0
    %3500 = vmatpush1.msra.mxu0 0.0
    %3501 = vmatprep.subr.mxu0 0.0
    %3502 = vmatpush1.msra.mxu0 0.0
    %3503 = vmatprep.subr.mxu0 0.0
    %3504 = vmatpush1.msra.mxu0 0.0
    %3505 = vmatprep.subr.mxu0 0.0
    %3506 = vmatpush1.msra.mxu0 0.0
    %3507 = vmatprep.subr.mxu0 0.0
    %3508 = vmatpush1.msra.mxu0 0.0
    %3509 = vmatprep.subr.mxu0 0.0
    %3510 = vmatpush1.msra.mxu0 0.0
    %3511 = vmatprep.subr.mxu0 0.0
    %3512 = vmatpush1.msra.mxu0 0.0
    %3513 = vmatprep.subr.mxu0 0.0
    %3514 = vmatpush1.msra.mxu0 0.0
    %3515 = vmatprep.subr.mxu0 0.0
    %3516 = vmatpush1.msra.mxu0 0.0
    %3517 = vmatprep.subr.mxu0 0.0
    %3518 = vmatpush1.msra.mxu0 0.0
    %3519 = vmatprep.subr.mxu0 0.0
    %3520 = vmatpush1.msra.mxu0 0.0
    %3521 = vmatprep.subr.mxu0 0.0
    %3522 = vmatpush1.msra.mxu0 0.0
    %3523 = vmatprep.subr.mxu0 0.0
    %3524 = vmatpush1.msra.mxu0 0.0
    %3525 = vmatprep.subr.mxu0 0.0
    %3526 = vmatpush1.msra.mxu0 0.0
    %3527 = vmatprep.subr.mxu0 0.0
    %3528 = vmatpush1.msra.mxu0 0.0
    %3529 = vmatprep.mubr.f32.mxu0 0.0
    %3530 = vmatmul.mubr.f32.gmra.mrb[0].mxu0 %v3463
    %v3531 = vpop.f32.mrb[0].mxu0
    %v3532 = vadd.f32 %v3459, %v3531
    %v3533 = vpop.f32.mrb[0].mxu0
    %3534 = vdwg.mxu0
    %3535 = vmax.xlane.f32.xlu0 %v3532
    %v3536 = vpop.xlane.xlu0 %3535
    %v3537 = vsub.f32 %v3532, %v3536
    %v3538 = vmul.f32 %v3537, 1.442695
    %v3539 = vpow.pop %v3538
    %3540 = vadd.xlane.f32.xlu0 %v3539
    %v3541 = vpop.xlane.xlu0 %3540
    %v3542 = vrcp.pop %v3541
    %v3543 = vmul.f32 %v3539, %v3542
    %3544 = vst [vmem:[#allocation2] sm:$0xff] %v3543
    // Predicated region
    $region30: #{tpu_custom_call.1} parent=1 // pred_check
      _
    $region31: #{tpu_custom_call.1} parent=1 // pred_check_branch
      %3546 = sbr.rel (0) target = $region33
    $region32: #{tpu_custom_call.1} parent=1 // pred_region
      %s3548 = ssub.s32 128, 128
      %3549 = vsyncadd [#allocation3], %s3548
      %s3551 = sshll.u32 [#allocation2], 4
      %s3552 = int_to_ptr.vmem [resolvable:$true] %s3551
      %3554 = dma.vmem_to_hbm [thread:$0]  %s3552, 128, %s7, [#allocation3]
    $region33: #{tpu_custom_call.1} parent=1 // pred_fallthru
      _
    // Predicated region
    $region34: #{tpu_custom_call.1} parent=1 // pred_check
      _
    $region35: #{tpu_custom_call.1} parent=1 // pred_check_branch
      %3556 = sbr.rel (0) target = $region37
    $region36: #{tpu_custom_call.1} parent=1 // pred_region
      %3557 = dma.done [#allocation3], 128
    $region37: #{tpu_custom_call.1} parent=1 // pred_fallthru
      _
    %3558 = vsyncpa [#allocation3], 1

</llo_original>
